<compile_context>
chip_gen: v7x
topology: tpu7x:2x2x1
jax: 0.10.0
libtpu: 0.0.40
codegen_flags: <defaults>
</compile_context>

<pallas_src>
import functools
import math

import jax
import jax.numpy as jnp
from jax import lax
from jax.experimental import pallas as pl
from jax.experimental.pallas import tpu as pltpu


def _round_up(a, b):
    return (a + b - 1) // b * b


# ---------------------------------------------------------------------------
# Kernel body: per (sample, output-row-tile), kh*kw shifted-window matmuls.
# ---------------------------------------------------------------------------
def _make_conv_kernel(kh, kw, stride, dilation, toh, ow_pad, cin, o_pad):
    def kernel(x_ref, w_ref, o_ref):
        # x_ref: (1, s*s, Hs, Ws, Cin)   resident padded image (phase layout)
        # w_ref: (kh*kw, Cin, O_pad)     resident low-rank Bayesian weight
        # o_ref: (1, TOH*OW_pad, O_pad)  lane-dense output tile
        r = pl.program_id(1)
        row0 = r * toh
        if toh % 8 == 0:
            row0 = pl.multiple_of(row0, toh)

        acc = None
        for i in range(kh):
            qi, ai = divmod(i * dilation, stride)
            for j in range(kw):
                qj, bj = divmod(j * dilation, stride)
                win = x_ref[0, ai * stride + bj,
                            pl.ds(row0 + qi, toh),
                            pl.ds(qj, ow_pad), :]          # (TOH, OW_pad, Cin)
                lhs = win.reshape(toh * ow_pad, cin)       # layout-friendly merge
                contrib = jnp.dot(lhs, w_ref[i * kw + j],
                                  preferred_element_type=jnp.float32)
                acc = contrib if acc is None else acc + contrib
        o_ref[0] = acc.astype(o_ref.dtype)

    return kernel


# ---------------------------------------------------------------------------
# Wrapper
# ---------------------------------------------------------------------------
@functools.partial(
    jax.jit,
    static_argnames=("stride", "padding", "dilation", "mc_sample_id",
                     "compute_dtype"))
def bayes_conv2d_lr(x, weight_mu, in_perturbations, out_perturbations, *,
                    stride=1, padding=0, dilation=1, mc_sample_id=0,
                    compute_dtype=jnp.bfloat16):
    """BayesConv2dLR forward, int mc_sample_id branch, groups=1, bias=False."""
    N, Cin, H, W = x.shape
    O, Cin_w, kh, kw = weight_mu.shape
    assert Cin_w == Cin, "groups != 1 not supported"   # TODO(synk): groups
    num_mc, rank, K = in_perturbations.shape
    assert K == Cin * kh * kw
    assert stride >= 1 and dilation >= 1 and padding >= 0
    s = mc_sample_id % num_mc

    cdt = jnp.dtype(compute_dtype)
    csize = cdt.itemsize
    osize = jnp.dtype(x.dtype).itemsize
    LANE = 128
    sub = 8 * (4 // csize)                     # native 2nd-minor tile (f32:8, bf16:16)

    st, di, pa = stride, dilation, padding
    Hp, Wp = H + 2 * pa, W + 2 * pa
    OH = (Hp - di * (kh - 1) - 1) // st + 1
    OW = (Wp - di * (kw - 1) - 1) // st + 1
    assert OH > 0 and OW > 0

    O_pad = _round_up(O, LANE)                 # lane-dense output / weight columns
    OW_pad = _round_up(OW, sub)                # layout-friendly reshape, unmasked rows

    # ---- output-row tiling: bound f32 accumulator + output block VMEM ------
    acc_budget_rows = max(256, (2 * 1024 * 1024) // (4 * O_pad))
    TOH = max(1, min(OH, acc_budget_rows // OW_pad))
    if N * ((OH + TOH - 1) // TOH) < 2 and OH > 1:     # give v7x megacore >=2 steps
        TOH = (OH + 1) // 2
    OH_pad = _round_up(OH, TOH)
    nR = OH_pad // TOH

    # ---- phase (space-to-batch) layout: stride handled with contiguous slices
    qi_max = (di * (kh - 1)) // st
    qj_max = (di * (kw - 1)) // st
    Hs = max(-(-Hp // st), qi_max + OH_pad)
    Ws = max(-(-Wp // st), qj_max + OW_pad)

    x_nhwc = jnp.transpose(x.astype(cdt), (0, 2, 3, 1))               # (N,H,W,Cin)
    xp = jnp.pad(x_nhwc, ((0, 0),
                          (pa, st * Hs - H - pa),
                          (pa, st * Ws - W - pa),
                          (0, 0)))
    # (N, s*Hs, s*Ws, Cin) -> (N, s*s, Hs, Ws, Cin), phase index = a*st + b
    xph = (xp.reshape(N, Hs, st, Ws, st, Cin)
             .transpose(0, 2, 4, 1, 3, 5)
             .reshape(N, st * st, Hs, Ws, Cin))

    # ---- Bayesian low-rank weight: tiny rank-R contraction, plain XLA -------
    pert = jnp.einsum("or,rk->ok", out_perturbations[s], in_perturbations[s],
                      precision=lax.Precision.HIGHEST)
    w_eff = pert.reshape(O, Cin, kh, kw) * weight_mu
    w_taps = jnp.transpose(w_eff, (2, 3, 1, 0)).reshape(kh * kw, Cin, O)
    w_taps = jnp.pad(w_taps, ((0, 0), (0, 0), (0, O_pad - O))).astype(cdt)

    # ---- dtype-aware VMEM budget (vreg-padded footprints, double buffered) --
    def _footprint(shape, itemsize):
        *major, sl, ln = shape
        sl_tile = 8 * (4 // itemsize)
        m = 1
        for d in major:
            m *= d
        return m * _round_up(sl, sl_tile) * _round_up(ln, LANE) * itemsize

    x_blk = _footprint((1, st * st, Hs, Ws, Cin), csize)
    o_blk = _footprint((1, TOH * OW_pad, O_pad), osize)
    w_blk = _footprint((kh * kw, Cin, O_pad), csize)
    acc_blk = _footprint((TOH * OW_pad, O_pad), 4)
    est = 2 * x_blk + 2 * o_blk + w_blk + acc_blk
    vmem_limit = int(min(max(2 * est, 32 * 1024 * 1024), 40 * 1024 * 1024))
    vmem_limit = int(max(vmem_limit, int(1.25 * est)))   # never below the estimate

    kernel = _make_conv_kernel(kh, kw, st, di, TOH, OW_pad, Cin, O_pad)
    out_flat = pl.pallas_call(
        kernel,
        out_shape=jax.ShapeDtypeStruct((N, OH_pad * OW_pad, O_pad), x.dtype),
        grid=(N, nR),
        in_specs=[
            # full padded image per sample, constant across r -> fetched once/sample
            pl.BlockSpec((1, st * st, Hs, Ws, Cin),
                         lambda n, r: (n, 0, 0, 0, 0)),
            # built weight: fully VMEM-resident
            pl.BlockSpec((kh * kw, Cin, O_pad), lambda n, r: (0, 0, 0)),
        ],
        out_specs=pl.BlockSpec((1, TOH * OW_pad, O_pad), lambda n, r: (n, r, 0)),
        compiler_params=pltpu.CompilerParams(
            dimension_semantics=("parallel", "parallel"),
            vmem_limit_bytes=vmem_limit,
        ),
        cost_estimate=pl.CostEstimate(
            flops=2 * N * OH_pad * OW_pad * O_pad * Cin * kh * kw,
            transcendentals=0,
            bytes_accessed=(N * st * st * Hs * Ws * Cin * csize
                            + kh * kw * Cin * O_pad * csize
                            + N * OH_pad * OW_pad * O_pad * osize),
        ),
    )(xph, w_taps)

    out = out_flat.reshape(N, OH_pad, OW_pad, O_pad)[:, :OH, :OW, :O]
    return jnp.transpose(out, (0, 3, 1, 2))               # NCHW


# ---------------------------------------------------------------------------
# Pure-JAX reference (mirrors the PyTorch forward)
# ---------------------------------------------------------------------------
def _reference(x, weight_mu, in_perturbations, out_perturbations,
               stride, padding, dilation, mc_sample_id):
    num_mc = in_perturbations.shape[0]
    s = mc_sample_id % num_mc
    pert = jnp.einsum("or,rk->ok", out_perturbations[s], in_perturbations[s],
                      precision=lax.Precision.HIGHEST)
    weight = pert.reshape(weight_mu.shape) * weight_mu
    return lax.conv_general_dilated(
        x, weight,
        window_strides=(stride, stride),
        padding=[(padding, padding), (padding, padding)],
        rhs_dilation=(dilation, dilation),
        dimension_numbers=("NCHW", "OIHW", "NCHW"),
        precision=lax.Precision.HIGHEST,
    )


if __name__ == "__main__":
    # Module hyperparameters (small, consistent with __init__ defaults)
    in_channels, out_channels = 4, 8
    kernel_size = 3
    num_mc_samples, rank, pert_init_std = 4, 2, 0.2
    mc_sample_id = 1
    N, H, W = 2, 16, 16

    key = jax.random.PRNGKey(0)
    k_w, k_in, k_out, k_x = jax.random.split(key, 4)

    # reset_parameters() equivalents (deterministic given PRNGKey(0))
    n = in_channels * kernel_size * kernel_size
    stdv = 1.0 / math.sqrt(n)
    weight_mu = jax.random.uniform(
        k_w, (out_channels, in_channels, kernel_size, kernel_size),
        minval=-stdv, maxval=stdv, dtype=jnp.float32)

    m = math.sqrt(1.0 / rank)
    v = math.sqrt((math.sqrt(rank * pert_init_std ** 2 + 1) - 1) / rank)
    in_perturbations = m + v * jax.random.normal(
        k_in, (num_mc_samples, rank, in_channels * kernel_size * kernel_size),
        dtype=jnp.float32)
    out_perturbations = m + v * jax.random.normal(
        k_out, (num_mc_samples, out_channels, rank), dtype=jnp.float32)

    # bias=False by default -> no bias parameter
    x = jax.random.normal(k_x, (N, in_channels, H, W), dtype=jnp.float32)

    # ---- bf16 fast path (default compute dtype), loose tolerance -----------
    out_bf16 = jax.block_until_ready(bayes_conv2d_lr(
        x, weight_mu, in_perturbations, out_perturbations,
        stride=1, padding=1, dilation=1, mc_sample_id=mc_sample_id))
    ref = _reference(x, weight_mu, in_perturbations, out_perturbations,
                     1, 1, 1, mc_sample_id)
    assert out_bf16.shape == (N, out_channels, H, W), out_bf16.shape
    assert jnp.allclose(out_bf16, ref, atol=1e-1, rtol=1e-1), "bf16 mismatch"

    # ---- f32 path, tight tolerance, incl. stride / padding / dilation ------
    for (st, pa, di) in [(1, 1, 1), (2, 1, 1), (1, 2, 2), (2, 0, 1)]:
        out = jax.block_until_ready(bayes_conv2d_lr(
            x, weight_mu, in_perturbations, out_perturbations,
            stride=st, padding=pa, dilation=di, mc_sample_id=mc_sample_id,
            compute_dtype=jnp.float32))
        ref = _reference(x, weight_mu, in_perturbations, out_perturbations,
                         st, pa, di, mc_sample_id)
        assert out.shape == ref.shape, (out.shape, ref.shape)
        assert jnp.allclose(out, ref, atol=1e-3, rtol=1e-3), \
            f"mismatch stride={st} padding={pa} dilation={di}"

    print("KERNEL_OK")
</pallas_src>

<mosaic_0001>
module attributes {stable_mosaic.version = 11 : i64} {
  func.func @kernel(%arg0: i32, %arg1: i32, %arg2: memref<1x1x18x18x4xbf16, #tpu.memory_space<vmem>>, %arg3: memref<9x4x128xbf16, #tpu.memory_space<vmem>>, %arg4: memref<1x256x128xf32, #tpu.memory_space<vmem>>) attributes {dimension_semantics = [#tpu.dimension_semantics<parallel>, #tpu.dimension_semantics<parallel>], iteration_bounds = array<i64: 2, 1>, scalar_prefetch = 0 : i64, scratch_operands = 0 : i64, tpu.core_type = #tpu.core_type<tc>, window_params = [{transform_indices = @transform_0, window_bounds = array<i64: 1, 1, 18, 18, 4>}, {pipeline_mode = #tpu.pipeline_mode<synchronous>, transform_indices = @transform_1, window_bounds = array<i64: 9, 4, 128>}, {transform_indices = @transform_2, window_bounds = array<i64: 1, 256, 128>}]} {
    %c16_i32 = arith.constant 16 : i32
    %0 = arith.muli %arg1, %c16_i32 : i32
    %1 = tpu.assume_multiple %0, 16 : i32
    %c0_i32 = arith.constant 0 : i32
    %2 = arith.addi %1, %c0_i32 : i32
    %c0 = arith.constant 0 : index
    %c0_0 = arith.constant 0 : index
    %3 = arith.index_cast %2 : i32 to index
    %c0_1 = arith.constant 0 : index
    %c0_2 = arith.constant 0 : index
    %4 = vector.load %arg2[%c0, %c0_0, %3, %c0_1, %c0_2] : memref<1x1x18x18x4xbf16, #tpu.memory_space<vmem>>, vector<1x1x16x16x4xbf16>
    %5 = vector.shape_cast %4 : vector<1x1x16x16x4xbf16> to vector<16x16x4xbf16>
    %6 = vector.shape_cast %5 : vector<16x16x4xbf16> to vector<256x4xbf16>
    %c0_3 = arith.constant 0 : index
    %c0_4 = arith.constant 0 : index
    %c0_5 = arith.constant 0 : index
    %7 = vector.load %arg3[%c0_3, %c0_4, %c0_5] : memref<9x4x128xbf16, #tpu.memory_space<vmem>>, vector<1x4x128xbf16>
    %8 = vector.shape_cast %7 : vector<1x4x128xbf16> to vector<4x128xbf16>
    %cst = arith.constant dense<0.000000e+00> : vector<256x128xf32>
    %9 = tpu.matmul %6, %8, %cst {dimension_numbers = #tpu.dot_dimension_numbers<[1], [0], [0], [1], [0, 0, 1, 1], [], []>} : vector<256x4xbf16>, vector<4x128xbf16>, vector<256x128xf32> -> vector<256x128xf32>
    %c0_i32_6 = arith.constant 0 : i32
    %10 = arith.addi %1, %c0_i32_6 : i32
    %c0_7 = arith.constant 0 : index
    %c0_8 = arith.constant 0 : index
    %11 = arith.index_cast %10 : i32 to index
    %c1 = arith.constant 1 : index
    %c0_9 = arith.constant 0 : index
    %12 = vector.load %arg2[%c0_7, %c0_8, %11, %c1, %c0_9] : memref<1x1x18x18x4xbf16, #tpu.memory_space<vmem>>, vector<1x1x16x16x4xbf16>
    %13 = vector.shape_cast %12 : vector<1x1x16x16x4xbf16> to vector<16x16x4xbf16>
    %14 = vector.shape_cast %13 : vector<16x16x4xbf16> to vector<256x4xbf16>
    %c1_10 = arith.constant 1 : index
    %c0_11 = arith.constant 0 : index
    %c0_12 = arith.constant 0 : index
    %15 = vector.load %arg3[%c1_10, %c0_11, %c0_12] : memref<9x4x128xbf16, #tpu.memory_space<vmem>>, vector<1x4x128xbf16>
    %16 = vector.shape_cast %15 : vector<1x4x128xbf16> to vector<4x128xbf16>
    %cst_13 = arith.constant dense<0.000000e+00> : vector<256x128xf32>
    %17 = tpu.matmul %14, %16, %cst_13 {dimension_numbers = #tpu.dot_dimension_numbers<[1], [0], [0], [1], [0, 0, 1, 1], [], []>} : vector<256x4xbf16>, vector<4x128xbf16>, vector<256x128xf32> -> vector<256x128xf32>
    %18 = arith.addf %9, %17 : vector<256x128xf32>
    %c0_i32_14 = arith.constant 0 : i32
    %19 = arith.addi %1, %c0_i32_14 : i32
    %c0_15 = arith.constant 0 : index
    %c0_16 = arith.constant 0 : index
    %20 = arith.index_cast %19 : i32 to index
    %c2 = arith.constant 2 : index
    %c0_17 = arith.constant 0 : index
    %21 = vector.load %arg2[%c0_15, %c0_16, %20, %c2, %c0_17] : memref<1x1x18x18x4xbf16, #tpu.memory_space<vmem>>, vector<1x1x16x16x4xbf16>
    %22 = vector.shape_cast %21 : vector<1x1x16x16x4xbf16> to vector<16x16x4xbf16>
    %23 = vector.shape_cast %22 : vector<16x16x4xbf16> to vector<256x4xbf16>
    %c2_18 = arith.constant 2 : index
    %c0_19 = arith.constant 0 : index
    %c0_20 = arith.constant 0 : index
    %24 = vector.load %arg3[%c2_18, %c0_19, %c0_20] : memref<9x4x128xbf16, #tpu.memory_space<vmem>>, vector<1x4x128xbf16>
    %25 = vector.shape_cast %24 : vector<1x4x128xbf16> to vector<4x128xbf16>
    %cst_21 = arith.constant dense<0.000000e+00> : vector<256x128xf32>
    %26 = tpu.matmul %23, %25, %cst_21 {dimension_numbers = #tpu.dot_dimension_numbers<[1], [0], [0], [1], [0, 0, 1, 1], [], []>} : vector<256x4xbf16>, vector<4x128xbf16>, vector<256x128xf32> -> vector<256x128xf32>
    %27 = arith.addf %18, %26 : vector<256x128xf32>
    %c1_i32 = arith.constant 1 : i32
    %28 = arith.addi %1, %c1_i32 : i32
    %c0_22 = arith.constant 0 : index
    %c0_23 = arith.constant 0 : index
    %29 = arith.index_cast %28 : i32 to index
    %c0_24 = arith.constant 0 : index
    %c0_25 = arith.constant 0 : index
    %30 = vector.load %arg2[%c0_22, %c0_23, %29, %c0_24, %c0_25] : memref<1x1x18x18x4xbf16, #tpu.memory_space<vmem>>, vector<1x1x16x16x4xbf16>
    %31 = vector.shape_cast %30 : vector<1x1x16x16x4xbf16> to vector<16x16x4xbf16>
    %32 = vector.shape_cast %31 : vector<16x16x4xbf16> to vector<256x4xbf16>
    %c3 = arith.constant 3 : index
    %c0_26 = arith.constant 0 : index
    %c0_27 = arith.constant 0 : index
    %33 = vector.load %arg3[%c3, %c0_26, %c0_27] : memref<9x4x128xbf16, #tpu.memory_space<vmem>>, vector<1x4x128xbf16>
    %34 = vector.shape_cast %33 : vector<1x4x128xbf16> to vector<4x128xbf16>
    %cst_28 = arith.constant dense<0.000000e+00> : vector<256x128xf32>
    %35 = tpu.matmul %32, %34, %cst_28 {dimension_numbers = #tpu.dot_dimension_numbers<[1], [0], [0], [1], [0, 0, 1, 1], [], []>} : vector<256x4xbf16>, vector<4x128xbf16>, vector<256x128xf32> -> vector<256x128xf32>
    %36 = arith.addf %27, %35 : vector<256x128xf32>
    %c1_i32_29 = arith.constant 1 : i32
    %37 = arith.addi %1, %c1_i32_29 : i32
    %c0_30 = arith.constant 0 : index
    %c0_31 = arith.constant 0 : index
    %38 = arith.index_cast %37 : i32 to index
    %c1_32 = arith.constant 1 : index
    %c0_33 = arith.constant 0 : index
    %39 = vector.load %arg2[%c0_30, %c0_31, %38, %c1_32, %c0_33] : memref<1x1x18x18x4xbf16, #tpu.memory_space<vmem>>, vector<1x1x16x16x4xbf16>
    %40 = vector.shape_cast %39 : vector<1x1x16x16x4xbf16> to vector<16x16x4xbf16>
    %41 = vector.shape_cast %40 : vector<16x16x4xbf16> to vector<256x4xbf16>
    %c4 = arith.constant 4 : index
    %c0_34 = arith.constant 0 : index
    %c0_35 = arith.constant 0 : index
    %42 = vector.load %arg3[%c4, %c0_34, %c0_35] : memref<9x4x128xbf16, #tpu.memory_space<vmem>>, vector<1x4x128xbf16>
    %43 = vector.shape_cast %42 : vector<1x4x128xbf16> to vector<4x128xbf16>
    %cst_36 = arith.constant dense<0.000000e+00> : vector<256x128xf32>
    %44 = tpu.matmul %41, %43, %cst_36 {dimension_numbers = #tpu.dot_dimension_numbers<[1], [0], [0], [1], [0, 0, 1, 1], [], []>} : vector<256x4xbf16>, vector<4x128xbf16>, vector<256x128xf32> -> vector<256x128xf32>
    %45 = arith.addf %36, %44 : vector<256x128xf32>
    %c1_i32_37 = arith.constant 1 : i32
    %46 = arith.addi %1, %c1_i32_37 : i32
    %c0_38 = arith.constant 0 : index
    %c0_39 = arith.constant 0 : index
    %47 = arith.index_cast %46 : i32 to index
    %c2_40 = arith.constant 2 : index
    %c0_41 = arith.constant 0 : index
    %48 = vector.load %arg2[%c0_38, %c0_39, %47, %c2_40, %c0_41] : memref<1x1x18x18x4xbf16, #tpu.memory_space<vmem>>, vector<1x1x16x16x4xbf16>
    %49 = vector.shape_cast %48 : vector<1x1x16x16x4xbf16> to vector<16x16x4xbf16>
    %50 = vector.shape_cast %49 : vector<16x16x4xbf16> to vector<256x4xbf16>
    %c5 = arith.constant 5 : index
    %c0_42 = arith.constant 0 : index
    %c0_43 = arith.constant 0 : index
    %51 = vector.load %arg3[%c5, %c0_42, %c0_43] : memref<9x4x128xbf16, #tpu.memory_space<vmem>>, vector<1x4x128xbf16>
    %52 = vector.shape_cast %51 : vector<1x4x128xbf16> to vector<4x128xbf16>
    %cst_44 = arith.constant dense<0.000000e+00> : vector<256x128xf32>
    %53 = tpu.matmul %50, %52, %cst_44 {dimension_numbers = #tpu.dot_dimension_numbers<[1], [0], [0], [1], [0, 0, 1, 1], [], []>} : vector<256x4xbf16>, vector<4x128xbf16>, vector<256x128xf32> -> vector<256x128xf32>
    %54 = arith.addf %45, %53 : vector<256x128xf32>
    %c2_i32 = arith.constant 2 : i32
    %55 = arith.addi %1, %c2_i32 : i32
    %c0_45 = arith.constant 0 : index
    %c0_46 = arith.constant 0 : index
    %56 = arith.index_cast %55 : i32 to index
    %c0_47 = arith.constant 0 : index
    %c0_48 = arith.constant 0 : index
    %57 = vector.load %arg2[%c0_45, %c0_46, %56, %c0_47, %c0_48] : memref<1x1x18x18x4xbf16, #tpu.memory_space<vmem>>, vector<1x1x16x16x4xbf16>
    %58 = vector.shape_cast %57 : vector<1x1x16x16x4xbf16> to vector<16x16x4xbf16>
    %59 = vector.shape_cast %58 : vector<16x16x4xbf16> to vector<256x4xbf16>
    %c6 = arith.constant 6 : index
    %c0_49 = arith.constant 0 : index
    %c0_50 = arith.constant 0 : index
    %60 = vector.load %arg3[%c6, %c0_49, %c0_50] : memref<9x4x128xbf16, #tpu.memory_space<vmem>>, vector<1x4x128xbf16>
    %61 = vector.shape_cast %60 : vector<1x4x128xbf16> to vector<4x128xbf16>
    %cst_51 = arith.constant dense<0.000000e+00> : vector<256x128xf32>
    %62 = tpu.matmul %59, %61, %cst_51 {dimension_numbers = #tpu.dot_dimension_numbers<[1], [0], [0], [1], [0, 0, 1, 1], [], []>} : vector<256x4xbf16>, vector<4x128xbf16>, vector<256x128xf32> -> vector<256x128xf32>
    %63 = arith.addf %54, %62 : vector<256x128xf32>
    %c2_i32_52 = arith.constant 2 : i32
    %64 = arith.addi %1, %c2_i32_52 : i32
    %c0_53 = arith.constant 0 : index
    %c0_54 = arith.constant 0 : index
    %65 = arith.index_cast %64 : i32 to index
    %c1_55 = arith.constant 1 : index
    %c0_56 = arith.constant 0 : index
    %66 = vector.load %arg2[%c0_53, %c0_54, %65, %c1_55, %c0_56] : memref<1x1x18x18x4xbf16, #tpu.memory_space<vmem>>, vector<1x1x16x16x4xbf16>
    %67 = vector.shape_cast %66 : vector<1x1x16x16x4xbf16> to vector<16x16x4xbf16>
    %68 = vector.shape_cast %67 : vector<16x16x4xbf16> to vector<256x4xbf16>
    %c7 = arith.constant 7 : index
    %c0_57 = arith.constant 0 : index
    %c0_58 = arith.constant 0 : index
    %69 = vector.load %arg3[%c7, %c0_57, %c0_58] : memref<9x4x128xbf16, #tpu.memory_space<vmem>>, vector<1x4x128xbf16>
    %70 = vector.shape_cast %69 : vector<1x4x128xbf16> to vector<4x128xbf16>
    %cst_59 = arith.constant dense<0.000000e+00> : vector<256x128xf32>
    %71 = tpu.matmul %68, %70, %cst_59 {dimension_numbers = #tpu.dot_dimension_numbers<[1], [0], [0], [1], [0, 0, 1, 1], [], []>} : vector<256x4xbf16>, vector<4x128xbf16>, vector<256x128xf32> -> vector<256x128xf32>
    %72 = arith.addf %63, %71 : vector<256x128xf32>
    %c2_i32_60 = arith.constant 2 : i32
    %73 = arith.addi %1, %c2_i32_60 : i32
    %c0_61 = arith.constant 0 : index
    %c0_62 = arith.constant 0 : index
    %74 = arith.index_cast %73 : i32 to index
    %c2_63 = arith.constant 2 : index
    %c0_64 = arith.constant 0 : index
    %75 = vector.load %arg2[%c0_61, %c0_62, %74, %c2_63, %c0_64] : memref<1x1x18x18x4xbf16, #tpu.memory_space<vmem>>, vector<1x1x16x16x4xbf16>
    %76 = vector.shape_cast %75 : vector<1x1x16x16x4xbf16> to vector<16x16x4xbf16>
    %77 = vector.shape_cast %76 : vector<16x16x4xbf16> to vector<256x4xbf16>
    %c8 = arith.constant 8 : index
    %c0_65 = arith.constant 0 : index
    %c0_66 = arith.constant 0 : index
    %78 = vector.load %arg3[%c8, %c0_65, %c0_66] : memref<9x4x128xbf16, #tpu.memory_space<vmem>>, vector<1x4x128xbf16>
    %79 = vector.shape_cast %78 : vector<1x4x128xbf16> to vector<4x128xbf16>
    %cst_67 = arith.constant dense<0.000000e+00> : vector<256x128xf32>
    %80 = tpu.matmul %77, %79, %cst_67 {dimension_numbers = #tpu.dot_dimension_numbers<[1], [0], [0], [1], [0, 0, 1, 1], [], []>} : vector<256x4xbf16>, vector<4x128xbf16>, vector<256x128xf32> -> vector<256x128xf32>
    %81 = arith.addf %72, %80 : vector<256x128xf32>
    %c0_68 = arith.constant 0 : index
    %c0_69 = arith.constant 0 : index
    %c0_70 = arith.constant 0 : index
    %82 = vector.load %arg4[%c0_68, %c0_69, %c0_70] : memref<1x256x128xf32, #tpu.memory_space<vmem>>, vector<1x256x128xf32>
    %83 = vector.shape_cast %82 : vector<1x256x128xf32> to vector<256x128xf32>
    %84 = vector.shape_cast %81 : vector<256x128xf32> to vector<1x256x128xf32>
    tpu.vector_store %arg4[%c0_68, %c0_69, %c0_70], %84 {strides = array<i32>} : memref<1x256x128xf32, #tpu.memory_space<vmem>>, vector<1x256x128xf32>,
    return
  }
  func.func @transform_0(%arg0: i32, %arg1: i32) -> (i32, i32, i32, i32, i32) {
    %c0_i32 = arith.constant 0 : i32
    %c0_i32_0 = arith.constant 0 : i32
    %c0_i32_1 = arith.constant 0 : i32
    %c0_i32_2 = arith.constant 0 : i32
    %c0_i32_3 = arith.constant 0 : i32
    return %arg0, %c0_i32, %c0_i32_0, %c0_i32_1, %c0_i32_2 : i32, i32, i32, i32, i32
  }
  func.func @transform_1(%arg0: i32, %arg1: i32) -> (i32, i32, i32) {
    %c0_i32 = arith.constant 0 : i32
    %c0_i32_0 = arith.constant 0 : i32
    %c0_i32_1 = arith.constant 0 : i32
    %c0_i32_2 = arith.constant 0 : i32
    return %c0_i32, %c0_i32_0, %c0_i32_1 : i32, i32, i32
  }
  func.func @transform_2(%arg0: i32, %arg1: i32) -> (i32, i32, i32) {
    %c0_i32 = arith.constant 0 : i32
    %c0_i32_0 = arith.constant 0 : i32
    return %arg0, %arg1, %c0_i32 : i32, i32, i32
  }
}

</mosaic_0001>

<llo_original>
// kernel: bayes_conv2d_lr.1
$region0: #{bayes_conv2d_lr.1}
  #allocation0 [shape = 'u32[]', space=smem, size = 0x4, offset = 0x4, fixed_abs, tag = 'smem constant byte address 0x4 - core index']
  #allocation1 [shape = 'u32[144,128]{1,0:T(1,128)}', space=vmem, size = 0x12000, scoped, tag = 'internal scratch']
  %s0 = inlined_call_operand.vmem [shape: bf16[2,1,18,18,4], index: 0, kind: input, shape index: {}]
  %s1 = inlined_call_operand.vmem [shape: bf16[9,4,128], index: 1, kind: input, shape index: {}]
  %s2 = inlined_call_operand.vmem [shape: f32[2,256,128], index: 2, kind: output, shape index: {}]
  %s3 = sld [smem:[#allocation0]]
  $region41: #{bayes_conv2d_lr.1} parent=0
    _
  %s5 = ssub.s32 1, %s3
  %s6 = scalar_select 0, %s5, %s3
  loop: start=0, step=1, limit=4
  $region2: #{bayes_conv2d_lr.1} parent=0 // loop_pre_header
    _
  $region3: #{bayes_conv2d_lr.1} parent=0 // loop_header
    %s8 = sphi 0, %s12
    %p9 = scmp.ge.s32.totalorder %s8, 4
    %s15 = sphi 0, %s27
    %s16 = sphi 0, %s23
    %s17 = sphi 0, %s15
    %s18 = sphi 0, %s16
    %s19 = sphi 0, %s17
    %s20 = sphi 0, %s18
    %s30 = sphi 0, %s32
    %s33 = sphi 0, %s30
    %s34 = sphi 0, %s33
    %s50 = sphi 0, %s34
    %s54 = sphi 0, %s54
    %s56 = sphi 0, %s54
    %s57 = sphi 0, %s56
    %s71 = sphi 0, %s57
    %s79 = sphi 0, %s81
    %s82 = sphi 0, %s79
    %s83 = sphi 0, %s82
    %s99 = sphi 0, %s83
  $region4: #{bayes_conv2d_lr.1} parent=0 // loop_header_branch
    %11 = sbr.rel (%p9) target = $region8
  $region5: #{bayes_conv2d_lr.1} parent=0 // loop_body
    %s13 = ssub.s32 %s8, 1
    %s14 = ssub.s32 %s8, 2
    %s21 = sadd.s32 1, %s16
    %p22 = scmp.ge.s32.totalorder %s21, 1
    %s23 = scalar_select %p22, 0, %s21
    %s24 = sadd.s32 1, %s15
    %s25 = scalar_select %p22, %s24, %s15
    %p26 = scmp.ge.s32.totalorder %s25, 2
    %s27 = scalar_select %p26, 0, %s25
    %s28 = ssub.s32 %s15, %s27
    %p29 = scmp.eq.s32.totalorder %s28, 0
    %s31 = sadd.s32 %s30, 1
    %s32 = scalar_select %p29, %s30, %s31
    %p35 = pneg %p29
    %p36 = scmp.eq.s32.totalorder %s8, 1
    %p37 = por %p35, %p36
    %p38 = scmp.ne.s32.totalorder %s30, %s33
    %p39 = scmp.eq.s32.totalorder %s8, 0
    %p40 = por %p38, %p39
    %p41 = scmp.ne.s32.totalorder %s30, %s33
    %p42 = scmp.eq.s32.totalorder %s13, 1
    %p43 = por %p41, %p42
    %p44 = scmp.ne.s32.totalorder %s33, %s34
    %p45 = scmp.eq.s32.totalorder %s13, 0
    %p46 = por %p44, %p45
    %p47 = scmp.ne.s32.totalorder %s33, %s34
    %p48 = scmp.eq.s32.totalorder %s14, 1
    %p49 = por %p47, %p48
    %p51 = scmp.ne.s32.totalorder %s34, %s50
    %p52 = scmp.eq.s32.totalorder %s14, 0
    %p53 = por %p51, %p52
    %s55 = sadd.s32 %s54, 1
    %p58 = scmp.eq.s32.totalorder %s8, 1
    %p59 = scmp.ne.s32.totalorder %s54, %s56
    %p60 = scmp.eq.s32.totalorder %s8, 0
    %p61 = por %p59, %p60
    %p62 = scmp.ne.s32.totalorder %s54, %s56
    %p63 = scmp.eq.s32.totalorder %s13, 1
    %p64 = por %p62, %p63
    %p65 = scmp.ne.s32.totalorder %s56, %s57
    %p66 = scmp.eq.s32.totalorder %s13, 0
    %p67 = por %p65, %p66
    %p68 = scmp.ne.s32.totalorder %s56, %s57
    %p69 = scmp.eq.s32.totalorder %s14, 1
    %p70 = por %p68, %p69
    %p72 = scmp.ne.s32.totalorder %s57, %s71
    %p73 = scmp.eq.s32.totalorder %s14, 0
    %p74 = por %p72, %p73
    %s75 = ssub.s32 %s15, %s27
    %s76 = ssub.s32 %s16, %s23
    %s77 = sor.u32 %s75, %s76
    %p78 = scmp.eq.s32.totalorder %s77, 0
    %s80 = sadd.s32 %s79, 1
    %s81 = scalar_select %p78, %s79, %s80
    %p84 = pneg %p78
    %p85 = scmp.eq.s32.totalorder %s8, 1
    %p86 = por %p84, %p85
    %p87 = scmp.ne.s32.totalorder %s79, %s82
    %p88 = scmp.eq.s32.totalorder %s8, 0
    %p89 = por %p87, %p88
    %p90 = scmp.ne.s32.totalorder %s79, %s82
    %p91 = scmp.eq.s32.totalorder %s13, 1
    %p92 = por %p90, %p91
    %p93 = scmp.ne.s32.totalorder %s82, %s83
    %p94 = scmp.eq.s32.totalorder %s13, 0
    %p95 = por %p93, %p94
    %p96 = scmp.ne.s32.totalorder %s82, %s83
    %p97 = scmp.eq.s32.totalorder %s14, 1
    %p98 = por %p96, %p97
    %p100 = scmp.ne.s32.totalorder %s83, %s99
    %p101 = scmp.eq.s32.totalorder %s14, 0
    %p102 = por %p100, %p101
    %p103 = scmp.le.s32.totalorder 1, %s8
    %p104 = scmp.lt.s32.totalorder %s8, 3
    %p105 = pnand %p103, %p104
    %p106 = pneg %p105
    // Predicated region
    $region9: #{bayes_conv2d_lr.1} parent=5 // pred_check
      _
    $region10: #{bayes_conv2d_lr.1} parent=5 // pred_check_branch
      %108 = sbr.rel (%p105) target = $region12
    $region11: #{bayes_conv2d_lr.1} parent=5 // pred_region
      %s109 = ssub.s32 %s8, 1
      // Predicated region
      $region13: #{bayes_conv2d_lr.1} parent=11 // pred_check
        %p110 = pneg %p67
      $region14: #{bayes_conv2d_lr.1} parent=11 // pred_check_branch
        %112 = sbr.rel (%p110) target = $region16
      $region15: #{bayes_conv2d_lr.1} parent=11 // pred_region
        _
      $region16: #{bayes_conv2d_lr.1} parent=11 // pred_fallthru
        _
    $region12: #{bayes_conv2d_lr.1} parent=5 // pred_fallthru
      _
    %p113 = scmp.lt.s32.totalorder %s8, 2
    // Predicated region
    $region17: #{bayes_conv2d_lr.1} parent=5 // pred_check
      %p114 = pneg %p113
    $region18: #{bayes_conv2d_lr.1} parent=5 // pred_check_branch
      %116 = sbr.rel (%p114) target = $region20
    $region19: #{bayes_conv2d_lr.1} parent=5 // pred_region
      // Predicated region
      $region21: #{bayes_conv2d_lr.1} parent=19 // pred_check
        %p117 = pneg %p40
      $region22: #{bayes_conv2d_lr.1} parent=19 // pred_check_branch
        %119 = sbr.rel (%p117) target = $region24
      $region23: #{bayes_conv2d_lr.1} parent=19 // pred_region
        %p120 = scmp.lt.s32.totalorder %s15, 1
        %s121 = scalar_select %p120, %s15, 1
        %s122 = smul.addr %s121, 54
        %s123 = smul.addr %s122, 4
        %s124 = scalar_lea.vmem %s0, %s123
      $region24: #{bayes_conv2d_lr.1} parent=19 // pred_fallthru
        _
    $region20: #{bayes_conv2d_lr.1} parent=5 // pred_fallthru
      _
    %p125 = scmp.le.s32.totalorder 1, %s8
    %p126 = scmp.lt.s32.totalorder %s8, 3
    %p127 = pnand %p125, %p126
    %p128 = pneg %p127
    // Predicated region
    $region25: #{bayes_conv2d_lr.1} parent=5 // pred_check
      _
    $region26: #{bayes_conv2d_lr.1} parent=5 // pred_check_branch
      %130 = sbr.rel (%p127) target = $region28
    $region27: #{bayes_conv2d_lr.1} parent=5 // pred_region
      %s131 = ssub.s32 %s8, 1
      %p132 = scmp.lt.s32.totalorder %s17, 1
      %s133 = scalar_select %p132, %s17, 1
      %s134 = smul.addr %s133, 54
      %s135 = smul.addr %s134, 4
      %s136 = scalar_lea.vmem %s0, %s135
      %p137 = pneg %p46
      %p138 = pneg %p43
      %p139 = pneg %p67
      %p140 = pneg %p64
      %p141 = pneg %p95
      %p142 = pneg %p92
      %s143 = smul.u32 32, %s18
      %p144 = scmp.lt.s32.totalorder %s17, 1
      %s145 = scalar_select %p144, %s17, 1
      %p146 = scmp.lt.s32.totalorder %s143, 31
      %s147 = scalar_select %p146, %s143, 31
      %s148 = smul.addr %s145, 32
      %s149 = sadd.s32 %s147, %s148
      %s150 = smul.addr %s149, 8
      %s151 = scalar_lea.vmem %s2, %s150
      %p152 = scmp.lt.s32.totalorder %s17, 1
      %s153 = scalar_select %p152, %s17, 1
      %s154 = smul.addr %s153, 54
      %s155 = smul.addr %s154, 4
      %s156 = scalar_lea.vmem %s0, %s155
      %s157 = smul.u32 32, %s18
      %p158 = scmp.lt.s32.totalorder %s17, 1
      %s159 = scalar_select %p158, %s17, 1
      %p160 = scmp.lt.s32.totalorder %s157, 31
      %s161 = scalar_select %p160, %s157, 31
      %s162 = smul.addr %s159, 32
      %s163 = sadd.s32 %s161, %s162
      %s164 = smul.addr %s163, 8
      %s165 = scalar_lea.vmem %s2, %s164
      %s166 = smul.u32 32, %s18
      %s168 = smul.u32 %s18, 16
      %s169 = smul.u32 %s168, 3
      %s170 = smul.addr %s169, 4
      %s171 = scalar_lea.vmem %s156, %s170
      %v172 = vld [vmem:[%s171] sm:$0xf]
      %v173 = vld [vmem:[%s171 + $0x4] sm:$0xf]
      %v174 = vld [vmem:[%s171 + $0xc] sm:$0xf]
      %v175 = vld [vmem:[%s171 + $0x10] sm:$0xf]
      %v176 = vld [vmem:[%s171 + $0x18] sm:$0xf]
      %v177 = vld [vmem:[%s171 + $0x1c] sm:$0xf]
      %v178 = vld [vmem:[%s171 + $0x24] sm:$0xf]
      %v179 = vld [vmem:[%s171 + $0x28] sm:$0xf]
      %v180 = vld [vmem:[%s171 + $0x30] sm:$0xf]
      %v181 = vld [vmem:[%s171 + $0x34] sm:$0xf]
      %v182 = vld [vmem:[%s171 + $0x3c] sm:$0xf]
      %v183 = vld [vmem:[%s171 + $0x40] sm:$0xf]
      %v184 = vld [vmem:[%s171 + $0x48] sm:$0xf]
      %v185 = vld [vmem:[%s171 + $0x4c] sm:$0xf]
      %v186 = vld [vmem:[%s171 + $0x54] sm:$0xf]
      %v187 = vld [vmem:[%s171 + $0x58] sm:$0xf]
      %v188 = vld [vmem:[%s171 + $0x60] sm:$0xf]
      %v189 = vld [vmem:[%s171 + $0x64] sm:$0xf]
      %v190 = vld [vmem:[%s171 + $0x6c] sm:$0xf]
      %v191 = vld [vmem:[%s171 + $0x70] sm:$0xf]
      %v192 = vld [vmem:[%s171 + $0x78] sm:$0xf]
      %v193 = vld [vmem:[%s171 + $0x7c] sm:$0xf]
      %v194 = vld [vmem:[%s171 + $0x84] sm:$0xf]
      %v195 = vld [vmem:[%s171 + $0x88] sm:$0xf]
      %v196 = vld [vmem:[%s171 + $0x90] sm:$0xf]
      %v197 = vld [vmem:[%s171 + $0x94] sm:$0xf]
      %v198 = vld [vmem:[%s171 + $0x9c] sm:$0xf]
      %v199 = vld [vmem:[%s171 + $0xa0] sm:$0xf]
      %v200 = vld [vmem:[%s171 + $0xa8] sm:$0xf]
      %v201 = vld [vmem:[%s171 + $0xac] sm:$0xf]
      %v202 = vld [vmem:[%s171 + $0xb4] sm:$0xf]
      %v203 = vld [vmem:[%s171 + $0xb8] sm:$0xf]
      %v204 = vld [vmem:[%s1] sm:$0x3]
      %v205 = vld [vmem:[%s171 + $0x8] sm:$0x1]
      %v206 = vld [vmem:[%s171 + $0x14] sm:$0x1]
      %v207 = vld [vmem:[%s171 + $0x20] sm:$0x1]
      %v208 = vld [vmem:[%s171 + $0x2c] sm:$0x1]
      %v209 = vld [vmem:[%s171 + $0x38] sm:$0x1]
      %v210 = vld [vmem:[%s171 + $0x44] sm:$0x1]
      %v211 = vld [vmem:[%s171 + $0x50] sm:$0x1]
      %v212 = vld [vmem:[%s171 + $0x5c] sm:$0x1]
      %v213 = vld [vmem:[%s171 + $0x68] sm:$0x1]
      %v214 = vld [vmem:[%s171 + $0x74] sm:$0x1]
      %v215 = vld [vmem:[%s171 + $0x80] sm:$0x1]
      %v216 = vld [vmem:[%s171 + $0x8c] sm:$0x1]
      %v217 = vld [vmem:[%s171 + $0x98] sm:$0x1]
      %v218 = vld [vmem:[%s171 + $0xa4] sm:$0x1]
      %v219 = vld [vmem:[%s171 + $0xb0] sm:$0x1]
      %v220 = vld [vmem:[%s171 + $0xbc] sm:$0x1]
      %vm221 = vsmask.f32 3328
      %vm222 = vsmask.f32 7440
      %vm223 = vmor %vm221, %vm222
      %v225 = vshrl.u32 %v172, 16
      %v227 = vrot.slane %v225, 4
      %v228 = vshll.u32 %v172, 16
      %v230 = vrot.slane %v228, 5
      %v231 = vor.u32 %v227, %v230
      %v232 = vrot.slane %v231, 4
      %v234 = vshll.u32 %v173, 16
      %v236 = vrot.slane %v234, 5
      %v237 = vsel %vm223, %v232, %v236
      %v238 = vshrl.u32 %v173, 16
      %v240 = vrot.slane %v238, 4
      %v241 = vor.u32 %v240, %v236
      %v242 = vrot.slane %v241, 4
      %v244 = vshll.u32 %v205, 16
      %v246 = vrot.slane %v244, 5
      %v247 = vsel %vm223, %v242, %v246
      %v249 = vshrl.u32 %v174, 16
      %v251 = vrot.slane %v249, 4
      %v252 = vshll.u32 %v174, 16
      %v254 = vrot.slane %v252, 5
      %v255 = vor.u32 %v251, %v254
      %v256 = vrot.slane %v255, 4
      %v258 = vshll.u32 %v175, 16
      %v260 = vrot.slane %v258, 5
      %v261 = vsel %vm223, %v256, %v260
      %v262 = vshrl.u32 %v175, 16
      %v264 = vrot.slane %v262, 4
      %v265 = vor.u32 %v264, %v260
      %v266 = vrot.slane %v265, 4
      %v268 = vshll.u32 %v206, 16
      %v270 = vrot.slane %v268, 5
      %v271 = vsel %vm223, %v266, %v270
      %v273 = vshrl.u32 %v176, 16
      %v275 = vrot.slane %v273, 4
      %v276 = vshll.u32 %v176, 16
      %v278 = vrot.slane %v276, 5
      %v279 = vor.u32 %v275, %v278
      %v280 = vrot.slane %v279, 4
      %v282 = vshll.u32 %v177, 16
      %v284 = vrot.slane %v282, 5
      %v285 = vsel %vm223, %v280, %v284
      %v286 = vshrl.u32 %v177, 16
      %v288 = vrot.slane %v286, 4
      %v289 = vor.u32 %v288, %v284
      %v290 = vrot.slane %v289, 4
      %v292 = vshll.u32 %v207, 16
      %v294 = vrot.slane %v292, 5
      %v295 = vsel %vm223, %v290, %v294
      %v297 = vshrl.u32 %v178, 16
      %v299 = vrot.slane %v297, 4
      %v300 = vshll.u32 %v178, 16
      %v302 = vrot.slane %v300, 5
      %v303 = vor.u32 %v299, %v302
      %v304 = vrot.slane %v303, 4
      %v306 = vshll.u32 %v179, 16
      %v308 = vrot.slane %v306, 5
      %v309 = vsel %vm223, %v304, %v308
      %v310 = vshrl.u32 %v179, 16
      %v312 = vrot.slane %v310, 4
      %v313 = vor.u32 %v312, %v308
      %v314 = vrot.slane %v313, 4
      %v316 = vshll.u32 %v208, 16
      %v318 = vrot.slane %v316, 5
      %v319 = vsel %vm223, %v314, %v318
      %v321 = vshrl.u32 %v180, 16
      %v323 = vrot.slane %v321, 4
      %v324 = vshll.u32 %v180, 16
      %v326 = vrot.slane %v324, 5
      %v327 = vor.u32 %v323, %v326
      %v328 = vrot.slane %v327, 4
      %v330 = vshll.u32 %v181, 16
      %v332 = vrot.slane %v330, 5
      %v333 = vsel %vm223, %v328, %v332
      %v334 = vshrl.u32 %v181, 16
      %v336 = vrot.slane %v334, 4
      %v337 = vor.u32 %v336, %v332
      %v338 = vrot.slane %v337, 4
      %v340 = vshll.u32 %v209, 16
      %v342 = vrot.slane %v340, 5
      %v343 = vsel %vm223, %v338, %v342
      %v345 = vshrl.u32 %v182, 16
      %v347 = vrot.slane %v345, 4
      %v348 = vshll.u32 %v182, 16
      %v350 = vrot.slane %v348, 5
      %v351 = vor.u32 %v347, %v350
      %v352 = vrot.slane %v351, 4
      %v354 = vshll.u32 %v183, 16
      %v356 = vrot.slane %v354, 5
      %v357 = vsel %vm223, %v352, %v356
      %v358 = vshrl.u32 %v183, 16
      %v360 = vrot.slane %v358, 4
      %v361 = vor.u32 %v360, %v356
      %v362 = vrot.slane %v361, 4
      %v364 = vshll.u32 %v210, 16
      %v366 = vrot.slane %v364, 5
      %v367 = vsel %vm223, %v362, %v366
      %v369 = vshrl.u32 %v184, 16
      %v371 = vrot.slane %v369, 4
      %v372 = vshll.u32 %v184, 16
      %v374 = vrot.slane %v372, 5
      %v375 = vor.u32 %v371, %v374
      %v376 = vrot.slane %v375, 4
      %v378 = vshll.u32 %v185, 16
      %v380 = vrot.slane %v378, 5
      %v381 = vsel %vm223, %v376, %v380
      %v382 = vshrl.u32 %v185, 16
      %v384 = vrot.slane %v382, 4
      %v385 = vor.u32 %v384, %v380
      %v386 = vrot.slane %v385, 4
      %v388 = vshll.u32 %v211, 16
      %v390 = vrot.slane %v388, 5
      %v391 = vsel %vm223, %v386, %v390
      %v393 = vshrl.u32 %v186, 16
      %v395 = vrot.slane %v393, 4
      %v396 = vshll.u32 %v186, 16
      %v398 = vrot.slane %v396, 5
      %v399 = vor.u32 %v395, %v398
      %v400 = vrot.slane %v399, 4
      %v402 = vshll.u32 %v187, 16
      %v404 = vrot.slane %v402, 5
      %v405 = vsel %vm223, %v400, %v404
      %v406 = vshrl.u32 %v187, 16
      %v408 = vrot.slane %v406, 4
      %v409 = vor.u32 %v408, %v404
      %v410 = vrot.slane %v409, 4
      %v412 = vshll.u32 %v212, 16
      %v414 = vrot.slane %v412, 5
      %v415 = vsel %vm223, %v410, %v414
      %v417 = vshrl.u32 %v188, 16
      %v419 = vrot.slane %v417, 4
      %v420 = vshll.u32 %v188, 16
      %v422 = vrot.slane %v420, 5
      %v423 = vor.u32 %v419, %v422
      %v424 = vrot.slane %v423, 4
      %v426 = vshll.u32 %v189, 16
      %v428 = vrot.slane %v426, 5
      %v429 = vsel %vm223, %v424, %v428
      %v430 = vshrl.u32 %v189, 16
      %v432 = vrot.slane %v430, 4
      %v433 = vor.u32 %v432, %v428
      %v434 = vrot.slane %v433, 4
      %v436 = vshll.u32 %v213, 16
      %v438 = vrot.slane %v436, 5
      %v439 = vsel %vm223, %v434, %v438
      %v441 = vshrl.u32 %v190, 16
      %v443 = vrot.slane %v441, 4
      %v444 = vshll.u32 %v190, 16
      %v446 = vrot.slane %v444, 5
      %v447 = vor.u32 %v443, %v446
      %v448 = vrot.slane %v447, 4
      %v450 = vshll.u32 %v191, 16
      %v452 = vrot.slane %v450, 5
      %v453 = vsel %vm223, %v448, %v452
      %v454 = vshrl.u32 %v191, 16
      %v456 = vrot.slane %v454, 4
      %v457 = vor.u32 %v456, %v452
      %v458 = vrot.slane %v457, 4
      %v460 = vshll.u32 %v214, 16
      %v462 = vrot.slane %v460, 5
      %v463 = vsel %vm223, %v458, %v462
      %v465 = vshrl.u32 %v192, 16
      %v467 = vrot.slane %v465, 4
      %v468 = vshll.u32 %v192, 16
      %v470 = vrot.slane %v468, 5
      %v471 = vor.u32 %v467, %v470
      %v472 = vrot.slane %v471, 4
      %v474 = vshll.u32 %v193, 16
      %v476 = vrot.slane %v474, 5
      %v477 = vsel %vm223, %v472, %v476
      %v478 = vshrl.u32 %v193, 16
      %v480 = vrot.slane %v478, 4
      %v481 = vor.u32 %v480, %v476
      %v482 = vrot.slane %v481, 4
      %v484 = vshll.u32 %v215, 16
      %v486 = vrot.slane %v484, 5
      %v487 = vsel %vm223, %v482, %v486
      %v489 = vshrl.u32 %v194, 16
      %v491 = vrot.slane %v489, 4
      %v492 = vshll.u32 %v194, 16
      %v494 = vrot.slane %v492, 5
      %v495 = vor.u32 %v491, %v494
      %v496 = vrot.slane %v495, 4
      %v498 = vshll.u32 %v195, 16
      %v500 = vrot.slane %v498, 5
      %v501 = vsel %vm223, %v496, %v500
      %v502 = vshrl.u32 %v195, 16
      %v504 = vrot.slane %v502, 4
      %v505 = vor.u32 %v504, %v500
      %v506 = vrot.slane %v505, 4
      %v508 = vshll.u32 %v216, 16
      %v510 = vrot.slane %v508, 5
      %v511 = vsel %vm223, %v506, %v510
      %v513 = vshrl.u32 %v196, 16
      %v515 = vrot.slane %v513, 4
      %v516 = vshll.u32 %v196, 16
      %v518 = vrot.slane %v516, 5
      %v519 = vor.u32 %v515, %v518
      %v520 = vrot.slane %v519, 4
      %v522 = vshll.u32 %v197, 16
      %v524 = vrot.slane %v522, 5
      %v525 = vsel %vm223, %v520, %v524
      %v526 = vshrl.u32 %v197, 16
      %v528 = vrot.slane %v526, 4
      %v529 = vor.u32 %v528, %v524
      %v530 = vrot.slane %v529, 4
      %v532 = vshll.u32 %v217, 16
      %v534 = vrot.slane %v532, 5
      %v535 = vsel %vm223, %v530, %v534
      %v537 = vshrl.u32 %v198, 16
      %v539 = vrot.slane %v537, 4
      %v540 = vshll.u32 %v198, 16
      %v542 = vrot.slane %v540, 5
      %v543 = vor.u32 %v539, %v542
      %v544 = vrot.slane %v543, 4
      %v546 = vshll.u32 %v199, 16
      %v548 = vrot.slane %v546, 5
      %v549 = vsel %vm223, %v544, %v548
      %v550 = vshrl.u32 %v199, 16
      %v552 = vrot.slane %v550, 4
      %v553 = vor.u32 %v552, %v548
      %v554 = vrot.slane %v553, 4
      %v556 = vshll.u32 %v218, 16
      %v558 = vrot.slane %v556, 5
      %v559 = vsel %vm223, %v554, %v558
      %v561 = vshrl.u32 %v200, 16
      %v563 = vrot.slane %v561, 4
      %v564 = vshll.u32 %v200, 16
      %v566 = vrot.slane %v564, 5
      %v567 = vor.u32 %v563, %v566
      %v568 = vrot.slane %v567, 4
      %v570 = vshll.u32 %v201, 16
      %v572 = vrot.slane %v570, 5
      %v573 = vsel %vm223, %v568, %v572
      %v574 = vshrl.u32 %v201, 16
      %v576 = vrot.slane %v574, 4
      %v577 = vor.u32 %v576, %v572
      %v578 = vrot.slane %v577, 4
      %v580 = vshll.u32 %v219, 16
      %v582 = vrot.slane %v580, 5
      %v583 = vsel %vm223, %v578, %v582
      %v585 = vshrl.u32 %v202, 16
      %v587 = vrot.slane %v585, 4
      %v588 = vshll.u32 %v202, 16
      %v590 = vrot.slane %v588, 5
      %v591 = vor.u32 %v587, %v590
      %v592 = vrot.slane %v591, 4
      %v594 = vshll.u32 %v203, 16
      %v596 = vrot.slane %v594, 5
      %v597 = vsel %vm223, %v592, %v596
      %v598 = vshrl.u32 %v203, 16
      %v600 = vrot.slane %v598, 4
      %v601 = vor.u32 %v600, %v596
      %v602 = vrot.slane %v601, 4
      %v604 = vshll.u32 %v220, 16
      %v606 = vrot.slane %v604, 5
      %v607 = vsel %vm223, %v602, %v606
      %s608 = scalar_lea.vmem %s1, 2
      %v609 = vld [vmem:[%s608] sm:$0x3]
      %v610 = vunpack.c.l.b16 %v237
      %v611 = vunpack.c.l.b16 %v247
      %v612 = vunpack.c.l.b16 %v261
      %v613 = vunpack.c.l.b16 %v271
      %v614 = vunpack.c.l.b16 %v285
      %v615 = vunpack.c.l.b16 %v295
      %v616 = vunpack.c.l.b16 %v309
      %v617 = vunpack.c.l.b16 %v319
      %v618 = vunpack.c.l.b16 %v333
      %v619 = vunpack.c.l.b16 %v343
      %v620 = vunpack.c.l.b16 %v357
      %v621 = vunpack.c.l.b16 %v367
      %v622 = vunpack.c.l.b16 %v381
      %v623 = vunpack.c.l.b16 %v391
      %v624 = vunpack.c.l.b16 %v405
      %v625 = vunpack.c.l.b16 %v415
      %v626 = vunpack.c.l.b16 %v429
      %v627 = vunpack.c.l.b16 %v439
      %v628 = vunpack.c.l.b16 %v453
      %v629 = vunpack.c.l.b16 %v463
      %v630 = vunpack.c.l.b16 %v477
      %v631 = vunpack.c.l.b16 %v487
      %v632 = vunpack.c.l.b16 %v501
      %v633 = vunpack.c.l.b16 %v511
      %v634 = vunpack.c.l.b16 %v525
      %v635 = vunpack.c.l.b16 %v535
      %v636 = vunpack.c.l.b16 %v549
      %v637 = vunpack.c.l.b16 %v559
      %v638 = vunpack.c.l.b16 %v573
      %v639 = vunpack.c.l.b16 %v583
      %v640 = vunpack.c.l.b16 %v597
      %v641 = vunpack.c.l.b16 %v607
      %v642 = vpack.c.b16 %v611, %v610
      %v643 = vpack.c.b16 %v613, %v612
      %v644 = vpack.c.b16 %v615, %v614
      %v645 = vpack.c.b16 %v617, %v616
      %v646 = vpack.c.b16 %v619, %v618
      %v647 = vpack.c.b16 %v621, %v620
      %v648 = vpack.c.b16 %v623, %v622
      %v649 = vpack.c.b16 %v625, %v624
      %v650 = vpack.c.b16 %v627, %v626
      %v651 = vpack.c.b16 %v629, %v628
      %v652 = vpack.c.b16 %v631, %v630
      %v653 = vpack.c.b16 %v633, %v632
      %v654 = vpack.c.b16 %v635, %v634
      %v655 = vpack.c.b16 %v637, %v636
      %v656 = vpack.c.b16 %v639, %v638
      %v657 = vpack.c.b16 %v641, %v640
      %vm658 = vcmask 31744
      %v660 = vsel %vm658, %v642, 0
      %v663 = vsel %vm658, %v643, 0
      %v666 = vsel %vm658, %v644, 0
      %v669 = vsel %vm658, %v645, 0
      %v672 = vsel %vm658, %v646, 0
      %v675 = vsel %vm658, %v647, 0
      %v678 = vsel %vm658, %v648, 0
      %v681 = vsel %vm658, %v649, 0
      %v684 = vsel %vm658, %v650, 0
      %v687 = vsel %vm658, %v651, 0
      %v690 = vsel %vm658, %v652, 0
      %v693 = vsel %vm658, %v653, 0
      %v696 = vsel %vm658, %v654, 0
      %v699 = vsel %vm658, %v655, 0
      %v702 = vsel %vm658, %v656, 0
      %v705 = vsel %vm658, %v657, 0
      %vm707 = vcmask 1041408
      %v709 = vsel %vm707, %v609, 0
      %711 = vmatprep.subr.bf16.mxu0 0
      %712 = vmatpush1.bf16.msra.mxu0 %v709
      %713 = vmatprep.subr.bf16.mxu0 0
      %714 = vmatpush1.bf16.msra.mxu0 0
      %715 = vmatprep.subr.bf16.mxu0 0
      %716 = vmatpush1.bf16.msra.mxu0 0
      %717 = vmatprep.subr.bf16.mxu0 0
      %718 = vmatpush1.bf16.msra.mxu0 0
      %719 = vmatprep.subr.bf16.mxu0 0
      %720 = vmatpush1.bf16.msra.mxu0 0
      %721 = vmatprep.subr.bf16.mxu0 0
      %722 = vmatpush1.bf16.msra.mxu0 0
      %723 = vmatprep.subr.bf16.mxu0 0
      %724 = vmatpush1.bf16.msra.mxu0 0
      %725 = vmatprep.subr.bf16.mxu0 0
      %726 = vmatpush1.bf16.msra.mxu0 0
      %727 = vmatprep.subr.bf16.mxu0 0
      %728 = vmatpush1.bf16.msra.mxu0 0
      %729 = vmatprep.subr.bf16.mxu0 0
      %730 = vmatpush1.bf16.msra.mxu0 0
      %731 = vmatprep.subr.bf16.mxu0 0
      %732 = vmatpush1.bf16.msra.mxu0 0
      %733 = vmatprep.subr.bf16.mxu0 0
      %734 = vmatpush1.bf16.msra.mxu0 0
      %735 = vmatprep.subr.bf16.mxu0 0
      %736 = vmatpush1.bf16.msra.mxu0 0
      %737 = vmatprep.subr.bf16.mxu0 0
      %738 = vmatpush1.bf16.msra.mxu0 0
      %739 = vmatprep.subr.bf16.mxu0 0
      %740 = vmatpush1.bf16.msra.mxu0 0
      %741 = vmatprep.subr.bf16.mxu0 0
      %742 = vmatpush1.bf16.msra.mxu0 0
      %743 = vmatprep.mubr.bf16.mxu0 0
      %744 = vmatmul.mubr.bf16.gmra.mrb[0].mxu0 %v660
      %v745 = vpop.f32.mrb[0].mxu0
      %v746 = vadd.f32 0.0, %v745
      %v747 = vpop.f32.mrb[0].mxu0
      %v748 = vpop.f32.mrb[0].mxu0
      %v749 = vadd.f32 0.0, %v748
      %v750 = vpop.f32.mrb[0].mxu0
      %751 = vmatprep.mubr.bf16.mxu0 0
      %752 = vmatmul.mubr.bf16.gmra.mrb[0].mxu0 %v663
      %v753 = vpop.f32.mrb[0].mxu0
      %v754 = vadd.f32 0.0, %v753
      %v755 = vpop.f32.mrb[0].mxu0
      %v756 = vpop.f32.mrb[0].mxu0
      %v757 = vadd.f32 0.0, %v756
      %v758 = vpop.f32.mrb[0].mxu0
      %759 = vmatprep.mubr.bf16.mxu0 0
      %760 = vmatmul.mubr.bf16.gmra.mrb[0].mxu0 %v666
      %v761 = vpop.f32.mrb[0].mxu0
      %v762 = vadd.f32 0.0, %v761
      %v763 = vpop.f32.mrb[0].mxu0
      %v764 = vpop.f32.mrb[0].mxu0
      %v765 = vadd.f32 0.0, %v764
      %v766 = vpop.f32.mrb[0].mxu0
      %767 = vmatprep.mubr.bf16.mxu0 0
      %768 = vmatmul.mubr.bf16.gmra.mrb[0].mxu0 %v669
      %v769 = vpop.f32.mrb[0].mxu0
      %v770 = vadd.f32 0.0, %v769
      %v771 = vpop.f32.mrb[0].mxu0
      %v772 = vpop.f32.mrb[0].mxu0
      %v773 = vadd.f32 0.0, %v772
      %v774 = vpop.f32.mrb[0].mxu0
      %775 = vmatprep.mubr.bf16.mxu0 0
      %776 = vmatmul.mubr.bf16.gmra.mrb[0].mxu0 %v672
      %v777 = vpop.f32.mrb[0].mxu0
      %v778 = vadd.f32 0.0, %v777
      %v779 = vpop.f32.mrb[0].mxu0
      %v780 = vpop.f32.mrb[0].mxu0
      %v781 = vadd.f32 0.0, %v780
      %v782 = vpop.f32.mrb[0].mxu0
      %783 = vmatprep.mubr.bf16.mxu0 0
      %784 = vmatmul.mubr.bf16.gmra.mrb[0].mxu0 %v675
      %v785 = vpop.f32.mrb[0].mxu0
      %v786 = vadd.f32 0.0, %v785
      %v787 = vpop.f32.mrb[0].mxu0
      %v788 = vpop.f32.mrb[0].mxu0
      %v789 = vadd.f32 0.0, %v788
      %v790 = vpop.f32.mrb[0].mxu0
      %791 = vmatprep.mubr.bf16.mxu0 0
      %792 = vmatmul.mubr.bf16.gmra.mrb[0].mxu0 %v678
      %v793 = vpop.f32.mrb[0].mxu0
      %v794 = vadd.f32 0.0, %v793
      %v795 = vpop.f32.mrb[0].mxu0
      %v796 = vpop.f32.mrb[0].mxu0
      %v797 = vadd.f32 0.0, %v796
      %v798 = vpop.f32.mrb[0].mxu0
      %799 = vmatprep.mubr.bf16.mxu0 0
      %800 = vmatmul.mubr.bf16.gmra.mrb[0].mxu0 %v681
      %v801 = vpop.f32.mrb[0].mxu0
      %v802 = vadd.f32 0.0, %v801
      %v803 = vpop.f32.mrb[0].mxu0
      %v804 = vpop.f32.mrb[0].mxu0
      %v805 = vadd.f32 0.0, %v804
      %v806 = vpop.f32.mrb[0].mxu0
      %807 = vmatprep.mubr.bf16.mxu0 0
      %808 = vmatmul.mubr.bf16.gmra.mrb[0].mxu0 %v684
      %v809 = vpop.f32.mrb[0].mxu0
      %v810 = vadd.f32 0.0, %v809
      %v811 = vpop.f32.mrb[0].mxu0
      %v812 = vpop.f32.mrb[0].mxu0
      %v813 = vadd.f32 0.0, %v812
      %v814 = vpop.f32.mrb[0].mxu0
      %815 = vmatprep.mubr.bf16.mxu0 0
      %816 = vmatmul.mubr.bf16.gmra.mrb[0].mxu0 %v687
      %v817 = vpop.f32.mrb[0].mxu0
      %v818 = vadd.f32 0.0, %v817
      %v819 = vpop.f32.mrb[0].mxu0
      %v820 = vpop.f32.mrb[0].mxu0
      %v821 = vadd.f32 0.0, %v820
      %v822 = vpop.f32.mrb[0].mxu0
      %823 = vmatprep.mubr.bf16.mxu0 0
      %824 = vmatmul.mubr.bf16.gmra.mrb[0].mxu0 %v690
      %v825 = vpop.f32.mrb[0].mxu0
      %v826 = vadd.f32 0.0, %v825
      %v827 = vpop.f32.mrb[0].mxu0
      %v828 = vpop.f32.mrb[0].mxu0
      %v829 = vadd.f32 0.0, %v828
      %v830 = vpop.f32.mrb[0].mxu0
      %831 = vmatprep.mubr.bf16.mxu0 0
      %832 = vmatmul.mubr.bf16.gmra.mrb[0].mxu0 %v693
      %v833 = vpop.f32.mrb[0].mxu0
      %v834 = vadd.f32 0.0, %v833
      %v835 = vpop.f32.mrb[0].mxu0
      %v836 = vpop.f32.mrb[0].mxu0
      %v837 = vadd.f32 0.0, %v836
      %v838 = vpop.f32.mrb[0].mxu0
      %839 = vmatprep.mubr.bf16.mxu0 0
      %840 = vmatmul.mubr.bf16.gmra.mrb[0].mxu0 %v696
      %v841 = vpop.f32.mrb[0].mxu0
      %v842 = vadd.f32 0.0, %v841
      %v843 = vpop.f32.mrb[0].mxu0
      %v844 = vpop.f32.mrb[0].mxu0
      %v845 = vadd.f32 0.0, %v844
      %v846 = vpop.f32.mrb[0].mxu0
      %847 = vmatprep.mubr.bf16.mxu0 0
      %848 = vmatmul.mubr.bf16.gmra.mrb[0].mxu0 %v699
      %v849 = vpop.f32.mrb[0].mxu0
      %v850 = vadd.f32 0.0, %v849
      %v851 = vpop.f32.mrb[0].mxu0
      %v852 = vpop.f32.mrb[0].mxu0
      %v853 = vadd.f32 0.0, %v852
      %v854 = vpop.f32.mrb[0].mxu0
      %855 = vmatprep.mubr.bf16.mxu0 0
      %856 = vmatmul.mubr.bf16.gmra.mrb[0].mxu0 %v702
      %v857 = vpop.f32.mrb[0].mxu0
      %v858 = vadd.f32 0.0, %v857
      %v859 = vpop.f32.mrb[0].mxu0
      %v860 = vpop.f32.mrb[0].mxu0
      %v861 = vadd.f32 0.0, %v860
      %v862 = vpop.f32.mrb[0].mxu0
      %863 = vmatprep.mubr.bf16.mxu0 0
      %864 = vmatmul.mubr.bf16.gmra.mrb[0].mxu0 %v705
      %v865 = vpop.f32.mrb[0].mxu0
      %v866 = vadd.f32 0.0, %v865
      %v867 = vpop.f32.mrb[0].mxu0
      %v868 = vpop.f32.mrb[0].mxu0
      %v869 = vadd.f32 0.0, %v868
      %v870 = vpop.f32.mrb[0].mxu0
      %871 = vdwg.mxu0
      %v904 = vunpack.c.l.b16 %v172
      %v905 = vunpack.c.l.b16 %v173
      %v906 = vunpack.c.l.b16 %v174
      %v907 = vunpack.c.l.b16 %v175
      %v908 = vunpack.c.l.b16 %v176
      %v909 = vunpack.c.l.b16 %v177
      %v910 = vunpack.c.l.b16 %v178
      %v911 = vunpack.c.l.b16 %v179
      %v912 = vunpack.c.l.b16 %v180
      %v913 = vunpack.c.l.b16 %v181
      %v914 = vunpack.c.l.b16 %v182
      %v915 = vunpack.c.l.b16 %v183
      %v916 = vunpack.c.l.b16 %v184
      %v917 = vunpack.c.l.b16 %v185
      %v918 = vunpack.c.l.b16 %v186
      %v919 = vunpack.c.l.b16 %v187
      %v920 = vunpack.c.l.b16 %v188
      %v921 = vunpack.c.l.b16 %v189
      %v922 = vunpack.c.l.b16 %v190
      %v923 = vunpack.c.l.b16 %v191
      %v924 = vunpack.c.l.b16 %v192
      %v925 = vunpack.c.l.b16 %v193
      %v926 = vunpack.c.l.b16 %v194
      %v927 = vunpack.c.l.b16 %v195
      %v928 = vunpack.c.l.b16 %v196
      %v929 = vunpack.c.l.b16 %v197
      %v930 = vunpack.c.l.b16 %v198
      %v931 = vunpack.c.l.b16 %v199
      %v932 = vunpack.c.l.b16 %v200
      %v933 = vunpack.c.l.b16 %v201
      %v934 = vunpack.c.l.b16 %v202
      %v935 = vunpack.c.l.b16 %v203
      %v936 = vpack.c.b16 %v905, %v904
      %v937 = vpack.c.b16 %v907, %v906
      %v938 = vpack.c.b16 %v909, %v908
      %v939 = vpack.c.b16 %v911, %v910
      %v940 = vpack.c.b16 %v913, %v912
      %v941 = vpack.c.b16 %v915, %v914
      %v942 = vpack.c.b16 %v917, %v916
      %v943 = vpack.c.b16 %v919, %v918
      %v944 = vpack.c.b16 %v921, %v920
      %v945 = vpack.c.b16 %v923, %v922
      %v946 = vpack.c.b16 %v925, %v924
      %v947 = vpack.c.b16 %v927, %v926
      %v948 = vpack.c.b16 %v929, %v928
      %v949 = vpack.c.b16 %v931, %v930
      %v950 = vpack.c.b16 %v933, %v932
      %v951 = vpack.c.b16 %v935, %v934
      %v953 = vsel %vm658, %v936, 0
      %v956 = vsel %vm658, %v937, 0
      %v959 = vsel %vm658, %v938, 0
      %v962 = vsel %vm658, %v939, 0
      %v965 = vsel %vm658, %v940, 0
      %v968 = vsel %vm658, %v941, 0
      %v971 = vsel %vm658, %v942, 0
      %v974 = vsel %vm658, %v943, 0
      %v977 = vsel %vm658, %v944, 0
      %v980 = vsel %vm658, %v945, 0
      %v983 = vsel %vm658, %v946, 0
      %v986 = vsel %vm658, %v947, 0
      %v989 = vsel %vm658, %v948, 0
      %v992 = vsel %vm658, %v949, 0
      %v995 = vsel %vm658, %v950, 0
      %v998 = vsel %vm658, %v951, 0
      %v1001 = vsel %vm707, %v204, 0
      %1003 = vmatprep.subr.bf16.mxu0 0
      %1004 = vmatpush1.bf16.msra.mxu0 %v1001
      %1005 = vmatprep.subr.bf16.mxu0 0
      %1006 = vmatpush1.bf16.msra.mxu0 0
      %1007 = vmatprep.subr.bf16.mxu0 0
      %1008 = vmatpush1.bf16.msra.mxu0 0
      %1009 = vmatprep.subr.bf16.mxu0 0
      %1010 = vmatpush1.bf16.msra.mxu0 0
      %1011 = vmatprep.subr.bf16.mxu0 0
      %1012 = vmatpush1.bf16.msra.mxu0 0
      %1013 = vmatprep.subr.bf16.mxu0 0
      %1014 = vmatpush1.bf16.msra.mxu0 0
      %1015 = vmatprep.subr.bf16.mxu0 0
      %1016 = vmatpush1.bf16.msra.mxu0 0
      %1017 = vmatprep.subr.bf16.mxu0 0
      %1018 = vmatpush1.bf16.msra.mxu0 0
      %1019 = vmatprep.subr.bf16.mxu0 0
      %1020 = vmatpush1.bf16.msra.mxu0 0
      %1021 = vmatprep.subr.bf16.mxu0 0
      %1022 = vmatpush1.bf16.msra.mxu0 0
      %1023 = vmatprep.subr.bf16.mxu0 0
      %1024 = vmatpush1.bf16.msra.mxu0 0
      %1025 = vmatprep.subr.bf16.mxu0 0
      %1026 = vmatpush1.bf16.msra.mxu0 0
      %1027 = vmatprep.subr.bf16.mxu0 0
      %1028 = vmatpush1.bf16.msra.mxu0 0
      %1029 = vmatprep.subr.bf16.mxu0 0
      %1030 = vmatpush1.bf16.msra.mxu0 0
      %1031 = vmatprep.subr.bf16.mxu0 0
      %1032 = vmatpush1.bf16.msra.mxu0 0
      %1033 = vmatprep.subr.bf16.mxu0 0
      %1034 = vmatpush1.bf16.msra.mxu0 0
      %1035 = vmatprep.mubr.bf16.mxu0 0
      %1036 = vmatmul.mubr.bf16.gmra.mrb[0].mxu0 %v953
      %v1037 = vpop.f32.mrb[0].mxu0
      %v1038 = vadd.f32 %v746, %v1037
      %v1039 = vpop.f32.mrb[0].mxu0
      %v1040 = vpop.f32.mrb[0].mxu0
      %v1041 = vadd.f32 %v749, %v1040
      %v1042 = vpop.f32.mrb[0].mxu0
      %1043 = vmatprep.mubr.bf16.mxu0 0
      %1044 = vmatmul.mubr.bf16.gmra.mrb[0].mxu0 %v956
      %v1045 = vpop.f32.mrb[0].mxu0
      %v1046 = vadd.f32 %v754, %v1045
      %v1047 = vpop.f32.mrb[0].mxu0
      %v1048 = vpop.f32.mrb[0].mxu0
      %v1049 = vadd.f32 %v757, %v1048
      %v1050 = vpop.f32.mrb[0].mxu0
      %1051 = vmatprep.mubr.bf16.mxu0 0
      %1052 = vmatmul.mubr.bf16.gmra.mrb[0].mxu0 %v959
      %v1053 = vpop.f32.mrb[0].mxu0
      %v1054 = vadd.f32 %v762, %v1053
      %v1055 = vpop.f32.mrb[0].mxu0
      %v1056 = vpop.f32.mrb[0].mxu0
      %v1057 = vadd.f32 %v765, %v1056
      %v1058 = vpop.f32.mrb[0].mxu0
      %1059 = vmatprep.mubr.bf16.mxu0 0
      %1060 = vmatmul.mubr.bf16.gmra.mrb[0].mxu0 %v962
      %v1061 = vpop.f32.mrb[0].mxu0
      %v1062 = vadd.f32 %v770, %v1061
      %v1063 = vpop.f32.mrb[0].mxu0
      %v1064 = vpop.f32.mrb[0].mxu0
      %v1065 = vadd.f32 %v773, %v1064
      %v1066 = vpop.f32.mrb[0].mxu0
      %1067 = vmatprep.mubr.bf16.mxu0 0
      %1068 = vmatmul.mubr.bf16.gmra.mrb[0].mxu0 %v965
      %v1069 = vpop.f32.mrb[0].mxu0
      %v1070 = vadd.f32 %v778, %v1069
      %v1071 = vpop.f32.mrb[0].mxu0
      %v1072 = vpop.f32.mrb[0].mxu0
      %v1073 = vadd.f32 %v781, %v1072
      %v1074 = vpop.f32.mrb[0].mxu0
      %1075 = vmatprep.mubr.bf16.mxu0 0
      %1076 = vmatmul.mubr.bf16.gmra.mrb[0].mxu0 %v968
      %v1077 = vpop.f32.mrb[0].mxu0
      %v1078 = vadd.f32 %v786, %v1077
      %v1079 = vpop.f32.mrb[0].mxu0
      %v1080 = vpop.f32.mrb[0].mxu0
      %v1081 = vadd.f32 %v789, %v1080
      %v1082 = vpop.f32.mrb[0].mxu0
      %1083 = vmatprep.mubr.bf16.mxu0 0
      %1084 = vmatmul.mubr.bf16.gmra.mrb[0].mxu0 %v971
      %v1085 = vpop.f32.mrb[0].mxu0
      %v1086 = vadd.f32 %v794, %v1085
      %v1087 = vpop.f32.mrb[0].mxu0
      %v1088 = vpop.f32.mrb[0].mxu0
      %v1089 = vadd.f32 %v797, %v1088
      %v1090 = vpop.f32.mrb[0].mxu0
      %1091 = vmatprep.mubr.bf16.mxu0 0
      %1092 = vmatmul.mubr.bf16.gmra.mrb[0].mxu0 %v974
      %v1093 = vpop.f32.mrb[0].mxu0
      %v1094 = vadd.f32 %v802, %v1093
      %v1095 = vpop.f32.mrb[0].mxu0
      %v1096 = vpop.f32.mrb[0].mxu0
      %v1097 = vadd.f32 %v805, %v1096
      %v1098 = vpop.f32.mrb[0].mxu0
      %1099 = vmatprep.mubr.bf16.mxu0 0
      %1100 = vmatmul.mubr.bf16.gmra.mrb[0].mxu0 %v977
      %v1101 = vpop.f32.mrb[0].mxu0
      %v1102 = vadd.f32 %v810, %v1101
      %v1103 = vpop.f32.mrb[0].mxu0
      %v1104 = vpop.f32.mrb[0].mxu0
      %v1105 = vadd.f32 %v813, %v1104
      %v1106 = vpop.f32.mrb[0].mxu0
      %1107 = vmatprep.mubr.bf16.mxu0 0
      %1108 = vmatmul.mubr.bf16.gmra.mrb[0].mxu0 %v980
      %v1109 = vpop.f32.mrb[0].mxu0
      %v1110 = vadd.f32 %v818, %v1109
      %v1111 = vpop.f32.mrb[0].mxu0
      %v1112 = vpop.f32.mrb[0].mxu0
      %v1113 = vadd.f32 %v821, %v1112
      %v1114 = vpop.f32.mrb[0].mxu0
      %1115 = vmatprep.mubr.bf16.mxu0 0
      %1116 = vmatmul.mubr.bf16.gmra.mrb[0].mxu0 %v983
      %v1117 = vpop.f32.mrb[0].mxu0
      %v1118 = vadd.f32 %v826, %v1117
      %v1119 = vpop.f32.mrb[0].mxu0
      %v1120 = vpop.f32.mrb[0].mxu0
      %v1121 = vadd.f32 %v829, %v1120
      %v1122 = vpop.f32.mrb[0].mxu0
      %1123 = vmatprep.mubr.bf16.mxu0 0
      %1124 = vmatmul.mubr.bf16.gmra.mrb[0].mxu0 %v986
      %v1125 = vpop.f32.mrb[0].mxu0
      %v1126 = vadd.f32 %v834, %v1125
      %v1127 = vpop.f32.mrb[0].mxu0
      %v1128 = vpop.f32.mrb[0].mxu0
      %v1129 = vadd.f32 %v837, %v1128
      %v1130 = vpop.f32.mrb[0].mxu0
      %1131 = vmatprep.mubr.bf16.mxu0 0
      %1132 = vmatmul.mubr.bf16.gmra.mrb[0].mxu0 %v989
      %v1133 = vpop.f32.mrb[0].mxu0
      %v1134 = vadd.f32 %v842, %v1133
      %v1135 = vpop.f32.mrb[0].mxu0
      %v1136 = vpop.f32.mrb[0].mxu0
      %v1137 = vadd.f32 %v845, %v1136
      %v1138 = vpop.f32.mrb[0].mxu0
      %1139 = vmatprep.mubr.bf16.mxu0 0
      %1140 = vmatmul.mubr.bf16.gmra.mrb[0].mxu0 %v992
      %v1141 = vpop.f32.mrb[0].mxu0
      %v1142 = vadd.f32 %v850, %v1141
      %v1143 = vpop.f32.mrb[0].mxu0
      %v1144 = vpop.f32.mrb[0].mxu0
      %v1145 = vadd.f32 %v853, %v1144
      %v1146 = vpop.f32.mrb[0].mxu0
      %1147 = vmatprep.mubr.bf16.mxu0 0
      %1148 = vmatmul.mubr.bf16.gmra.mrb[0].mxu0 %v995
      %v1149 = vpop.f32.mrb[0].mxu0
      %v1150 = vadd.f32 %v858, %v1149
      %v1151 = vpop.f32.mrb[0].mxu0
      %v1152 = vpop.f32.mrb[0].mxu0
      %v1153 = vadd.f32 %v861, %v1152
      %v1154 = vpop.f32.mrb[0].mxu0
      %1155 = vmatprep.mubr.bf16.mxu0 0
      %1156 = vmatmul.mubr.bf16.gmra.mrb[0].mxu0 %v998
      %v1157 = vpop.f32.mrb[0].mxu0
      %v1158 = vadd.f32 %v866, %v1157
      %v1159 = vpop.f32.mrb[0].mxu0
      %v1160 = vpop.f32.mrb[0].mxu0
      %v1161 = vadd.f32 %v869, %v1160
      %v1162 = vpop.f32.mrb[0].mxu0
      %1163 = vdwg.mxu0
      %v1164 = vld [vmem:[%s171] sm:$0xe]
      %v1165 = vld [vmem:[%s171 + $0xc] sm:$0xe]
      %v1166 = vld [vmem:[%s171 + $0x18] sm:$0xe]
      %v1167 = vld [vmem:[%s171 + $0x24] sm:$0xe]
      %v1168 = vld [vmem:[%s171 + $0x30] sm:$0xe]
      %v1169 = vld [vmem:[%s171 + $0x3c] sm:$0xe]
      %v1170 = vld [vmem:[%s171 + $0x48] sm:$0xe]
      %v1171 = vld [vmem:[%s171 + $0x54] sm:$0xe]
      %v1172 = vld [vmem:[%s171 + $0x60] sm:$0xe]
      %v1173 = vld [vmem:[%s171 + $0x6c] sm:$0xe]
      %v1174 = vld [vmem:[%s171 + $0x78] sm:$0xe]
      %v1175 = vld [vmem:[%s171 + $0x84] sm:$0xe]
      %v1176 = vld [vmem:[%s171 + $0x90] sm:$0xe]
      %v1177 = vld [vmem:[%s171 + $0x9c] sm:$0xe]
      %v1178 = vld [vmem:[%s171 + $0xa8] sm:$0xe]
      %v1179 = vld [vmem:[%s171 + $0xb4] sm:$0xe]
      %vm1212 = vcmask 1042432
      %vm1213 = vcmask 1046532
      %vm1214 = vmor %vm1212, %vm1213
      %v1215 = vrot.slane %v1164, 5
      %v1216 = vrot.slane %v1215, 4
      %v1217 = vrot.slane %v173, 5
      %v1218 = vsel %vm1214, %v1216, %v1217
      %v1219 = vrot.slane %v1217, 4
      %v1220 = vrot.slane %v205, 5
      %v1221 = vsel %vm1214, %v1219, %v1220
      %v1222 = vrot.slane %v1165, 5
      %v1223 = vrot.slane %v1222, 4
      %v1224 = vrot.slane %v175, 5
      %v1225 = vsel %vm1214, %v1223, %v1224
      %v1226 = vrot.slane %v1224, 4
      %v1227 = vrot.slane %v206, 5
      %v1228 = vsel %vm1214, %v1226, %v1227
      %v1229 = vrot.slane %v1166, 5
      %v1230 = vrot.slane %v1229, 4
      %v1231 = vrot.slane %v177, 5
      %v1232 = vsel %vm1214, %v1230, %v1231
      %v1233 = vrot.slane %v1231, 4
      %v1234 = vrot.slane %v207, 5
      %v1235 = vsel %vm1214, %v1233, %v1234
      %v1236 = vrot.slane %v1167, 5
      %v1237 = vrot.slane %v1236, 4
      %v1238 = vrot.slane %v179, 5
      %v1239 = vsel %vm1214, %v1237, %v1238
      %v1240 = vrot.slane %v1238, 4
      %v1241 = vrot.slane %v208, 5
      %v1242 = vsel %vm1214, %v1240, %v1241
      %v1243 = vrot.slane %v1168, 5
      %v1244 = vrot.slane %v1243, 4
      %v1245 = vrot.slane %v181, 5
      %v1246 = vsel %vm1214, %v1244, %v1245
      %v1247 = vrot.slane %v1245, 4
      %v1248 = vrot.slane %v209, 5
      %v1249 = vsel %vm1214, %v1247, %v1248
      %v1250 = vrot.slane %v1169, 5
      %v1251 = vrot.slane %v1250, 4
      %v1252 = vrot.slane %v183, 5
      %v1253 = vsel %vm1214, %v1251, %v1252
      %v1254 = vrot.slane %v1252, 4
      %v1255 = vrot.slane %v210, 5
      %v1256 = vsel %vm1214, %v1254, %v1255
      %v1257 = vrot.slane %v1170, 5
      %v1258 = vrot.slane %v1257, 4
      %v1259 = vrot.slane %v185, 5
      %v1260 = vsel %vm1214, %v1258, %v1259
      %v1261 = vrot.slane %v1259, 4
      %v1262 = vrot.slane %v211, 5
      %v1263 = vsel %vm1214, %v1261, %v1262
      %v1264 = vrot.slane %v1171, 5
      %v1265 = vrot.slane %v1264, 4
      %v1266 = vrot.slane %v187, 5
      %v1267 = vsel %vm1214, %v1265, %v1266
      %v1268 = vrot.slane %v1266, 4
      %v1269 = vrot.slane %v212, 5
      %v1270 = vsel %vm1214, %v1268, %v1269
      %v1271 = vrot.slane %v1172, 5
      %v1272 = vrot.slane %v1271, 4
      %v1273 = vrot.slane %v189, 5
      %v1274 = vsel %vm1214, %v1272, %v1273
      %v1275 = vrot.slane %v1273, 4
      %v1276 = vrot.slane %v213, 5
      %v1277 = vsel %vm1214, %v1275, %v1276
      %v1278 = vrot.slane %v1173, 5
      %v1279 = vrot.slane %v1278, 4
      %v1280 = vrot.slane %v191, 5
      %v1281 = vsel %vm1214, %v1279, %v1280
      %v1282 = vrot.slane %v1280, 4
      %v1283 = vrot.slane %v214, 5
      %v1284 = vsel %vm1214, %v1282, %v1283
      %v1285 = vrot.slane %v1174, 5
      %v1286 = vrot.slane %v1285, 4
      %v1287 = vrot.slane %v193, 5
      %v1288 = vsel %vm1214, %v1286, %v1287
      %v1289 = vrot.slane %v1287, 4
      %v1290 = vrot.slane %v215, 5
      %v1291 = vsel %vm1214, %v1289, %v1290
      %v1292 = vrot.slane %v1175, 5
      %v1293 = vrot.slane %v1292, 4
      %v1294 = vrot.slane %v195, 5
      %v1295 = vsel %vm1214, %v1293, %v1294
      %v1296 = vrot.slane %v1294, 4
      %v1297 = vrot.slane %v216, 5
      %v1298 = vsel %vm1214, %v1296, %v1297
      %v1299 = vrot.slane %v1176, 5
      %v1300 = vrot.slane %v1299, 4
      %v1301 = vrot.slane %v197, 5
      %v1302 = vsel %vm1214, %v1300, %v1301
      %v1303 = vrot.slane %v1301, 4
      %v1304 = vrot.slane %v217, 5
      %v1305 = vsel %vm1214, %v1303, %v1304
      %v1306 = vrot.slane %v1177, 5
      %v1307 = vrot.slane %v1306, 4
      %v1308 = vrot.slane %v199, 5
      %v1309 = vsel %vm1214, %v1307, %v1308
      %v1310 = vrot.slane %v1308, 4
      %v1311 = vrot.slane %v218, 5
      %v1312 = vsel %vm1214, %v1310, %v1311
      %v1313 = vrot.slane %v1178, 5
      %v1314 = vrot.slane %v1313, 4
      %v1315 = vrot.slane %v201, 5
      %v1316 = vsel %vm1214, %v1314, %v1315
      %v1317 = vrot.slane %v1315, 4
      %v1318 = vrot.slane %v219, 5
      %v1319 = vsel %vm1214, %v1317, %v1318
      %v1320 = vrot.slane %v1179, 5
      %v1321 = vrot.slane %v1320, 4
      %v1322 = vrot.slane %v203, 5
      %v1323 = vsel %vm1214, %v1321, %v1322
      %v1324 = vrot.slane %v1322, 4
      %v1325 = vrot.slane %v220, 5
      %v1326 = vsel %vm1214, %v1324, %v1325
      %s1327 = scalar_lea.vmem %s1, 4
      %v1328 = vld [vmem:[%s1327] sm:$0x3]
      %v1329 = vunpack.c.l.b16 %v1218
      %v1330 = vunpack.c.l.b16 %v1221
      %v1331 = vunpack.c.l.b16 %v1225
      %v1332 = vunpack.c.l.b16 %v1228
      %v1333 = vunpack.c.l.b16 %v1232
      %v1334 = vunpack.c.l.b16 %v1235
      %v1335 = vunpack.c.l.b16 %v1239
      %v1336 = vunpack.c.l.b16 %v1242
      %v1337 = vunpack.c.l.b16 %v1246
      %v1338 = vunpack.c.l.b16 %v1249
      %v1339 = vunpack.c.l.b16 %v1253
      %v1340 = vunpack.c.l.b16 %v1256
      %v1341 = vunpack.c.l.b16 %v1260
      %v1342 = vunpack.c.l.b16 %v1263
      %v1343 = vunpack.c.l.b16 %v1267
      %v1344 = vunpack.c.l.b16 %v1270
      %v1345 = vunpack.c.l.b16 %v1274
      %v1346 = vunpack.c.l.b16 %v1277
      %v1347 = vunpack.c.l.b16 %v1281
      %v1348 = vunpack.c.l.b16 %v1284
      %v1349 = vunpack.c.l.b16 %v1288
      %v1350 = vunpack.c.l.b16 %v1291
      %v1351 = vunpack.c.l.b16 %v1295
      %v1352 = vunpack.c.l.b16 %v1298
      %v1353 = vunpack.c.l.b16 %v1302
      %v1354 = vunpack.c.l.b16 %v1305
      %v1355 = vunpack.c.l.b16 %v1309
      %v1356 = vunpack.c.l.b16 %v1312
      %v1357 = vunpack.c.l.b16 %v1316
      %v1358 = vunpack.c.l.b16 %v1319
      %v1359 = vunpack.c.l.b16 %v1323
      %v1360 = vunpack.c.l.b16 %v1326
      %v1361 = vpack.c.b16 %v1330, %v1329
      %v1362 = vpack.c.b16 %v1332, %v1331
      %v1363 = vpack.c.b16 %v1334, %v1333
      %v1364 = vpack.c.b16 %v1336, %v1335
      %v1365 = vpack.c.b16 %v1338, %v1337
      %v1366 = vpack.c.b16 %v1340, %v1339
      %v1367 = vpack.c.b16 %v1342, %v1341
      %v1368 = vpack.c.b16 %v1344, %v1343
      %v1369 = vpack.c.b16 %v1346, %v1345
      %v1370 = vpack.c.b16 %v1348, %v1347
      %v1371 = vpack.c.b16 %v1350, %v1349
      %v1372 = vpack.c.b16 %v1352, %v1351
      %v1373 = vpack.c.b16 %v1354, %v1353
      %v1374 = vpack.c.b16 %v1356, %v1355
      %v1375 = vpack.c.b16 %v1358, %v1357
      %v1376 = vpack.c.b16 %v1360, %v1359
      %v1378 = vsel %vm658, %v1361, 0
      %v1381 = vsel %vm658, %v1362, 0
      %v1384 = vsel %vm658, %v1363, 0
      %v1387 = vsel %vm658, %v1364, 0
      %v1390 = vsel %vm658, %v1365, 0
      %v1393 = vsel %vm658, %v1366, 0
      %v1396 = vsel %vm658, %v1367, 0
      %v1399 = vsel %vm658, %v1368, 0
      %v1402 = vsel %vm658, %v1369, 0
      %v1405 = vsel %vm658, %v1370, 0
      %v1408 = vsel %vm658, %v1371, 0
      %v1411 = vsel %vm658, %v1372, 0
      %v1414 = vsel %vm658, %v1373, 0
      %v1417 = vsel %vm658, %v1374, 0
      %v1420 = vsel %vm658, %v1375, 0
      %v1423 = vsel %vm658, %v1376, 0
      %v1426 = vsel %vm707, %v1328, 0
      %1428 = vmatprep.subr.bf16.mxu0 0
      %1429 = vmatpush1.bf16.msra.mxu0 %v1426
      %1430 = vmatprep.subr.bf16.mxu0 0
      %1431 = vmatpush1.bf16.msra.mxu0 0
      %1432 = vmatprep.subr.bf16.mxu0 0
      %1433 = vmatpush1.bf16.msra.mxu0 0
      %1434 = vmatprep.subr.bf16.mxu0 0
      %1435 = vmatpush1.bf16.msra.mxu0 0
      %1436 = vmatprep.subr.bf16.mxu0 0
      %1437 = vmatpush1.bf16.msra.mxu0 0
      %1438 = vmatprep.subr.bf16.mxu0 0
      %1439 = vmatpush1.bf16.msra.mxu0 0
      %1440 = vmatprep.subr.bf16.mxu0 0
      %1441 = vmatpush1.bf16.msra.mxu0 0
      %1442 = vmatprep.subr.bf16.mxu0 0
      %1443 = vmatpush1.bf16.msra.mxu0 0
      %1444 = vmatprep.subr.bf16.mxu0 0
      %1445 = vmatpush1.bf16.msra.mxu0 0
      %1446 = vmatprep.subr.bf16.mxu0 0
      %1447 = vmatpush1.bf16.msra.mxu0 0
      %1448 = vmatprep.subr.bf16.mxu0 0
      %1449 = vmatpush1.bf16.msra.mxu0 0
      %1450 = vmatprep.subr.bf16.mxu0 0
      %1451 = vmatpush1.bf16.msra.mxu0 0
      %1452 = vmatprep.subr.bf16.mxu0 0
      %1453 = vmatpush1.bf16.msra.mxu0 0
      %1454 = vmatprep.subr.bf16.mxu0 0
      %1455 = vmatpush1.bf16.msra.mxu0 0
      %1456 = vmatprep.subr.bf16.mxu0 0
      %1457 = vmatpush1.bf16.msra.mxu0 0
      %1458 = vmatprep.subr.bf16.mxu0 0
      %1459 = vmatpush1.bf16.msra.mxu0 0
      %1460 = vmatprep.mubr.bf16.mxu0 0
      %1461 = vmatmul.mubr.bf16.gmra.mrb[0].mxu0 %v1378
      %v1462 = vpop.f32.mrb[0].mxu0
      %v1463 = vadd.f32 0.0, %v1462
      %v1464 = vpop.f32.mrb[0].mxu0
      %v1465 = vpop.f32.mrb[0].mxu0
      %v1466 = vadd.f32 0.0, %v1465
      %v1467 = vpop.f32.mrb[0].mxu0
      %1468 = vmatprep.mubr.bf16.mxu0 0
      %1469 = vmatmul.mubr.bf16.gmra.mrb[0].mxu0 %v1381
      %v1470 = vpop.f32.mrb[0].mxu0
      %v1471 = vadd.f32 0.0, %v1470
      %v1472 = vpop.f32.mrb[0].mxu0
      %v1473 = vpop.f32.mrb[0].mxu0
      %v1474 = vadd.f32 0.0, %v1473
      %v1475 = vpop.f32.mrb[0].mxu0
      %1476 = vmatprep.mubr.bf16.mxu0 0
      %1477 = vmatmul.mubr.bf16.gmra.mrb[0].mxu0 %v1384
      %v1478 = vpop.f32.mrb[0].mxu0
      %v1479 = vadd.f32 0.0, %v1478
      %v1480 = vpop.f32.mrb[0].mxu0
      %v1481 = vpop.f32.mrb[0].mxu0
      %v1482 = vadd.f32 0.0, %v1481
      %v1483 = vpop.f32.mrb[0].mxu0
      %1484 = vmatprep.mubr.bf16.mxu0 0
      %1485 = vmatmul.mubr.bf16.gmra.mrb[0].mxu0 %v1387
      %v1486 = vpop.f32.mrb[0].mxu0
      %v1487 = vadd.f32 0.0, %v1486
      %v1488 = vpop.f32.mrb[0].mxu0
      %v1489 = vpop.f32.mrb[0].mxu0
      %v1490 = vadd.f32 0.0, %v1489
      %v1491 = vpop.f32.mrb[0].mxu0
      %1492 = vmatprep.mubr.bf16.mxu0 0
      %1493 = vmatmul.mubr.bf16.gmra.mrb[0].mxu0 %v1390
      %v1494 = vpop.f32.mrb[0].mxu0
      %v1495 = vadd.f32 0.0, %v1494
      %v1496 = vpop.f32.mrb[0].mxu0
      %v1497 = vpop.f32.mrb[0].mxu0
      %v1498 = vadd.f32 0.0, %v1497
      %v1499 = vpop.f32.mrb[0].mxu0
      %1500 = vmatprep.mubr.bf16.mxu0 0
      %1501 = vmatmul.mubr.bf16.gmra.mrb[0].mxu0 %v1393
      %v1502 = vpop.f32.mrb[0].mxu0
      %v1503 = vadd.f32 0.0, %v1502
      %v1504 = vpop.f32.mrb[0].mxu0
      %v1505 = vpop.f32.mrb[0].mxu0
      %v1506 = vadd.f32 0.0, %v1505
      %v1507 = vpop.f32.mrb[0].mxu0
      %1508 = vmatprep.mubr.bf16.mxu0 0
      %1509 = vmatmul.mubr.bf16.gmra.mrb[0].mxu0 %v1396
      %v1510 = vpop.f32.mrb[0].mxu0
      %v1511 = vadd.f32 0.0, %v1510
      %v1512 = vpop.f32.mrb[0].mxu0
      %v1513 = vpop.f32.mrb[0].mxu0
      %v1514 = vadd.f32 0.0, %v1513
      %v1515 = vpop.f32.mrb[0].mxu0
      %1516 = vmatprep.mubr.bf16.mxu0 0
      %1517 = vmatmul.mubr.bf16.gmra.mrb[0].mxu0 %v1399
      %v1518 = vpop.f32.mrb[0].mxu0
      %v1519 = vadd.f32 0.0, %v1518
      %v1520 = vpop.f32.mrb[0].mxu0
      %v1521 = vpop.f32.mrb[0].mxu0
      %v1522 = vadd.f32 0.0, %v1521
      %v1523 = vpop.f32.mrb[0].mxu0
      %1524 = vmatprep.mubr.bf16.mxu0 0
      %1525 = vmatmul.mubr.bf16.gmra.mrb[0].mxu0 %v1402
      %v1526 = vpop.f32.mrb[0].mxu0
      %v1527 = vadd.f32 0.0, %v1526
      %v1528 = vpop.f32.mrb[0].mxu0
      %v1529 = vpop.f32.mrb[0].mxu0
      %v1530 = vadd.f32 0.0, %v1529
      %v1531 = vpop.f32.mrb[0].mxu0
      %1532 = vmatprep.mubr.bf16.mxu0 0
      %1533 = vmatmul.mubr.bf16.gmra.mrb[0].mxu0 %v1405
      %v1534 = vpop.f32.mrb[0].mxu0
      %v1535 = vadd.f32 0.0, %v1534
      %v1536 = vpop.f32.mrb[0].mxu0
      %v1537 = vpop.f32.mrb[0].mxu0
      %v1538 = vadd.f32 0.0, %v1537
      %v1539 = vpop.f32.mrb[0].mxu0
      %1540 = vmatprep.mubr.bf16.mxu0 0
      %1541 = vmatmul.mubr.bf16.gmra.mrb[0].mxu0 %v1408
      %v1542 = vpop.f32.mrb[0].mxu0
      %v1543 = vadd.f32 0.0, %v1542
      %v1544 = vpop.f32.mrb[0].mxu0
      %v1545 = vpop.f32.mrb[0].mxu0
      %v1546 = vadd.f32 0.0, %v1545
      %v1547 = vpop.f32.mrb[0].mxu0
      %1548 = vmatprep.mubr.bf16.mxu0 0
      %1549 = vmatmul.mubr.bf16.gmra.mrb[0].mxu0 %v1411
      %v1550 = vpop.f32.mrb[0].mxu0
      %v1551 = vadd.f32 0.0, %v1550
      %v1552 = vpop.f32.mrb[0].mxu0
      %v1553 = vpop.f32.mrb[0].mxu0
      %v1554 = vadd.f32 0.0, %v1553
      %v1555 = vpop.f32.mrb[0].mxu0
      %1556 = vmatprep.mubr.bf16.mxu0 0
      %1557 = vmatmul.mubr.bf16.gmra.mrb[0].mxu0 %v1414
      %v1558 = vpop.f32.mrb[0].mxu0
      %v1559 = vadd.f32 0.0, %v1558
      %v1560 = vpop.f32.mrb[0].mxu0
      %v1561 = vpop.f32.mrb[0].mxu0
      %v1562 = vadd.f32 0.0, %v1561
      %v1563 = vpop.f32.mrb[0].mxu0
      %1564 = vmatprep.mubr.bf16.mxu0 0
      %1565 = vmatmul.mubr.bf16.gmra.mrb[0].mxu0 %v1417
      %v1566 = vpop.f32.mrb[0].mxu0
      %v1567 = vadd.f32 0.0, %v1566
      %v1568 = vpop.f32.mrb[0].mxu0
      %v1569 = vpop.f32.mrb[0].mxu0
      %v1570 = vadd.f32 0.0, %v1569
      %v1571 = vpop.f32.mrb[0].mxu0
      %1572 = vmatprep.mubr.bf16.mxu0 0
      %1573 = vmatmul.mubr.bf16.gmra.mrb[0].mxu0 %v1420
      %v1574 = vpop.f32.mrb[0].mxu0
      %v1575 = vadd.f32 0.0, %v1574
      %v1576 = vpop.f32.mrb[0].mxu0
      %v1577 = vpop.f32.mrb[0].mxu0
      %v1578 = vadd.f32 0.0, %v1577
      %v1579 = vpop.f32.mrb[0].mxu0
      %1580 = vmatprep.mubr.bf16.mxu0 0
      %1581 = vmatmul.mubr.bf16.gmra.mrb[0].mxu0 %v1423
      %v1582 = vpop.f32.mrb[0].mxu0
      %v1583 = vadd.f32 0.0, %v1582
      %v1584 = vpop.f32.mrb[0].mxu0
      %v1585 = vpop.f32.mrb[0].mxu0
      %v1586 = vadd.f32 0.0, %v1585
      %v1587 = vpop.f32.mrb[0].mxu0
      %1588 = vdwg.mxu0
      %v1589 = vadd.f32 %v1038, %v1463
      %v1590 = vadd.f32 %v1041, %v1466
      %v1591 = vadd.f32 %v1046, %v1471
      %v1592 = vadd.f32 %v1049, %v1474
      %v1593 = vadd.f32 %v1054, %v1479
      %v1594 = vadd.f32 %v1057, %v1482
      %v1595 = vadd.f32 %v1062, %v1487
      %v1596 = vadd.f32 %v1065, %v1490
      %v1597 = vadd.f32 %v1070, %v1495
      %v1598 = vadd.f32 %v1073, %v1498
      %v1599 = vadd.f32 %v1078, %v1503
      %v1600 = vadd.f32 %v1081, %v1506
      %v1601 = vadd.f32 %v1086, %v1511
      %v1602 = vadd.f32 %v1089, %v1514
      %v1603 = vadd.f32 %v1094, %v1519
      %v1604 = vadd.f32 %v1097, %v1522
      %v1605 = vadd.f32 %v1102, %v1527
      %v1606 = vadd.f32 %v1105, %v1530
      %v1607 = vadd.f32 %v1110, %v1535
      %v1608 = vadd.f32 %v1113, %v1538
      %v1609 = vadd.f32 %v1118, %v1543
      %v1610 = vadd.f32 %v1121, %v1546
      %v1611 = vadd.f32 %v1126, %v1551
      %v1612 = vadd.f32 %v1129, %v1554
      %v1613 = vadd.f32 %v1134, %v1559
      %v1614 = vadd.f32 %v1137, %v1562
      %v1615 = vadd.f32 %v1142, %v1567
      %v1616 = vadd.f32 %v1145, %v1570
      %v1617 = vadd.f32 %v1150, %v1575
      %v1618 = vadd.f32 %v1153, %v1578
      %v1619 = vadd.f32 %v1158, %v1583
      %v1620 = vadd.f32 %v1161, %v1586
      %s1621 = sadd.s32 %s168, 1
      %s1622 = smul.u32 %s1621, 3
      %s1623 = smul.addr %s1622, 4
      %s1624 = scalar_lea.vmem %s156, %s1623
      %v1625 = vld [vmem:[%s1624] sm:$0xf]
      %v1626 = vld [vmem:[%s1624 + $0x4] sm:$0xf]
      %v1627 = vld [vmem:[%s1624 + $0xc] sm:$0xf]
      %v1628 = vld [vmem:[%s1624 + $0x10] sm:$0xf]
      %v1629 = vld [vmem:[%s1624 + $0x18] sm:$0xf]
      %v1630 = vld [vmem:[%s1624 + $0x1c] sm:$0xf]
      %v1631 = vld [vmem:[%s1624 + $0x24] sm:$0xf]
      %v1632 = vld [vmem:[%s1624 + $0x28] sm:$0xf]
      %v1633 = vld [vmem:[%s1624 + $0x30] sm:$0xf]
      %v1634 = vld [vmem:[%s1624 + $0x34] sm:$0xf]
      %v1635 = vld [vmem:[%s1624 + $0x3c] sm:$0xf]
      %v1636 = vld [vmem:[%s1624 + $0x40] sm:$0xf]
      %v1637 = vld [vmem:[%s1624 + $0x48] sm:$0xf]
      %v1638 = vld [vmem:[%s1624 + $0x4c] sm:$0xf]
      %v1639 = vld [vmem:[%s1624 + $0x54] sm:$0xf]
      %v1640 = vld [vmem:[%s1624 + $0x58] sm:$0xf]
      %v1641 = vld [vmem:[%s1624 + $0x60] sm:$0xf]
      %v1642 = vld [vmem:[%s1624 + $0x64] sm:$0xf]
      %v1643 = vld [vmem:[%s1624 + $0x6c] sm:$0xf]
      %v1644 = vld [vmem:[%s1624 + $0x70] sm:$0xf]
      %v1645 = vld [vmem:[%s1624 + $0x78] sm:$0xf]
      %v1646 = vld [vmem:[%s1624 + $0x7c] sm:$0xf]
      %v1647 = vld [vmem:[%s1624 + $0x84] sm:$0xf]
      %v1648 = vld [vmem:[%s1624 + $0x88] sm:$0xf]
      %v1649 = vld [vmem:[%s1624 + $0x90] sm:$0xf]
      %v1650 = vld [vmem:[%s1624 + $0x94] sm:$0xf]
      %v1651 = vld [vmem:[%s1624 + $0x9c] sm:$0xf]
      %v1652 = vld [vmem:[%s1624 + $0xa0] sm:$0xf]
      %v1653 = vld [vmem:[%s1624 + $0xa8] sm:$0xf]
      %v1654 = vld [vmem:[%s1624 + $0xac] sm:$0xf]
      %v1655 = vld [vmem:[%s1624 + $0xb4] sm:$0xf]
      %v1656 = vld [vmem:[%s1624 + $0xb8] sm:$0xf]
      %s1657 = scalar_lea.vmem %s1, 6
      %v1658 = vld [vmem:[%s1657] sm:$0x3]
      %v1691 = vunpack.c.l.b16 %v1625
      %v1692 = vunpack.c.l.b16 %v1626
      %v1693 = vunpack.c.l.b16 %v1627
      %v1694 = vunpack.c.l.b16 %v1628
      %v1695 = vunpack.c.l.b16 %v1629
      %v1696 = vunpack.c.l.b16 %v1630
      %v1697 = vunpack.c.l.b16 %v1631
      %v1698 = vunpack.c.l.b16 %v1632
      %v1699 = vunpack.c.l.b16 %v1633
      %v1700 = vunpack.c.l.b16 %v1634
      %v1701 = vunpack.c.l.b16 %v1635
      %v1702 = vunpack.c.l.b16 %v1636
      %v1703 = vunpack.c.l.b16 %v1637
      %v1704 = vunpack.c.l.b16 %v1638
      %v1705 = vunpack.c.l.b16 %v1639
      %v1706 = vunpack.c.l.b16 %v1640
      %v1707 = vunpack.c.l.b16 %v1641
      %v1708 = vunpack.c.l.b16 %v1642
      %v1709 = vunpack.c.l.b16 %v1643
      %v1710 = vunpack.c.l.b16 %v1644
      %v1711 = vunpack.c.l.b16 %v1645
      %v1712 = vunpack.c.l.b16 %v1646
      %v1713 = vunpack.c.l.b16 %v1647
      %v1714 = vunpack.c.l.b16 %v1648
      %v1715 = vunpack.c.l.b16 %v1649
      %v1716 = vunpack.c.l.b16 %v1650
      %v1717 = vunpack.c.l.b16 %v1651
      %v1718 = vunpack.c.l.b16 %v1652
      %v1719 = vunpack.c.l.b16 %v1653
      %v1720 = vunpack.c.l.b16 %v1654
      %v1721 = vunpack.c.l.b16 %v1655
      %v1722 = vunpack.c.l.b16 %v1656
      %v1723 = vpack.c.b16 %v1692, %v1691
      %v1724 = vpack.c.b16 %v1694, %v1693
      %v1725 = vpack.c.b16 %v1696, %v1695
      %v1726 = vpack.c.b16 %v1698, %v1697
      %v1727 = vpack.c.b16 %v1700, %v1699
      %v1728 = vpack.c.b16 %v1702, %v1701
      %v1729 = vpack.c.b16 %v1704, %v1703
      %v1730 = vpack.c.b16 %v1706, %v1705
      %v1731 = vpack.c.b16 %v1708, %v1707
      %v1732 = vpack.c.b16 %v1710, %v1709
      %v1733 = vpack.c.b16 %v1712, %v1711
      %v1734 = vpack.c.b16 %v1714, %v1713
      %v1735 = vpack.c.b16 %v1716, %v1715
      %v1736 = vpack.c.b16 %v1718, %v1717
      %v1737 = vpack.c.b16 %v1720, %v1719
      %v1738 = vpack.c.b16 %v1722, %v1721
      %v1740 = vsel %vm658, %v1723, 0
      %v1743 = vsel %vm658, %v1724, 0
      %v1746 = vsel %vm658, %v1725, 0
      %v1749 = vsel %vm658, %v1726, 0
      %v1752 = vsel %vm658, %v1727, 0
      %v1755 = vsel %vm658, %v1728, 0
      %v1758 = vsel %vm658, %v1729, 0
      %v1761 = vsel %vm658, %v1730, 0
      %v1764 = vsel %vm658, %v1731, 0
      %v1767 = vsel %vm658, %v1732, 0
      %v1770 = vsel %vm658, %v1733, 0
      %v1773 = vsel %vm658, %v1734, 0
      %v1776 = vsel %vm658, %v1735, 0
      %v1779 = vsel %vm658, %v1736, 0
      %v1782 = vsel %vm658, %v1737, 0
      %v1785 = vsel %vm658, %v1738, 0
      %v1788 = vsel %vm707, %v1658, 0
      %1790 = vmatprep.subr.bf16.mxu0 0
      %1791 = vmatpush1.bf16.msra.mxu0 %v1788
      %1792 = vmatprep.subr.bf16.mxu0 0
      %1793 = vmatpush1.bf16.msra.mxu0 0
      %1794 = vmatprep.subr.bf16.mxu0 0
      %1795 = vmatpush1.bf16.msra.mxu0 0
      %1796 = vmatprep.subr.bf16.mxu0 0
      %1797 = vmatpush1.bf16.msra.mxu0 0
      %1798 = vmatprep.subr.bf16.mxu0 0
      %1799 = vmatpush1.bf16.msra.mxu0 0
      %1800 = vmatprep.subr.bf16.mxu0 0
      %1801 = vmatpush1.bf16.msra.mxu0 0
      %1802 = vmatprep.subr.bf16.mxu0 0
      %1803 = vmatpush1.bf16.msra.mxu0 0
      %1804 = vmatprep.subr.bf16.mxu0 0
      %1805 = vmatpush1.bf16.msra.mxu0 0
      %1806 = vmatprep.subr.bf16.mxu0 0
      %1807 = vmatpush1.bf16.msra.mxu0 0
      %1808 = vmatprep.subr.bf16.mxu0 0
      %1809 = vmatpush1.bf16.msra.mxu0 0
      %1810 = vmatprep.subr.bf16.mxu0 0
      %1811 = vmatpush1.bf16.msra.mxu0 0
      %1812 = vmatprep.subr.bf16.mxu0 0
      %1813 = vmatpush1.bf16.msra.mxu0 0
      %1814 = vmatprep.subr.bf16.mxu0 0
      %1815 = vmatpush1.bf16.msra.mxu0 0
      %1816 = vmatprep.subr.bf16.mxu0 0
      %1817 = vmatpush1.bf16.msra.mxu0 0
      %1818 = vmatprep.subr.bf16.mxu0 0
      %1819 = vmatpush1.bf16.msra.mxu0 0
      %1820 = vmatprep.subr.bf16.mxu0 0
      %1821 = vmatpush1.bf16.msra.mxu0 0
      %1822 = vmatprep.mubr.bf16.mxu0 0
      %1823 = vmatmul.mubr.bf16.gmra.mrb[0].mxu0 %v1740
      %v1824 = vpop.f32.mrb[0].mxu0
      %v1825 = vadd.f32 0.0, %v1824
      %v1826 = vpop.f32.mrb[0].mxu0
      %v1827 = vpop.f32.mrb[0].mxu0
      %v1828 = vadd.f32 0.0, %v1827
      %v1829 = vpop.f32.mrb[0].mxu0
      %1830 = vmatprep.mubr.bf16.mxu0 0
      %1831 = vmatmul.mubr.bf16.gmra.mrb[0].mxu0 %v1743
      %v1832 = vpop.f32.mrb[0].mxu0
      %v1833 = vadd.f32 0.0, %v1832
      %v1834 = vpop.f32.mrb[0].mxu0
      %v1835 = vpop.f32.mrb[0].mxu0
      %v1836 = vadd.f32 0.0, %v1835
      %v1837 = vpop.f32.mrb[0].mxu0
      %1838 = vmatprep.mubr.bf16.mxu0 0
      %1839 = vmatmul.mubr.bf16.gmra.mrb[0].mxu0 %v1746
      %v1840 = vpop.f32.mrb[0].mxu0
      %v1841 = vadd.f32 0.0, %v1840
      %v1842 = vpop.f32.mrb[0].mxu0
      %v1843 = vpop.f32.mrb[0].mxu0
      %v1844 = vadd.f32 0.0, %v1843
      %v1845 = vpop.f32.mrb[0].mxu0
      %1846 = vmatprep.mubr.bf16.mxu0 0
      %1847 = vmatmul.mubr.bf16.gmra.mrb[0].mxu0 %v1749
      %v1848 = vpop.f32.mrb[0].mxu0
      %v1849 = vadd.f32 0.0, %v1848
      %v1850 = vpop.f32.mrb[0].mxu0
      %v1851 = vpop.f32.mrb[0].mxu0
      %v1852 = vadd.f32 0.0, %v1851
      %v1853 = vpop.f32.mrb[0].mxu0
      %1854 = vmatprep.mubr.bf16.mxu0 0
      %1855 = vmatmul.mubr.bf16.gmra.mrb[0].mxu0 %v1752
      %v1856 = vpop.f32.mrb[0].mxu0
      %v1857 = vadd.f32 0.0, %v1856
      %v1858 = vpop.f32.mrb[0].mxu0
      %v1859 = vpop.f32.mrb[0].mxu0
      %v1860 = vadd.f32 0.0, %v1859
      %v1861 = vpop.f32.mrb[0].mxu0
      %1862 = vmatprep.mubr.bf16.mxu0 0
      %1863 = vmatmul.mubr.bf16.gmra.mrb[0].mxu0 %v1755
      %v1864 = vpop.f32.mrb[0].mxu0
      %v1865 = vadd.f32 0.0, %v1864
      %v1866 = vpop.f32.mrb[0].mxu0
      %v1867 = vpop.f32.mrb[0].mxu0
      %v1868 = vadd.f32 0.0, %v1867
      %v1869 = vpop.f32.mrb[0].mxu0
      %1870 = vmatprep.mubr.bf16.mxu0 0
      %1871 = vmatmul.mubr.bf16.gmra.mrb[0].mxu0 %v1758
      %v1872 = vpop.f32.mrb[0].mxu0
      %v1873 = vadd.f32 0.0, %v1872
      %v1874 = vpop.f32.mrb[0].mxu0
      %v1875 = vpop.f32.mrb[0].mxu0
      %v1876 = vadd.f32 0.0, %v1875
      %v1877 = vpop.f32.mrb[0].mxu0
      %1878 = vmatprep.mubr.bf16.mxu0 0
      %1879 = vmatmul.mubr.bf16.gmra.mrb[0].mxu0 %v1761
      %v1880 = vpop.f32.mrb[0].mxu0
      %v1881 = vadd.f32 0.0, %v1880
      %v1882 = vpop.f32.mrb[0].mxu0
      %v1883 = vpop.f32.mrb[0].mxu0
      %v1884 = vadd.f32 0.0, %v1883
      %v1885 = vpop.f32.mrb[0].mxu0
      %1886 = vmatprep.mubr.bf16.mxu0 0
      %1887 = vmatmul.mubr.bf16.gmra.mrb[0].mxu0 %v1764
      %v1888 = vpop.f32.mrb[0].mxu0
      %v1889 = vadd.f32 0.0, %v1888
      %v1890 = vpop.f32.mrb[0].mxu0
      %v1891 = vpop.f32.mrb[0].mxu0
      %v1892 = vadd.f32 0.0, %v1891
      %v1893 = vpop.f32.mrb[0].mxu0
      %1894 = vmatprep.mubr.bf16.mxu0 0
      %1895 = vmatmul.mubr.bf16.gmra.mrb[0].mxu0 %v1767
      %v1896 = vpop.f32.mrb[0].mxu0
      %v1897 = vadd.f32 0.0, %v1896
      %v1898 = vpop.f32.mrb[0].mxu0
      %v1899 = vpop.f32.mrb[0].mxu0
      %v1900 = vadd.f32 0.0, %v1899
      %v1901 = vpop.f32.mrb[0].mxu0
      %1902 = vmatprep.mubr.bf16.mxu0 0
      %1903 = vmatmul.mubr.bf16.gmra.mrb[0].mxu0 %v1770
      %v1904 = vpop.f32.mrb[0].mxu0
      %v1905 = vadd.f32 0.0, %v1904
      %v1906 = vpop.f32.mrb[0].mxu0
      %v1907 = vpop.f32.mrb[0].mxu0
      %v1908 = vadd.f32 0.0, %v1907
      %v1909 = vpop.f32.mrb[0].mxu0
      %1910 = vmatprep.mubr.bf16.mxu0 0
      %1911 = vmatmul.mubr.bf16.gmra.mrb[0].mxu0 %v1773
      %v1912 = vpop.f32.mrb[0].mxu0
      %v1913 = vadd.f32 0.0, %v1912
      %v1914 = vpop.f32.mrb[0].mxu0
      %v1915 = vpop.f32.mrb[0].mxu0
      %v1916 = vadd.f32 0.0, %v1915
      %v1917 = vpop.f32.mrb[0].mxu0
      %1918 = vmatprep.mubr.bf16.mxu0 0
      %1919 = vmatmul.mubr.bf16.gmra.mrb[0].mxu0 %v1776
      %v1920 = vpop.f32.mrb[0].mxu0
      %v1921 = vadd.f32 0.0, %v1920
      %v1922 = vpop.f32.mrb[0].mxu0
      %v1923 = vpop.f32.mrb[0].mxu0
      %v1924 = vadd.f32 0.0, %v1923
      %v1925 = vpop.f32.mrb[0].mxu0
      %1926 = vmatprep.mubr.bf16.mxu0 0
      %1927 = vmatmul.mubr.bf16.gmra.mrb[0].mxu0 %v1779
      %v1928 = vpop.f32.mrb[0].mxu0
      %v1929 = vadd.f32 0.0, %v1928
      %v1930 = vpop.f32.mrb[0].mxu0
      %v1931 = vpop.f32.mrb[0].mxu0
      %v1932 = vadd.f32 0.0, %v1931
      %v1933 = vpop.f32.mrb[0].mxu0
      %1934 = vmatprep.mubr.bf16.mxu0 0
      %1935 = vmatmul.mubr.bf16.gmra.mrb[0].mxu0 %v1782
      %v1936 = vpop.f32.mrb[0].mxu0
      %v1937 = vadd.f32 0.0, %v1936
      %v1938 = vpop.f32.mrb[0].mxu0
      %v1939 = vpop.f32.mrb[0].mxu0
      %v1940 = vadd.f32 0.0, %v1939
      %v1941 = vpop.f32.mrb[0].mxu0
      %1942 = vmatprep.mubr.bf16.mxu0 0
      %1943 = vmatmul.mubr.bf16.gmra.mrb[0].mxu0 %v1785
      %v1944 = vpop.f32.mrb[0].mxu0
      %v1945 = vadd.f32 0.0, %v1944
      %v1946 = vpop.f32.mrb[0].mxu0
      %v1947 = vpop.f32.mrb[0].mxu0
      %v1948 = vadd.f32 0.0, %v1947
      %v1949 = vpop.f32.mrb[0].mxu0
      %1950 = vdwg.mxu0
      %v1951 = vadd.f32 %v1589, %v1825
      %v1952 = vadd.f32 %v1590, %v1828
      %v1953 = vadd.f32 %v1591, %v1833
      %v1954 = vadd.f32 %v1592, %v1836
      %v1955 = vadd.f32 %v1593, %v1841
      %v1956 = vadd.f32 %v1594, %v1844
      %v1957 = vadd.f32 %v1595, %v1849
      %v1958 = vadd.f32 %v1596, %v1852
      %v1959 = vadd.f32 %v1597, %v1857
      %v1960 = vadd.f32 %v1598, %v1860
      %v1961 = vadd.f32 %v1599, %v1865
      %v1962 = vadd.f32 %v1600, %v1868
      %v1963 = vadd.f32 %v1601, %v1873
      %v1964 = vadd.f32 %v1602, %v1876
      %v1965 = vadd.f32 %v1603, %v1881
      %v1966 = vadd.f32 %v1604, %v1884
      %v1967 = vadd.f32 %v1605, %v1889
      %v1968 = vadd.f32 %v1606, %v1892
      %v1969 = vadd.f32 %v1607, %v1897
      %v1970 = vadd.f32 %v1608, %v1900
      %v1971 = vadd.f32 %v1609, %v1905
      %v1972 = vadd.f32 %v1610, %v1908
      %v1973 = vadd.f32 %v1611, %v1913
      %v1974 = vadd.f32 %v1612, %v1916
      %v1975 = vadd.f32 %v1613, %v1921
      %v1976 = vadd.f32 %v1614, %v1924
      %v1977 = vadd.f32 %v1615, %v1929
      %v1978 = vadd.f32 %v1616, %v1932
      %v1979 = vadd.f32 %v1617, %v1937
      %v1980 = vadd.f32 %v1618, %v1940
      %v1981 = vadd.f32 %v1619, %v1945
      %v1982 = vadd.f32 %v1620, %v1948
      %v1983 = vld [vmem:[%s1624] sm:$0xf]
      %v1984 = vld [vmem:[%s1624 + $0x4] sm:$0xf]
      %v1985 = vld [vmem:[%s1624 + $0x8] sm:$0x1]
      %v1986 = vld [vmem:[%s1624 + $0xc] sm:$0xf]
      %v1987 = vld [vmem:[%s1624 + $0x10] sm:$0xf]
      %v1988 = vld [vmem:[%s1624 + $0x14] sm:$0x1]
      %v1989 = vld [vmem:[%s1624 + $0x18] sm:$0xf]
      %v1990 = vld [vmem:[%s1624 + $0x1c] sm:$0xf]
      %v1991 = vld [vmem:[%s1624 + $0x20] sm:$0x1]
      %v1992 = vld [vmem:[%s1624 + $0x24] sm:$0xf]
      %v1993 = vld [vmem:[%s1624 + $0x28] sm:$0xf]
      %v1994 = vld [vmem:[%s1624 + $0x2c] sm:$0x1]
      %v1995 = vld [vmem:[%s1624 + $0x30] sm:$0xf]
      %v1996 = vld [vmem:[%s1624 + $0x34] sm:$0xf]
      %v1997 = vld [vmem:[%s1624 + $0x38] sm:$0x1]
      %v1998 = vld [vmem:[%s1624 + $0x3c] sm:$0xf]
      %v1999 = vld [vmem:[%s1624 + $0x40] sm:$0xf]
      %v2000 = vld [vmem:[%s1624 + $0x44] sm:$0x1]
      %v2001 = vld [vmem:[%s1624 + $0x48] sm:$0xf]
      %v2002 = vld [vmem:[%s1624 + $0x4c] sm:$0xf]
      %v2003 = vld [vmem:[%s1624 + $0x50] sm:$0x1]
      %v2004 = vld [vmem:[%s1624 + $0x54] sm:$0xf]
      %v2005 = vld [vmem:[%s1624 + $0x58] sm:$0xf]
      %v2006 = vld [vmem:[%s1624 + $0x5c] sm:$0x1]
      %v2007 = vld [vmem:[%s1624 + $0x60] sm:$0xf]
      %v2008 = vld [vmem:[%s1624 + $0x64] sm:$0xf]
      %v2009 = vld [vmem:[%s1624 + $0x68] sm:$0x1]
      %v2010 = vld [vmem:[%s1624 + $0x6c] sm:$0xf]
      %v2011 = vld [vmem:[%s1624 + $0x70] sm:$0xf]
      %v2012 = vld [vmem:[%s1624 + $0x74] sm:$0x1]
      %v2013 = vld [vmem:[%s1624 + $0x78] sm:$0xf]
      %v2014 = vld [vmem:[%s1624 + $0x7c] sm:$0xf]
      %v2015 = vld [vmem:[%s1624 + $0x80] sm:$0x1]
      %v2016 = vld [vmem:[%s1624 + $0x84] sm:$0xf]
      %v2017 = vld [vmem:[%s1624 + $0x88] sm:$0xf]
      %v2018 = vld [vmem:[%s1624 + $0x8c] sm:$0x1]
      %v2019 = vld [vmem:[%s1624 + $0x90] sm:$0xf]
      %v2020 = vld [vmem:[%s1624 + $0x94] sm:$0xf]
      %v2021 = vld [vmem:[%s1624 + $0x98] sm:$0x1]
      %v2022 = vld [vmem:[%s1624 + $0x9c] sm:$0xf]
      %v2023 = vld [vmem:[%s1624 + $0xa0] sm:$0xf]
      %v2024 = vld [vmem:[%s1624 + $0xa4] sm:$0x1]
      %v2025 = vld [vmem:[%s1624 + $0xa8] sm:$0xf]
      %v2026 = vld [vmem:[%s1624 + $0xac] sm:$0xf]
      %v2027 = vld [vmem:[%s1624 + $0xb0] sm:$0x1]
      %v2028 = vld [vmem:[%s1624 + $0xb4] sm:$0xf]
      %v2029 = vld [vmem:[%s1624 + $0xb8] sm:$0xf]
      %v2030 = vld [vmem:[%s1624 + $0xbc] sm:$0x1]
      %v2032 = vshrl.u32 %v1983, 16
      %v2034 = vrot.slane %v2032, 4
      %v2035 = vshll.u32 %v1983, 16
      %v2037 = vrot.slane %v2035, 5
      %v2038 = vor.u32 %v2034, %v2037
      %v2039 = vrot.slane %v2038, 4
      %v2041 = vshll.u32 %v1984, 16
      %v2043 = vrot.slane %v2041, 5
      %v2044 = vsel %vm223, %v2039, %v2043
      %v2045 = vshrl.u32 %v1984, 16
      %v2047 = vrot.slane %v2045, 4
      %v2048 = vor.u32 %v2047, %v2043
      %v2049 = vrot.slane %v2048, 4
      %v2051 = vshll.u32 %v1985, 16
      %v2053 = vrot.slane %v2051, 5
      %v2054 = vsel %vm223, %v2049, %v2053
      %v2056 = vshrl.u32 %v1986, 16
      %v2058 = vrot.slane %v2056, 4
      %v2059 = vshll.u32 %v1986, 16
      %v2061 = vrot.slane %v2059, 5
      %v2062 = vor.u32 %v2058, %v2061
      %v2063 = vrot.slane %v2062, 4
      %v2065 = vshll.u32 %v1987, 16
      %v2067 = vrot.slane %v2065, 5
      %v2068 = vsel %vm223, %v2063, %v2067
      %v2069 = vshrl.u32 %v1987, 16
      %v2071 = vrot.slane %v2069, 4
      %v2072 = vor.u32 %v2071, %v2067
      %v2073 = vrot.slane %v2072, 4
      %v2075 = vshll.u32 %v1988, 16
      %v2077 = vrot.slane %v2075, 5
      %v2078 = vsel %vm223, %v2073, %v2077
      %v2080 = vshrl.u32 %v1989, 16
      %v2082 = vrot.slane %v2080, 4
      %v2083 = vshll.u32 %v1989, 16
      %v2085 = vrot.slane %v2083, 5
      %v2086 = vor.u32 %v2082, %v2085
      %v2087 = vrot.slane %v2086, 4
      %v2089 = vshll.u32 %v1990, 16
      %v2091 = vrot.slane %v2089, 5
      %v2092 = vsel %vm223, %v2087, %v2091
      %v2093 = vshrl.u32 %v1990, 16
      %v2095 = vrot.slane %v2093, 4
      %v2096 = vor.u32 %v2095, %v2091
      %v2097 = vrot.slane %v2096, 4
      %v2099 = vshll.u32 %v1991, 16
      %v2101 = vrot.slane %v2099, 5
      %v2102 = vsel %vm223, %v2097, %v2101
      %v2104 = vshrl.u32 %v1992, 16
      %v2106 = vrot.slane %v2104, 4
      %v2107 = vshll.u32 %v1992, 16
      %v2109 = vrot.slane %v2107, 5
      %v2110 = vor.u32 %v2106, %v2109
      %v2111 = vrot.slane %v2110, 4
      %v2113 = vshll.u32 %v1993, 16
      %v2115 = vrot.slane %v2113, 5
      %v2116 = vsel %vm223, %v2111, %v2115
      %v2117 = vshrl.u32 %v1993, 16
      %v2119 = vrot.slane %v2117, 4
      %v2120 = vor.u32 %v2119, %v2115
      %v2121 = vrot.slane %v2120, 4
      %v2123 = vshll.u32 %v1994, 16
      %v2125 = vrot.slane %v2123, 5
      %v2126 = vsel %vm223, %v2121, %v2125
      %v2128 = vshrl.u32 %v1995, 16
      %v2130 = vrot.slane %v2128, 4
      %v2131 = vshll.u32 %v1995, 16
      %v2133 = vrot.slane %v2131, 5
      %v2134 = vor.u32 %v2130, %v2133
      %v2135 = vrot.slane %v2134, 4
      %v2137 = vshll.u32 %v1996, 16
      %v2139 = vrot.slane %v2137, 5
      %v2140 = vsel %vm223, %v2135, %v2139
      %v2141 = vshrl.u32 %v1996, 16
      %v2143 = vrot.slane %v2141, 4
      %v2144 = vor.u32 %v2143, %v2139
      %v2145 = vrot.slane %v2144, 4
      %v2147 = vshll.u32 %v1997, 16
      %v2149 = vrot.slane %v2147, 5
      %v2150 = vsel %vm223, %v2145, %v2149
      %v2152 = vshrl.u32 %v1998, 16
      %v2154 = vrot.slane %v2152, 4
      %v2155 = vshll.u32 %v1998, 16
      %v2157 = vrot.slane %v2155, 5
      %v2158 = vor.u32 %v2154, %v2157
      %v2159 = vrot.slane %v2158, 4
      %v2161 = vshll.u32 %v1999, 16
      %v2163 = vrot.slane %v2161, 5
      %v2164 = vsel %vm223, %v2159, %v2163
      %v2165 = vshrl.u32 %v1999, 16
      %v2167 = vrot.slane %v2165, 4
      %v2168 = vor.u32 %v2167, %v2163
      %v2169 = vrot.slane %v2168, 4
      %v2171 = vshll.u32 %v2000, 16
      %v2173 = vrot.slane %v2171, 5
      %v2174 = vsel %vm223, %v2169, %v2173
      %v2176 = vshrl.u32 %v2001, 16
      %v2178 = vrot.slane %v2176, 4
      %v2179 = vshll.u32 %v2001, 16
      %v2181 = vrot.slane %v2179, 5
      %v2182 = vor.u32 %v2178, %v2181
      %v2183 = vrot.slane %v2182, 4
      %v2185 = vshll.u32 %v2002, 16
      %v2187 = vrot.slane %v2185, 5
      %v2188 = vsel %vm223, %v2183, %v2187
      %v2189 = vshrl.u32 %v2002, 16
      %v2191 = vrot.slane %v2189, 4
      %v2192 = vor.u32 %v2191, %v2187
      %v2193 = vrot.slane %v2192, 4
      %v2195 = vshll.u32 %v2003, 16
      %v2197 = vrot.slane %v2195, 5
      %v2198 = vsel %vm223, %v2193, %v2197
      %v2200 = vshrl.u32 %v2004, 16
      %v2202 = vrot.slane %v2200, 4
      %v2203 = vshll.u32 %v2004, 16
      %v2205 = vrot.slane %v2203, 5
      %v2206 = vor.u32 %v2202, %v2205
      %v2207 = vrot.slane %v2206, 4
      %v2209 = vshll.u32 %v2005, 16
      %v2211 = vrot.slane %v2209, 5
      %v2212 = vsel %vm223, %v2207, %v2211
      %v2213 = vshrl.u32 %v2005, 16
      %v2215 = vrot.slane %v2213, 4
      %v2216 = vor.u32 %v2215, %v2211
      %v2217 = vrot.slane %v2216, 4
      %v2219 = vshll.u32 %v2006, 16
      %v2221 = vrot.slane %v2219, 5
      %v2222 = vsel %vm223, %v2217, %v2221
      %v2224 = vshrl.u32 %v2007, 16
      %v2226 = vrot.slane %v2224, 4
      %v2227 = vshll.u32 %v2007, 16
      %v2229 = vrot.slane %v2227, 5
      %v2230 = vor.u32 %v2226, %v2229
      %v2231 = vrot.slane %v2230, 4
      %v2233 = vshll.u32 %v2008, 16
      %v2235 = vrot.slane %v2233, 5
      %v2236 = vsel %vm223, %v2231, %v2235
      %v2237 = vshrl.u32 %v2008, 16
      %v2239 = vrot.slane %v2237, 4
      %v2240 = vor.u32 %v2239, %v2235
      %v2241 = vrot.slane %v2240, 4
      %v2243 = vshll.u32 %v2009, 16
      %v2245 = vrot.slane %v2243, 5
      %v2246 = vsel %vm223, %v2241, %v2245
      %v2248 = vshrl.u32 %v2010, 16
      %v2250 = vrot.slane %v2248, 4
      %v2251 = vshll.u32 %v2010, 16
      %v2253 = vrot.slane %v2251, 5
      %v2254 = vor.u32 %v2250, %v2253
      %v2255 = vrot.slane %v2254, 4
      %v2257 = vshll.u32 %v2011, 16
      %v2259 = vrot.slane %v2257, 5
      %v2260 = vsel %vm223, %v2255, %v2259
      %v2261 = vshrl.u32 %v2011, 16
      %v2263 = vrot.slane %v2261, 4
      %v2264 = vor.u32 %v2263, %v2259
      %v2265 = vrot.slane %v2264, 4
      %v2267 = vshll.u32 %v2012, 16
      %v2269 = vrot.slane %v2267, 5
      %v2270 = vsel %vm223, %v2265, %v2269
      %v2272 = vshrl.u32 %v2013, 16
      %v2274 = vrot.slane %v2272, 4
      %v2275 = vshll.u32 %v2013, 16
      %v2277 = vrot.slane %v2275, 5
      %v2278 = vor.u32 %v2274, %v2277
      %v2279 = vrot.slane %v2278, 4
      %v2281 = vshll.u32 %v2014, 16
      %v2283 = vrot.slane %v2281, 5
      %v2284 = vsel %vm223, %v2279, %v2283
      %v2285 = vshrl.u32 %v2014, 16
      %v2287 = vrot.slane %v2285, 4
      %v2288 = vor.u32 %v2287, %v2283
      %v2289 = vrot.slane %v2288, 4
      %v2291 = vshll.u32 %v2015, 16
      %v2293 = vrot.slane %v2291, 5
      %v2294 = vsel %vm223, %v2289, %v2293
      %v2296 = vshrl.u32 %v2016, 16
      %v2298 = vrot.slane %v2296, 4
      %v2299 = vshll.u32 %v2016, 16
      %v2301 = vrot.slane %v2299, 5
      %v2302 = vor.u32 %v2298, %v2301
      %v2303 = vrot.slane %v2302, 4
      %v2305 = vshll.u32 %v2017, 16
      %v2307 = vrot.slane %v2305, 5
      %v2308 = vsel %vm223, %v2303, %v2307
      %v2309 = vshrl.u32 %v2017, 16
      %v2311 = vrot.slane %v2309, 4
      %v2312 = vor.u32 %v2311, %v2307
      %v2313 = vrot.slane %v2312, 4
      %v2315 = vshll.u32 %v2018, 16
      %v2317 = vrot.slane %v2315, 5
      %v2318 = vsel %vm223, %v2313, %v2317
      %v2320 = vshrl.u32 %v2019, 16
      %v2322 = vrot.slane %v2320, 4
      %v2323 = vshll.u32 %v2019, 16
      %v2325 = vrot.slane %v2323, 5
      %v2326 = vor.u32 %v2322, %v2325
      %v2327 = vrot.slane %v2326, 4
      %v2329 = vshll.u32 %v2020, 16
      %v2331 = vrot.slane %v2329, 5
      %v2332 = vsel %vm223, %v2327, %v2331
      %v2333 = vshrl.u32 %v2020, 16
      %v2335 = vrot.slane %v2333, 4
      %v2336 = vor.u32 %v2335, %v2331
      %v2337 = vrot.slane %v2336, 4
      %v2339 = vshll.u32 %v2021, 16
      %v2341 = vrot.slane %v2339, 5
      %v2342 = vsel %vm223, %v2337, %v2341
      %v2344 = vshrl.u32 %v2022, 16
      %v2346 = vrot.slane %v2344, 4
      %v2347 = vshll.u32 %v2022, 16
      %v2349 = vrot.slane %v2347, 5
      %v2350 = vor.u32 %v2346, %v2349
      %v2351 = vrot.slane %v2350, 4
      %v2353 = vshll.u32 %v2023, 16
      %v2355 = vrot.slane %v2353, 5
      %v2356 = vsel %vm223, %v2351, %v2355
      %v2357 = vshrl.u32 %v2023, 16
      %v2359 = vrot.slane %v2357, 4
      %v2360 = vor.u32 %v2359, %v2355
      %v2361 = vrot.slane %v2360, 4
      %v2363 = vshll.u32 %v2024, 16
      %v2365 = vrot.slane %v2363, 5
      %v2366 = vsel %vm223, %v2361, %v2365
      %v2368 = vshrl.u32 %v2025, 16
      %v2370 = vrot.slane %v2368, 4
      %v2371 = vshll.u32 %v2025, 16
      %v2373 = vrot.slane %v2371, 5
      %v2374 = vor.u32 %v2370, %v2373
      %v2375 = vrot.slane %v2374, 4
      %v2377 = vshll.u32 %v2026, 16
      %v2379 = vrot.slane %v2377, 5
      %v2380 = vsel %vm223, %v2375, %v2379
      %v2381 = vshrl.u32 %v2026, 16
      %v2383 = vrot.slane %v2381, 4
      %v2384 = vor.u32 %v2383, %v2379
      %v2385 = vrot.slane %v2384, 4
      %v2387 = vshll.u32 %v2027, 16
      %v2389 = vrot.slane %v2387, 5
      %v2390 = vsel %vm223, %v2385, %v2389
      %v2392 = vshrl.u32 %v2028, 16
      %v2394 = vrot.slane %v2392, 4
      %v2395 = vshll.u32 %v2028, 16
      %v2397 = vrot.slane %v2395, 5
      %v2398 = vor.u32 %v2394, %v2397
      %v2399 = vrot.slane %v2398, 4
      %v2401 = vshll.u32 %v2029, 16
      %v2403 = vrot.slane %v2401, 5
      %v2404 = vsel %vm223, %v2399, %v2403
      %v2405 = vshrl.u32 %v2029, 16
      %v2407 = vrot.slane %v2405, 4
      %v2408 = vor.u32 %v2407, %v2403
      %v2409 = vrot.slane %v2408, 4
      %v2411 = vshll.u32 %v2030, 16
      %v2413 = vrot.slane %v2411, 5
      %v2414 = vsel %vm223, %v2409, %v2413
      %s2415 = scalar_lea.vmem %s1, 8
      %v2416 = vld [vmem:[%s2415] sm:$0x3]
      %v2417 = vunpack.c.l.b16 %v2044
      %v2418 = vunpack.c.l.b16 %v2054
      %v2419 = vunpack.c.l.b16 %v2068
      %v2420 = vunpack.c.l.b16 %v2078
      %v2421 = vunpack.c.l.b16 %v2092
      %v2422 = vunpack.c.l.b16 %v2102
      %v2423 = vunpack.c.l.b16 %v2116
      %v2424 = vunpack.c.l.b16 %v2126
      %v2425 = vunpack.c.l.b16 %v2140
      %v2426 = vunpack.c.l.b16 %v2150
      %v2427 = vunpack.c.l.b16 %v2164
      %v2428 = vunpack.c.l.b16 %v2174
      %v2429 = vunpack.c.l.b16 %v2188
      %v2430 = vunpack.c.l.b16 %v2198
      %v2431 = vunpack.c.l.b16 %v2212
      %v2432 = vunpack.c.l.b16 %v2222
      %v2433 = vunpack.c.l.b16 %v2236
      %v2434 = vunpack.c.l.b16 %v2246
      %v2435 = vunpack.c.l.b16 %v2260
      %v2436 = vunpack.c.l.b16 %v2270
      %v2437 = vunpack.c.l.b16 %v2284
      %v2438 = vunpack.c.l.b16 %v2294
      %v2439 = vunpack.c.l.b16 %v2308
      %v2440 = vunpack.c.l.b16 %v2318
      %v2441 = vunpack.c.l.b16 %v2332
      %v2442 = vunpack.c.l.b16 %v2342
      %v2443 = vunpack.c.l.b16 %v2356
      %v2444 = vunpack.c.l.b16 %v2366
      %v2445 = vunpack.c.l.b16 %v2380
      %v2446 = vunpack.c.l.b16 %v2390
      %v2447 = vunpack.c.l.b16 %v2404
      %v2448 = vunpack.c.l.b16 %v2414
      %v2449 = vpack.c.b16 %v2418, %v2417
      %v2450 = vpack.c.b16 %v2420, %v2419
      %v2451 = vpack.c.b16 %v2422, %v2421
      %v2452 = vpack.c.b16 %v2424, %v2423
      %v2453 = vpack.c.b16 %v2426, %v2425
      %v2454 = vpack.c.b16 %v2428, %v2427
      %v2455 = vpack.c.b16 %v2430, %v2429
      %v2456 = vpack.c.b16 %v2432, %v2431
      %v2457 = vpack.c.b16 %v2434, %v2433
      %v2458 = vpack.c.b16 %v2436, %v2435
      %v2459 = vpack.c.b16 %v2438, %v2437
      %v2460 = vpack.c.b16 %v2440, %v2439
      %v2461 = vpack.c.b16 %v2442, %v2441
      %v2462 = vpack.c.b16 %v2444, %v2443
      %v2463 = vpack.c.b16 %v2446, %v2445
      %v2464 = vpack.c.b16 %v2448, %v2447
      %v2466 = vsel %vm658, %v2449, 0
      %v2469 = vsel %vm658, %v2450, 0
      %v2472 = vsel %vm658, %v2451, 0
      %v2475 = vsel %vm658, %v2452, 0
      %v2478 = vsel %vm658, %v2453, 0
      %v2481 = vsel %vm658, %v2454, 0
      %v2484 = vsel %vm658, %v2455, 0
      %v2487 = vsel %vm658, %v2456, 0
      %v2490 = vsel %vm658, %v2457, 0
      %v2493 = vsel %vm658, %v2458, 0
      %v2496 = vsel %vm658, %v2459, 0
      %v2499 = vsel %vm658, %v2460, 0
      %v2502 = vsel %vm658, %v2461, 0
      %v2505 = vsel %vm658, %v2462, 0
      %v2508 = vsel %vm658, %v2463, 0
      %v2511 = vsel %vm658, %v2464, 0
      %v2514 = vsel %vm707, %v2416, 0
      %2516 = vmatprep.subr.bf16.mxu0 0
      %2517 = vmatpush1.bf16.msra.mxu0 %v2514
      %2518 = vmatprep.subr.bf16.mxu0 0
      %2519 = vmatpush1.bf16.msra.mxu0 0
      %2520 = vmatprep.subr.bf16.mxu0 0
      %2521 = vmatpush1.bf16.msra.mxu0 0
      %2522 = vmatprep.subr.bf16.mxu0 0
      %2523 = vmatpush1.bf16.msra.mxu0 0
      %2524 = vmatprep.subr.bf16.mxu0 0
      %2525 = vmatpush1.bf16.msra.mxu0 0
      %2526 = vmatprep.subr.bf16.mxu0 0
      %2527 = vmatpush1.bf16.msra.mxu0 0
      %2528 = vmatprep.subr.bf16.mxu0 0
      %2529 = vmatpush1.bf16.msra.mxu0 0
      %2530 = vmatprep.subr.bf16.mxu0 0
      %2531 = vmatpush1.bf16.msra.mxu0 0
      %2532 = vmatprep.subr.bf16.mxu0 0
      %2533 = vmatpush1.bf16.msra.mxu0 0
      %2534 = vmatprep.subr.bf16.mxu0 0
      %2535 = vmatpush1.bf16.msra.mxu0 0
      %2536 = vmatprep.subr.bf16.mxu0 0
      %2537 = vmatpush1.bf16.msra.mxu0 0
      %2538 = vmatprep.subr.bf16.mxu0 0
      %2539 = vmatpush1.bf16.msra.mxu0 0
      %2540 = vmatprep.subr.bf16.mxu0 0
      %2541 = vmatpush1.bf16.msra.mxu0 0
      %2542 = vmatprep.subr.bf16.mxu0 0
      %2543 = vmatpush1.bf16.msra.mxu0 0
      %2544 = vmatprep.subr.bf16.mxu0 0
      %2545 = vmatpush1.bf16.msra.mxu0 0
      %2546 = vmatprep.subr.bf16.mxu0 0
      %2547 = vmatpush1.bf16.msra.mxu0 0
      %2548 = vmatprep.mubr.bf16.mxu0 0
      %2549 = vmatmul.mubr.bf16.gmra.mrb[0].mxu0 %v2466
      %v2550 = vpop.f32.mrb[0].mxu0
      %v2551 = vadd.f32 0.0, %v2550
      %v2552 = vpop.f32.mrb[0].mxu0
      %v2553 = vpop.f32.mrb[0].mxu0
      %v2554 = vadd.f32 0.0, %v2553
      %v2555 = vpop.f32.mrb[0].mxu0
      %2556 = vmatprep.mubr.bf16.mxu0 0
      %2557 = vmatmul.mubr.bf16.gmra.mrb[0].mxu0 %v2469
      %v2558 = vpop.f32.mrb[0].mxu0
      %v2559 = vadd.f32 0.0, %v2558
      %v2560 = vpop.f32.mrb[0].mxu0
      %v2561 = vpop.f32.mrb[0].mxu0
      %v2562 = vadd.f32 0.0, %v2561
      %v2563 = vpop.f32.mrb[0].mxu0
      %2564 = vmatprep.mubr.bf16.mxu0 0
      %2565 = vmatmul.mubr.bf16.gmra.mrb[0].mxu0 %v2472
      %v2566 = vpop.f32.mrb[0].mxu0
      %v2567 = vadd.f32 0.0, %v2566
      %v2568 = vpop.f32.mrb[0].mxu0
      %v2569 = vpop.f32.mrb[0].mxu0
      %v2570 = vadd.f32 0.0, %v2569
      %v2571 = vpop.f32.mrb[0].mxu0
      %2572 = vmatprep.mubr.bf16.mxu0 0
      %2573 = vmatmul.mubr.bf16.gmra.mrb[0].mxu0 %v2475
      %v2574 = vpop.f32.mrb[0].mxu0
      %v2575 = vadd.f32 0.0, %v2574
      %v2576 = vpop.f32.mrb[0].mxu0
      %v2577 = vpop.f32.mrb[0].mxu0
      %v2578 = vadd.f32 0.0, %v2577
      %v2579 = vpop.f32.mrb[0].mxu0
      %2580 = vmatprep.mubr.bf16.mxu0 0
      %2581 = vmatmul.mubr.bf16.gmra.mrb[0].mxu0 %v2478
      %v2582 = vpop.f32.mrb[0].mxu0
      %v2583 = vadd.f32 0.0, %v2582
      %v2584 = vpop.f32.mrb[0].mxu0
      %v2585 = vpop.f32.mrb[0].mxu0
      %v2586 = vadd.f32 0.0, %v2585
      %v2587 = vpop.f32.mrb[0].mxu0
      %2588 = vmatprep.mubr.bf16.mxu0 0
      %2589 = vmatmul.mubr.bf16.gmra.mrb[0].mxu0 %v2481
      %v2590 = vpop.f32.mrb[0].mxu0
      %v2591 = vadd.f32 0.0, %v2590
      %v2592 = vpop.f32.mrb[0].mxu0
      %v2593 = vpop.f32.mrb[0].mxu0
      %v2594 = vadd.f32 0.0, %v2593
      %v2595 = vpop.f32.mrb[0].mxu0
      %2596 = vmatprep.mubr.bf16.mxu0 0
      %2597 = vmatmul.mubr.bf16.gmra.mrb[0].mxu0 %v2484
      %v2598 = vpop.f32.mrb[0].mxu0
      %v2599 = vadd.f32 0.0, %v2598
      %v2600 = vpop.f32.mrb[0].mxu0
      %v2601 = vpop.f32.mrb[0].mxu0
      %v2602 = vadd.f32 0.0, %v2601
      %v2603 = vpop.f32.mrb[0].mxu0
      %2604 = vmatprep.mubr.bf16.mxu0 0
      %2605 = vmatmul.mubr.bf16.gmra.mrb[0].mxu0 %v2487
      %v2606 = vpop.f32.mrb[0].mxu0
      %v2607 = vadd.f32 0.0, %v2606
      %v2608 = vpop.f32.mrb[0].mxu0
      %v2609 = vpop.f32.mrb[0].mxu0
      %v2610 = vadd.f32 0.0, %v2609
      %v2611 = vpop.f32.mrb[0].mxu0
      %2612 = vmatprep.mubr.bf16.mxu0 0
      %2613 = vmatmul.mubr.bf16.gmra.mrb[0].mxu0 %v2490
      %v2614 = vpop.f32.mrb[0].mxu0
      %v2615 = vadd.f32 0.0, %v2614
      %v2616 = vpop.f32.mrb[0].mxu0
      %v2617 = vpop.f32.mrb[0].mxu0
      %v2618 = vadd.f32 0.0, %v2617
      %v2619 = vpop.f32.mrb[0].mxu0
      %2620 = vmatprep.mubr.bf16.mxu0 0
      %2621 = vmatmul.mubr.bf16.gmra.mrb[0].mxu0 %v2493
      %v2622 = vpop.f32.mrb[0].mxu0
      %v2623 = vadd.f32 0.0, %v2622
      %v2624 = vpop.f32.mrb[0].mxu0
      %v2625 = vpop.f32.mrb[0].mxu0
      %v2626 = vadd.f32 0.0, %v2625
      %v2627 = vpop.f32.mrb[0].mxu0
      %2628 = vmatprep.mubr.bf16.mxu0 0
      %2629 = vmatmul.mubr.bf16.gmra.mrb[0].mxu0 %v2496
      %v2630 = vpop.f32.mrb[0].mxu0
      %v2631 = vadd.f32 0.0, %v2630
      %v2632 = vpop.f32.mrb[0].mxu0
      %v2633 = vpop.f32.mrb[0].mxu0
      %v2634 = vadd.f32 0.0, %v2633
      %v2635 = vpop.f32.mrb[0].mxu0
      %2636 = vmatprep.mubr.bf16.mxu0 0
      %2637 = vmatmul.mubr.bf16.gmra.mrb[0].mxu0 %v2499
      %v2638 = vpop.f32.mrb[0].mxu0
      %v2639 = vadd.f32 0.0, %v2638
      %v2640 = vpop.f32.mrb[0].mxu0
      %v2641 = vpop.f32.mrb[0].mxu0
      %v2642 = vadd.f32 0.0, %v2641
      %v2643 = vpop.f32.mrb[0].mxu0
      %2644 = vmatprep.mubr.bf16.mxu0 0
      %2645 = vmatmul.mubr.bf16.gmra.mrb[0].mxu0 %v2502
      %v2646 = vpop.f32.mrb[0].mxu0
      %v2647 = vadd.f32 0.0, %v2646
      %v2648 = vpop.f32.mrb[0].mxu0
      %v2649 = vpop.f32.mrb[0].mxu0
      %v2650 = vadd.f32 0.0, %v2649
      %v2651 = vpop.f32.mrb[0].mxu0
      %2652 = vmatprep.mubr.bf16.mxu0 0
      %2653 = vmatmul.mubr.bf16.gmra.mrb[0].mxu0 %v2505
      %v2654 = vpop.f32.mrb[0].mxu0
      %v2655 = vadd.f32 0.0, %v2654
      %v2656 = vpop.f32.mrb[0].mxu0
      %v2657 = vpop.f32.mrb[0].mxu0
      %v2658 = vadd.f32 0.0, %v2657
      %v2659 = vpop.f32.mrb[0].mxu0
      %2660 = vmatprep.mubr.bf16.mxu0 0
      %2661 = vmatmul.mubr.bf16.gmra.mrb[0].mxu0 %v2508
      %v2662 = vpop.f32.mrb[0].mxu0
      %v2663 = vadd.f32 0.0, %v2662
      %v2664 = vpop.f32.mrb[0].mxu0
      %v2665 = vpop.f32.mrb[0].mxu0
      %v2666 = vadd.f32 0.0, %v2665
      %v2667 = vpop.f32.mrb[0].mxu0
      %2668 = vmatprep.mubr.bf16.mxu0 0
      %2669 = vmatmul.mubr.bf16.gmra.mrb[0].mxu0 %v2511
      %v2670 = vpop.f32.mrb[0].mxu0
      %v2671 = vadd.f32 0.0, %v2670
      %v2672 = vpop.f32.mrb[0].mxu0
      %v2673 = vpop.f32.mrb[0].mxu0
      %v2674 = vadd.f32 0.0, %v2673
      %v2675 = vpop.f32.mrb[0].mxu0
      %2676 = vdwg.mxu0
      %v2677 = vadd.f32 %v1951, %v2551
      %v2678 = vadd.f32 %v1952, %v2554
      %v2679 = vadd.f32 %v1953, %v2559
      %v2680 = vadd.f32 %v1954, %v2562
      %v2681 = vadd.f32 %v1955, %v2567
      %v2682 = vadd.f32 %v1956, %v2570
      %v2683 = vadd.f32 %v1957, %v2575
      %v2684 = vadd.f32 %v1958, %v2578
      %v2685 = vadd.f32 %v1959, %v2583
      %v2686 = vadd.f32 %v1960, %v2586
      %v2687 = vadd.f32 %v1961, %v2591
      %v2688 = vadd.f32 %v1962, %v2594
      %v2689 = vadd.f32 %v1963, %v2599
      %v2690 = vadd.f32 %v1964, %v2602
      %v2691 = vadd.f32 %v1965, %v2607
      %v2692 = vadd.f32 %v1966, %v2610
      %v2693 = vadd.f32 %v1967, %v2615
      %v2694 = vadd.f32 %v1968, %v2618
      %v2695 = vadd.f32 %v1969, %v2623
      %v2696 = vadd.f32 %v1970, %v2626
      %v2697 = vadd.f32 %v1971, %v2631
      %v2698 = vadd.f32 %v1972, %v2634
      %v2699 = vadd.f32 %v1973, %v2639
      %v2700 = vadd.f32 %v1974, %v2642
      %v2701 = vadd.f32 %v1975, %v2647
      %v2702 = vadd.f32 %v1976, %v2650
      %v2703 = vadd.f32 %v1977, %v2655
      %v2704 = vadd.f32 %v1978, %v2658
      %v2705 = vadd.f32 %v1979, %v2663
      %v2706 = vadd.f32 %v1980, %v2666
      %v2707 = vadd.f32 %v1981, %v2671
      %v2708 = vadd.f32 %v1982, %v2674
      %v2709 = vld [vmem:[%s1624] sm:$0xe]
      %v2710 = vld [vmem:[%s1624 + $0xc] sm:$0xe]
      %v2711 = vld [vmem:[%s1624 + $0x18] sm:$0xe]
      %v2712 = vld [vmem:[%s1624 + $0x24] sm:$0xe]
      %v2713 = vld [vmem:[%s1624 + $0x30] sm:$0xe]
      %v2714 = vld [vmem:[%s1624 + $0x3c] sm:$0xe]
      %v2715 = vld [vmem:[%s1624 + $0x48] sm:$0xe]
      %v2716 = vld [vmem:[%s1624 + $0x54] sm:$0xe]
      %v2717 = vld [vmem:[%s1624 + $0x60] sm:$0xe]
      %v2718 = vld [vmem:[%s1624 + $0x6c] sm:$0xe]
      %v2719 = vld [vmem:[%s1624 + $0x78] sm:$0xe]
      %v2720 = vld [vmem:[%s1624 + $0x84] sm:$0xe]
      %v2721 = vld [vmem:[%s1624 + $0x90] sm:$0xe]
      %v2722 = vld [vmem:[%s1624 + $0x9c] sm:$0xe]
      %v2723 = vld [vmem:[%s1624 + $0xa8] sm:$0xe]
      %v2724 = vld [vmem:[%s1624 + $0xb4] sm:$0xe]
      %v2773 = vrot.slane %v2709, 5
      %v2774 = vrot.slane %v2773, 4
      %v2775 = vrot.slane %v1984, 5
      %v2776 = vsel %vm1214, %v2774, %v2775
      %v2777 = vrot.slane %v2775, 4
      %v2778 = vrot.slane %v1985, 5
      %v2779 = vsel %vm1214, %v2777, %v2778
      %v2780 = vrot.slane %v2710, 5
      %v2781 = vrot.slane %v2780, 4
      %v2782 = vrot.slane %v1987, 5
      %v2783 = vsel %vm1214, %v2781, %v2782
      %v2784 = vrot.slane %v2782, 4
      %v2785 = vrot.slane %v1988, 5
      %v2786 = vsel %vm1214, %v2784, %v2785
      %v2787 = vrot.slane %v2711, 5
      %v2788 = vrot.slane %v2787, 4
      %v2789 = vrot.slane %v1990, 5
      %v2790 = vsel %vm1214, %v2788, %v2789
      %v2791 = vrot.slane %v2789, 4
      %v2792 = vrot.slane %v1991, 5
      %v2793 = vsel %vm1214, %v2791, %v2792
      %v2794 = vrot.slane %v2712, 5
      %v2795 = vrot.slane %v2794, 4
      %v2796 = vrot.slane %v1993, 5
      %v2797 = vsel %vm1214, %v2795, %v2796
      %v2798 = vrot.slane %v2796, 4
      %v2799 = vrot.slane %v1994, 5
      %v2800 = vsel %vm1214, %v2798, %v2799
      %v2801 = vrot.slane %v2713, 5
      %v2802 = vrot.slane %v2801, 4
      %v2803 = vrot.slane %v1996, 5
      %v2804 = vsel %vm1214, %v2802, %v2803
      %v2805 = vrot.slane %v2803, 4
      %v2806 = vrot.slane %v1997, 5
      %v2807 = vsel %vm1214, %v2805, %v2806
      %v2808 = vrot.slane %v2714, 5
      %v2809 = vrot.slane %v2808, 4
      %v2810 = vrot.slane %v1999, 5
      %v2811 = vsel %vm1214, %v2809, %v2810
      %v2812 = vrot.slane %v2810, 4
      %v2813 = vrot.slane %v2000, 5
      %v2814 = vsel %vm1214, %v2812, %v2813
      %v2815 = vrot.slane %v2715, 5
      %v2816 = vrot.slane %v2815, 4
      %v2817 = vrot.slane %v2002, 5
      %v2818 = vsel %vm1214, %v2816, %v2817
      %v2819 = vrot.slane %v2817, 4
      %v2820 = vrot.slane %v2003, 5
      %v2821 = vsel %vm1214, %v2819, %v2820
      %v2822 = vrot.slane %v2716, 5
      %v2823 = vrot.slane %v2822, 4
      %v2824 = vrot.slane %v2005, 5
      %v2825 = vsel %vm1214, %v2823, %v2824
      %v2826 = vrot.slane %v2824, 4
      %v2827 = vrot.slane %v2006, 5
      %v2828 = vsel %vm1214, %v2826, %v2827
      %v2829 = vrot.slane %v2717, 5
      %v2830 = vrot.slane %v2829, 4
      %v2831 = vrot.slane %v2008, 5
      %v2832 = vsel %vm1214, %v2830, %v2831
      %v2833 = vrot.slane %v2831, 4
      %v2834 = vrot.slane %v2009, 5
      %v2835 = vsel %vm1214, %v2833, %v2834
      %v2836 = vrot.slane %v2718, 5
      %v2837 = vrot.slane %v2836, 4
      %v2838 = vrot.slane %v2011, 5
      %v2839 = vsel %vm1214, %v2837, %v2838
      %v2840 = vrot.slane %v2838, 4
      %v2841 = vrot.slane %v2012, 5
      %v2842 = vsel %vm1214, %v2840, %v2841
      %v2843 = vrot.slane %v2719, 5
      %v2844 = vrot.slane %v2843, 4
      %v2845 = vrot.slane %v2014, 5
      %v2846 = vsel %vm1214, %v2844, %v2845
      %v2847 = vrot.slane %v2845, 4
      %v2848 = vrot.slane %v2015, 5
      %v2849 = vsel %vm1214, %v2847, %v2848
      %v2850 = vrot.slane %v2720, 5
      %v2851 = vrot.slane %v2850, 4
      %v2852 = vrot.slane %v2017, 5
      %v2853 = vsel %vm1214, %v2851, %v2852
      %v2854 = vrot.slane %v2852, 4
      %v2855 = vrot.slane %v2018, 5
      %v2856 = vsel %vm1214, %v2854, %v2855
      %v2857 = vrot.slane %v2721, 5
      %v2858 = vrot.slane %v2857, 4
      %v2859 = vrot.slane %v2020, 5
      %v2860 = vsel %vm1214, %v2858, %v2859
      %v2861 = vrot.slane %v2859, 4
      %v2862 = vrot.slane %v2021, 5
      %v2863 = vsel %vm1214, %v2861, %v2862
      %v2864 = vrot.slane %v2722, 5
      %v2865 = vrot.slane %v2864, 4
      %v2866 = vrot.slane %v2023, 5
      %v2867 = vsel %vm1214, %v2865, %v2866
      %v2868 = vrot.slane %v2866, 4
      %v2869 = vrot.slane %v2024, 5
      %v2870 = vsel %vm1214, %v2868, %v2869
      %v2871 = vrot.slane %v2723, 5
      %v2872 = vrot.slane %v2871, 4
      %v2873 = vrot.slane %v2026, 5
      %v2874 = vsel %vm1214, %v2872, %v2873
      %v2875 = vrot.slane %v2873, 4
      %v2876 = vrot.slane %v2027, 5
      %v2877 = vsel %vm1214, %v2875, %v2876
      %v2878 = vrot.slane %v2724, 5
      %v2879 = vrot.slane %v2878, 4
      %v2880 = vrot.slane %v2029, 5
      %v2881 = vsel %vm1214, %v2879, %v2880
      %v2882 = vrot.slane %v2880, 4
      %v2883 = vrot.slane %v2030, 5
      %v2884 = vsel %vm1214, %v2882, %v2883
      %s2885 = scalar_lea.vmem %s1, 10
      %v2886 = vld [vmem:[%s2885] sm:$0x3]
      %v2887 = vunpack.c.l.b16 %v2776
      %v2888 = vunpack.c.l.b16 %v2779
      %v2889 = vunpack.c.l.b16 %v2783
      %v2890 = vunpack.c.l.b16 %v2786
      %v2891 = vunpack.c.l.b16 %v2790
      %v2892 = vunpack.c.l.b16 %v2793
      %v2893 = vunpack.c.l.b16 %v2797
      %v2894 = vunpack.c.l.b16 %v2800
      %v2895 = vunpack.c.l.b16 %v2804
      %v2896 = vunpack.c.l.b16 %v2807
      %v2897 = vunpack.c.l.b16 %v2811
      %v2898 = vunpack.c.l.b16 %v2814
      %v2899 = vunpack.c.l.b16 %v2818
      %v2900 = vunpack.c.l.b16 %v2821
      %v2901 = vunpack.c.l.b16 %v2825
      %v2902 = vunpack.c.l.b16 %v2828
      %v2903 = vunpack.c.l.b16 %v2832
      %v2904 = vunpack.c.l.b16 %v2835
      %v2905 = vunpack.c.l.b16 %v2839
      %v2906 = vunpack.c.l.b16 %v2842
      %v2907 = vunpack.c.l.b16 %v2846
      %v2908 = vunpack.c.l.b16 %v2849
      %v2909 = vunpack.c.l.b16 %v2853
      %v2910 = vunpack.c.l.b16 %v2856
      %v2911 = vunpack.c.l.b16 %v2860
      %v2912 = vunpack.c.l.b16 %v2863
      %v2913 = vunpack.c.l.b16 %v2867
      %v2914 = vunpack.c.l.b16 %v2870
      %v2915 = vunpack.c.l.b16 %v2874
      %v2916 = vunpack.c.l.b16 %v2877
      %v2917 = vunpack.c.l.b16 %v2881
      %v2918 = vunpack.c.l.b16 %v2884
      %v2919 = vpack.c.b16 %v2888, %v2887
      %v2920 = vpack.c.b16 %v2890, %v2889
      %v2921 = vpack.c.b16 %v2892, %v2891
      %v2922 = vpack.c.b16 %v2894, %v2893
      %v2923 = vpack.c.b16 %v2896, %v2895
      %v2924 = vpack.c.b16 %v2898, %v2897
      %v2925 = vpack.c.b16 %v2900, %v2899
      %v2926 = vpack.c.b16 %v2902, %v2901
      %v2927 = vpack.c.b16 %v2904, %v2903
      %v2928 = vpack.c.b16 %v2906, %v2905
      %v2929 = vpack.c.b16 %v2908, %v2907
      %v2930 = vpack.c.b16 %v2910, %v2909
      %v2931 = vpack.c.b16 %v2912, %v2911
      %v2932 = vpack.c.b16 %v2914, %v2913
      %v2933 = vpack.c.b16 %v2916, %v2915
      %v2934 = vpack.c.b16 %v2918, %v2917
      %v2936 = vsel %vm658, %v2919, 0
      %v2939 = vsel %vm658, %v2920, 0
      %v2942 = vsel %vm658, %v2921, 0
      %v2945 = vsel %vm658, %v2922, 0
      %v2948 = vsel %vm658, %v2923, 0
      %v2951 = vsel %vm658, %v2924, 0
      %v2954 = vsel %vm658, %v2925, 0
      %v2957 = vsel %vm658, %v2926, 0
      %v2960 = vsel %vm658, %v2927, 0
      %v2963 = vsel %vm658, %v2928, 0
      %v2966 = vsel %vm658, %v2929, 0
      %v2969 = vsel %vm658, %v2930, 0
      %v2972 = vsel %vm658, %v2931, 0
      %v2975 = vsel %vm658, %v2932, 0
      %v2978 = vsel %vm658, %v2933, 0
      %v2981 = vsel %vm658, %v2934, 0
      %v2984 = vsel %vm707, %v2886, 0
      %2986 = vmatprep.subr.bf16.mxu0 0
      %2987 = vmatpush1.bf16.msra.mxu0 %v2984
      %2988 = vmatprep.subr.bf16.mxu0 0
      %2989 = vmatpush1.bf16.msra.mxu0 0
      %2990 = vmatprep.subr.bf16.mxu0 0
      %2991 = vmatpush1.bf16.msra.mxu0 0
      %2992 = vmatprep.subr.bf16.mxu0 0
      %2993 = vmatpush1.bf16.msra.mxu0 0
      %2994 = vmatprep.subr.bf16.mxu0 0
      %2995 = vmatpush1.bf16.msra.mxu0 0
      %2996 = vmatprep.subr.bf16.mxu0 0
      %2997 = vmatpush1.bf16.msra.mxu0 0
      %2998 = vmatprep.subr.bf16.mxu0 0
      %2999 = vmatpush1.bf16.msra.mxu0 0
      %3000 = vmatprep.subr.bf16.mxu0 0
      %3001 = vmatpush1.bf16.msra.mxu0 0
      %3002 = vmatprep.subr.bf16.mxu0 0
      %3003 = vmatpush1.bf16.msra.mxu0 0
      %3004 = vmatprep.subr.bf16.mxu0 0
      %3005 = vmatpush1.bf16.msra.mxu0 0
      %3006 = vmatprep.subr.bf16.mxu0 0
      %3007 = vmatpush1.bf16.msra.mxu0 0
      %3008 = vmatprep.subr.bf16.mxu0 0
      %3009 = vmatpush1.bf16.msra.mxu0 0
      %3010 = vmatprep.subr.bf16.mxu0 0
      %3011 = vmatpush1.bf16.msra.mxu0 0
      %3012 = vmatprep.subr.bf16.mxu0 0
      %3013 = vmatpush1.bf16.msra.mxu0 0
      %3014 = vmatprep.subr.bf16.mxu0 0
      %3015 = vmatpush1.bf16.msra.mxu0 0
      %3016 = vmatprep.subr.bf16.mxu0 0
      %3017 = vmatpush1.bf16.msra.mxu0 0
      %3018 = vmatprep.mubr.bf16.mxu0 0
      %3019 = vmatmul.mubr.bf16.gmra.mrb[0].mxu0 %v2936
      %v3020 = vpop.f32.mrb[0].mxu0
      %v3021 = vadd.f32 0.0, %v3020
      %v3022 = vpop.f32.mrb[0].mxu0
      %v3023 = vpop.f32.mrb[0].mxu0
      %v3024 = vadd.f32 0.0, %v3023
      %v3025 = vpop.f32.mrb[0].mxu0
      %3026 = vmatprep.mubr.bf16.mxu0 0
      %3027 = vmatmul.mubr.bf16.gmra.mrb[0].mxu0 %v2939
      %v3028 = vpop.f32.mrb[0].mxu0
      %v3029 = vadd.f32 0.0, %v3028
      %v3030 = vpop.f32.mrb[0].mxu0
      %v3031 = vpop.f32.mrb[0].mxu0
      %v3032 = vadd.f32 0.0, %v3031
      %v3033 = vpop.f32.mrb[0].mxu0
      %3034 = vmatprep.mubr.bf16.mxu0 0
      %3035 = vmatmul.mubr.bf16.gmra.mrb[0].mxu0 %v2942
      %v3036 = vpop.f32.mrb[0].mxu0
      %v3037 = vadd.f32 0.0, %v3036
      %v3038 = vpop.f32.mrb[0].mxu0
      %v3039 = vpop.f32.mrb[0].mxu0
      %v3040 = vadd.f32 0.0, %v3039
      %v3041 = vpop.f32.mrb[0].mxu0
      %3042 = vmatprep.mubr.bf16.mxu0 0
      %3043 = vmatmul.mubr.bf16.gmra.mrb[0].mxu0 %v2945
      %v3044 = vpop.f32.mrb[0].mxu0
      %v3045 = vadd.f32 0.0, %v3044
      %v3046 = vpop.f32.mrb[0].mxu0
      %v3047 = vpop.f32.mrb[0].mxu0
      %v3048 = vadd.f32 0.0, %v3047
      %v3049 = vpop.f32.mrb[0].mxu0
      %3050 = vmatprep.mubr.bf16.mxu0 0
      %3051 = vmatmul.mubr.bf16.gmra.mrb[0].mxu0 %v2948
      %v3052 = vpop.f32.mrb[0].mxu0
      %v3053 = vadd.f32 0.0, %v3052
      %v3054 = vpop.f32.mrb[0].mxu0
      %v3055 = vpop.f32.mrb[0].mxu0
      %v3056 = vadd.f32 0.0, %v3055
      %v3057 = vpop.f32.mrb[0].mxu0
      %3058 = vmatprep.mubr.bf16.mxu0 0
      %3059 = vmatmul.mubr.bf16.gmra.mrb[0].mxu0 %v2951
      %v3060 = vpop.f32.mrb[0].mxu0
      %v3061 = vadd.f32 0.0, %v3060
      %v3062 = vpop.f32.mrb[0].mxu0
      %v3063 = vpop.f32.mrb[0].mxu0
      %v3064 = vadd.f32 0.0, %v3063
      %v3065 = vpop.f32.mrb[0].mxu0
      %3066 = vmatprep.mubr.bf16.mxu0 0
      %3067 = vmatmul.mubr.bf16.gmra.mrb[0].mxu0 %v2954
      %v3068 = vpop.f32.mrb[0].mxu0
      %v3069 = vadd.f32 0.0, %v3068
      %v3070 = vpop.f32.mrb[0].mxu0
      %v3071 = vpop.f32.mrb[0].mxu0
      %v3072 = vadd.f32 0.0, %v3071
      %v3073 = vpop.f32.mrb[0].mxu0
      %3074 = vmatprep.mubr.bf16.mxu0 0
      %3075 = vmatmul.mubr.bf16.gmra.mrb[0].mxu0 %v2957
      %v3076 = vpop.f32.mrb[0].mxu0
      %v3077 = vadd.f32 0.0, %v3076
      %v3078 = vpop.f32.mrb[0].mxu0
      %v3079 = vpop.f32.mrb[0].mxu0
      %v3080 = vadd.f32 0.0, %v3079
      %v3081 = vpop.f32.mrb[0].mxu0
      %3082 = vmatprep.mubr.bf16.mxu0 0
      %3083 = vmatmul.mubr.bf16.gmra.mrb[0].mxu0 %v2960
      %v3084 = vpop.f32.mrb[0].mxu0
      %v3085 = vadd.f32 0.0, %v3084
      %v3086 = vpop.f32.mrb[0].mxu0
      %v3087 = vpop.f32.mrb[0].mxu0
      %v3088 = vadd.f32 0.0, %v3087
      %v3089 = vpop.f32.mrb[0].mxu0
      %3090 = vmatprep.mubr.bf16.mxu0 0
      %3091 = vmatmul.mubr.bf16.gmra.mrb[0].mxu0 %v2963
      %v3092 = vpop.f32.mrb[0].mxu0
      %v3093 = vadd.f32 0.0, %v3092
      %v3094 = vpop.f32.mrb[0].mxu0
      %v3095 = vpop.f32.mrb[0].mxu0
      %v3096 = vadd.f32 0.0, %v3095
      %v3097 = vpop.f32.mrb[0].mxu0
      %3098 = vmatprep.mubr.bf16.mxu0 0
      %3099 = vmatmul.mubr.bf16.gmra.mrb[0].mxu0 %v2966
      %v3100 = vpop.f32.mrb[0].mxu0
      %v3101 = vadd.f32 0.0, %v3100
      %v3102 = vpop.f32.mrb[0].mxu0
      %v3103 = vpop.f32.mrb[0].mxu0
      %v3104 = vadd.f32 0.0, %v3103
      %v3105 = vpop.f32.mrb[0].mxu0
      %3106 = vmatprep.mubr.bf16.mxu0 0
      %3107 = vmatmul.mubr.bf16.gmra.mrb[0].mxu0 %v2969
      %v3108 = vpop.f32.mrb[0].mxu0
      %v3109 = vadd.f32 0.0, %v3108
      %v3110 = vpop.f32.mrb[0].mxu0
      %v3111 = vpop.f32.mrb[0].mxu0
      %v3112 = vadd.f32 0.0, %v3111
      %v3113 = vpop.f32.mrb[0].mxu0
      %3114 = vmatprep.mubr.bf16.mxu0 0
      %3115 = vmatmul.mubr.bf16.gmra.mrb[0].mxu0 %v2972
      %v3116 = vpop.f32.mrb[0].mxu0
      %v3117 = vadd.f32 0.0, %v3116
      %v3118 = vpop.f32.mrb[0].mxu0
      %v3119 = vpop.f32.mrb[0].mxu0
      %v3120 = vadd.f32 0.0, %v3119
      %v3121 = vpop.f32.mrb[0].mxu0
      %3122 = vmatprep.mubr.bf16.mxu0 0
      %3123 = vmatmul.mubr.bf16.gmra.mrb[0].mxu0 %v2975
      %v3124 = vpop.f32.mrb[0].mxu0
      %v3125 = vadd.f32 0.0, %v3124
      %v3126 = vpop.f32.mrb[0].mxu0
      %v3127 = vpop.f32.mrb[0].mxu0
      %v3128 = vadd.f32 0.0, %v3127
      %v3129 = vpop.f32.mrb[0].mxu0
      %3130 = vmatprep.mubr.bf16.mxu0 0
      %3131 = vmatmul.mubr.bf16.gmra.mrb[0].mxu0 %v2978
      %v3132 = vpop.f32.mrb[0].mxu0
      %v3133 = vadd.f32 0.0, %v3132
      %v3134 = vpop.f32.mrb[0].mxu0
      %v3135 = vpop.f32.mrb[0].mxu0
      %v3136 = vadd.f32 0.0, %v3135
      %v3137 = vpop.f32.mrb[0].mxu0
      %3138 = vmatprep.mubr.bf16.mxu0 0
      %3139 = vmatmul.mubr.bf16.gmra.mrb[0].mxu0 %v2981
      %v3140 = vpop.f32.mrb[0].mxu0
      %v3141 = vadd.f32 0.0, %v3140
      %v3142 = vpop.f32.mrb[0].mxu0
      %v3143 = vpop.f32.mrb[0].mxu0
      %v3144 = vadd.f32 0.0, %v3143
      %v3145 = vpop.f32.mrb[0].mxu0
      %3146 = vdwg.mxu0
      %v3147 = vadd.f32 %v2677, %v3021
      %v3148 = vadd.f32 %v2678, %v3024
      %v3149 = vadd.f32 %v2679, %v3029
      %v3150 = vadd.f32 %v2680, %v3032
      %v3151 = vadd.f32 %v2681, %v3037
      %v3152 = vadd.f32 %v2682, %v3040
      %v3153 = vadd.f32 %v2683, %v3045
      %v3154 = vadd.f32 %v2684, %v3048
      %v3155 = vadd.f32 %v2685, %v3053
      %v3156 = vadd.f32 %v2686, %v3056
      %v3157 = vadd.f32 %v2687, %v3061
      %v3158 = vadd.f32 %v2688, %v3064
      %v3159 = vadd.f32 %v2689, %v3069
      %v3160 = vadd.f32 %v2690, %v3072
      %v3161 = vadd.f32 %v2691, %v3077
      %v3162 = vadd.f32 %v2692, %v3080
      %v3163 = vadd.f32 %v2693, %v3085
      %v3164 = vadd.f32 %v2694, %v3088
      %v3165 = vadd.f32 %v2695, %v3093
      %v3166 = vadd.f32 %v2696, %v3096
      %v3167 = vadd.f32 %v2697, %v3101
      %v3168 = vadd.f32 %v2698, %v3104
      %v3169 = vadd.f32 %v2699, %v3109
      %v3170 = vadd.f32 %v2700, %v3112
      %v3171 = vadd.f32 %v2701, %v3117
      %v3172 = vadd.f32 %v2702, %v3120
      %v3173 = vadd.f32 %v2703, %v3125
      %v3174 = vadd.f32 %v2704, %v3128
      %v3175 = vadd.f32 %v2705, %v3133
      %v3176 = vadd.f32 %v2706, %v3136
      %v3177 = vadd.f32 %v2707, %v3141
      %v3178 = vadd.f32 %v2708, %v3144
      %s3179 = sadd.s32 %s168, 2
      %s3180 = smul.u32 %s3179, 3
      %s3181 = smul.addr %s3180, 4
      %s3182 = scalar_lea.vmem %s156, %s3181
      %v3183 = vld [vmem:[%s3182] sm:$0xf]
      %v3184 = vld [vmem:[%s3182 + $0x4] sm:$0xf]
      %v3185 = vld [vmem:[%s3182 + $0xc] sm:$0xf]
      %v3186 = vld [vmem:[%s3182 + $0x10] sm:$0xf]
      %v3187 = vld [vmem:[%s3182 + $0x18] sm:$0xf]
      %v3188 = vld [vmem:[%s3182 + $0x1c] sm:$0xf]
      %v3189 = vld [vmem:[%s3182 + $0x24] sm:$0xf]
      %v3190 = vld [vmem:[%s3182 + $0x28] sm:$0xf]
      %v3191 = vld [vmem:[%s3182 + $0x30] sm:$0xf]
      %v3192 = vld [vmem:[%s3182 + $0x34] sm:$0xf]
      %v3193 = vld [vmem:[%s3182 + $0x3c] sm:$0xf]
      %v3194 = vld [vmem:[%s3182 + $0x40] sm:$0xf]
      %v3195 = vld [vmem:[%s3182 + $0x48] sm:$0xf]
      %v3196 = vld [vmem:[%s3182 + $0x4c] sm:$0xf]
      %v3197 = vld [vmem:[%s3182 + $0x54] sm:$0xf]
      %v3198 = vld [vmem:[%s3182 + $0x58] sm:$0xf]
      %v3199 = vld [vmem:[%s3182 + $0x60] sm:$0xf]
      %v3200 = vld [vmem:[%s3182 + $0x64] sm:$0xf]
      %v3201 = vld [vmem:[%s3182 + $0x6c] sm:$0xf]
      %v3202 = vld [vmem:[%s3182 + $0x70] sm:$0xf]
      %v3203 = vld [vmem:[%s3182 + $0x78] sm:$0xf]
      %v3204 = vld [vmem:[%s3182 + $0x7c] sm:$0xf]
      %v3205 = vld [vmem:[%s3182 + $0x84] sm:$0xf]
      %v3206 = vld [vmem:[%s3182 + $0x88] sm:$0xf]
      %v3207 = vld [vmem:[%s3182 + $0x90] sm:$0xf]
      %v3208 = vld [vmem:[%s3182 + $0x94] sm:$0xf]
      %v3209 = vld [vmem:[%s3182 + $0x9c] sm:$0xf]
      %v3210 = vld [vmem:[%s3182 + $0xa0] sm:$0xf]
      %v3211 = vld [vmem:[%s3182 + $0xa8] sm:$0xf]
      %v3212 = vld [vmem:[%s3182 + $0xac] sm:$0xf]
      %v3213 = vld [vmem:[%s3182 + $0xb4] sm:$0xf]
      %v3214 = vld [vmem:[%s3182 + $0xb8] sm:$0xf]
      %s3215 = scalar_lea.vmem %s1, 12
      %v3216 = vld [vmem:[%s3215] sm:$0x3]
      %v3249 = vunpack.c.l.b16 %v3183
      %v3250 = vunpack.c.l.b16 %v3184
      %v3251 = vunpack.c.l.b16 %v3185
      %v3252 = vunpack.c.l.b16 %v3186
      %v3253 = vunpack.c.l.b16 %v3187
      %v3254 = vunpack.c.l.b16 %v3188
      %v3255 = vunpack.c.l.b16 %v3189
      %v3256 = vunpack.c.l.b16 %v3190
      %v3257 = vunpack.c.l.b16 %v3191
      %v3258 = vunpack.c.l.b16 %v3192
      %v3259 = vunpack.c.l.b16 %v3193
      %v3260 = vunpack.c.l.b16 %v3194
      %v3261 = vunpack.c.l.b16 %v3195
      %v3262 = vunpack.c.l.b16 %v3196
      %v3263 = vunpack.c.l.b16 %v3197
      %v3264 = vunpack.c.l.b16 %v3198
      %v3265 = vunpack.c.l.b16 %v3199
      %v3266 = vunpack.c.l.b16 %v3200
      %v3267 = vunpack.c.l.b16 %v3201
      %v3268 = vunpack.c.l.b16 %v3202
      %v3269 = vunpack.c.l.b16 %v3203
      %v3270 = vunpack.c.l.b16 %v3204
      %v3271 = vunpack.c.l.b16 %v3205
      %v3272 = vunpack.c.l.b16 %v3206
      %v3273 = vunpack.c.l.b16 %v3207
      %v3274 = vunpack.c.l.b16 %v3208
      %v3275 = vunpack.c.l.b16 %v3209
      %v3276 = vunpack.c.l.b16 %v3210
      %v3277 = vunpack.c.l.b16 %v3211
      %v3278 = vunpack.c.l.b16 %v3212
      %v3279 = vunpack.c.l.b16 %v3213
      %v3280 = vunpack.c.l.b16 %v3214
      %v3281 = vpack.c.b16 %v3250, %v3249
      %v3282 = vpack.c.b16 %v3252, %v3251
      %v3283 = vpack.c.b16 %v3254, %v3253
      %v3284 = vpack.c.b16 %v3256, %v3255
      %v3285 = vpack.c.b16 %v3258, %v3257
      %v3286 = vpack.c.b16 %v3260, %v3259
      %v3287 = vpack.c.b16 %v3262, %v3261
      %v3288 = vpack.c.b16 %v3264, %v3263
      %v3289 = vpack.c.b16 %v3266, %v3265
      %v3290 = vpack.c.b16 %v3268, %v3267
      %v3291 = vpack.c.b16 %v3270, %v3269
      %v3292 = vpack.c.b16 %v3272, %v3271
      %v3293 = vpack.c.b16 %v3274, %v3273
      %v3294 = vpack.c.b16 %v3276, %v3275
      %v3295 = vpack.c.b16 %v3278, %v3277
      %v3296 = vpack.c.b16 %v3280, %v3279
      %v3298 = vsel %vm658, %v3281, 0
      %v3301 = vsel %vm658, %v3282, 0
      %v3304 = vsel %vm658, %v3283, 0
      %v3307 = vsel %vm658, %v3284, 0
      %v3310 = vsel %vm658, %v3285, 0
      %v3313 = vsel %vm658, %v3286, 0
      %v3316 = vsel %vm658, %v3287, 0
      %v3319 = vsel %vm658, %v3288, 0
      %v3322 = vsel %vm658, %v3289, 0
      %v3325 = vsel %vm658, %v3290, 0
      %v3328 = vsel %vm658, %v3291, 0
      %v3331 = vsel %vm658, %v3292, 0
      %v3334 = vsel %vm658, %v3293, 0
      %v3337 = vsel %vm658, %v3294, 0
      %v3340 = vsel %vm658, %v3295, 0
      %v3343 = vsel %vm658, %v3296, 0
      %v3346 = vsel %vm707, %v3216, 0
      %3348 = vmatprep.subr.bf16.mxu0 0
      %3349 = vmatpush1.bf16.msra.mxu0 %v3346
      %3350 = vmatprep.subr.bf16.mxu0 0
      %3351 = vmatpush1.bf16.msra.mxu0 0
      %3352 = vmatprep.subr.bf16.mxu0 0
      %3353 = vmatpush1.bf16.msra.mxu0 0
      %3354 = vmatprep.subr.bf16.mxu0 0
      %3355 = vmatpush1.bf16.msra.mxu0 0
      %3356 = vmatprep.subr.bf16.mxu0 0
      %3357 = vmatpush1.bf16.msra.mxu0 0
      %3358 = vmatprep.subr.bf16.mxu0 0
      %3359 = vmatpush1.bf16.msra.mxu0 0
      %3360 = vmatprep.subr.bf16.mxu0 0
      %3361 = vmatpush1.bf16.msra.mxu0 0
      %3362 = vmatprep.subr.bf16.mxu0 0
      %3363 = vmatpush1.bf16.msra.mxu0 0
      %3364 = vmatprep.subr.bf16.mxu0 0
      %3365 = vmatpush1.bf16.msra.mxu0 0
      %3366 = vmatprep.subr.bf16.mxu0 0
      %3367 = vmatpush1.bf16.msra.mxu0 0
      %3368 = vmatprep.subr.bf16.mxu0 0
      %3369 = vmatpush1.bf16.msra.mxu0 0
      %3370 = vmatprep.subr.bf16.mxu0 0
      %3371 = vmatpush1.bf16.msra.mxu0 0
      %3372 = vmatprep.subr.bf16.mxu0 0
      %3373 = vmatpush1.bf16.msra.mxu0 0
      %3374 = vmatprep.subr.bf16.mxu0 0
      %3375 = vmatpush1.bf16.msra.mxu0 0
      %3376 = vmatprep.subr.bf16.mxu0 0
      %3377 = vmatpush1.bf16.msra.mxu0 0
      %3378 = vmatprep.subr.bf16.mxu0 0
      %3379 = vmatpush1.bf16.msra.mxu0 0
      %3380 = vmatprep.mubr.bf16.mxu0 0
      %3381 = vmatmul.mubr.bf16.gmra.mrb[0].mxu0 %v3298
      %v3382 = vpop.f32.mrb[0].mxu0
      %v3383 = vadd.f32 0.0, %v3382
      %v3384 = vpop.f32.mrb[0].mxu0
      %v3385 = vpop.f32.mrb[0].mxu0
      %v3386 = vadd.f32 0.0, %v3385
      %v3387 = vpop.f32.mrb[0].mxu0
      %3388 = vmatprep.mubr.bf16.mxu0 0
      %3389 = vmatmul.mubr.bf16.gmra.mrb[0].mxu0 %v3301
      %v3390 = vpop.f32.mrb[0].mxu0
      %v3391 = vadd.f32 0.0, %v3390
      %v3392 = vpop.f32.mrb[0].mxu0
      %v3393 = vpop.f32.mrb[0].mxu0
      %v3394 = vadd.f32 0.0, %v3393
      %v3395 = vpop.f32.mrb[0].mxu0
      %3396 = vmatprep.mubr.bf16.mxu0 0
      %3397 = vmatmul.mubr.bf16.gmra.mrb[0].mxu0 %v3304
      %v3398 = vpop.f32.mrb[0].mxu0
      %v3399 = vadd.f32 0.0, %v3398
      %v3400 = vpop.f32.mrb[0].mxu0
      %v3401 = vpop.f32.mrb[0].mxu0
      %v3402 = vadd.f32 0.0, %v3401
      %v3403 = vpop.f32.mrb[0].mxu0
      %3404 = vmatprep.mubr.bf16.mxu0 0
      %3405 = vmatmul.mubr.bf16.gmra.mrb[0].mxu0 %v3307
      %v3406 = vpop.f32.mrb[0].mxu0
      %v3407 = vadd.f32 0.0, %v3406
      %v3408 = vpop.f32.mrb[0].mxu0
      %v3409 = vpop.f32.mrb[0].mxu0
      %v3410 = vadd.f32 0.0, %v3409
      %v3411 = vpop.f32.mrb[0].mxu0
      %3412 = vmatprep.mubr.bf16.mxu0 0
      %3413 = vmatmul.mubr.bf16.gmra.mrb[0].mxu0 %v3310
      %v3414 = vpop.f32.mrb[0].mxu0
      %v3415 = vadd.f32 0.0, %v3414
      %v3416 = vpop.f32.mrb[0].mxu0
      %v3417 = vpop.f32.mrb[0].mxu0
      %v3418 = vadd.f32 0.0, %v3417
      %v3419 = vpop.f32.mrb[0].mxu0
      %3420 = vmatprep.mubr.bf16.mxu0 0
      %3421 = vmatmul.mubr.bf16.gmra.mrb[0].mxu0 %v3313
      %v3422 = vpop.f32.mrb[0].mxu0
      %v3423 = vadd.f32 0.0, %v3422
      %v3424 = vpop.f32.mrb[0].mxu0
      %v3425 = vpop.f32.mrb[0].mxu0
      %v3426 = vadd.f32 0.0, %v3425
      %v3427 = vpop.f32.mrb[0].mxu0
      %3428 = vmatprep.mubr.bf16.mxu0 0
      %3429 = vmatmul.mubr.bf16.gmra.mrb[0].mxu0 %v3316
      %v3430 = vpop.f32.mrb[0].mxu0
      %v3431 = vadd.f32 0.0, %v3430
      %v3432 = vpop.f32.mrb[0].mxu0
      %v3433 = vpop.f32.mrb[0].mxu0
      %v3434 = vadd.f32 0.0, %v3433
      %v3435 = vpop.f32.mrb[0].mxu0
      %3436 = vmatprep.mubr.bf16.mxu0 0
      %3437 = vmatmul.mubr.bf16.gmra.mrb[0].mxu0 %v3319
      %v3438 = vpop.f32.mrb[0].mxu0
      %v3439 = vadd.f32 0.0, %v3438
      %v3440 = vpop.f32.mrb[0].mxu0
      %v3441 = vpop.f32.mrb[0].mxu0
      %v3442 = vadd.f32 0.0, %v3441
      %v3443 = vpop.f32.mrb[0].mxu0
      %3444 = vmatprep.mubr.bf16.mxu0 0
      %3445 = vmatmul.mubr.bf16.gmra.mrb[0].mxu0 %v3322
      %v3446 = vpop.f32.mrb[0].mxu0
      %v3447 = vadd.f32 0.0, %v3446
      %v3448 = vpop.f32.mrb[0].mxu0
      %v3449 = vpop.f32.mrb[0].mxu0
      %v3450 = vadd.f32 0.0, %v3449
      %v3451 = vpop.f32.mrb[0].mxu0
      %3452 = vmatprep.mubr.bf16.mxu0 0
      %3453 = vmatmul.mubr.bf16.gmra.mrb[0].mxu0 %v3325
      %v3454 = vpop.f32.mrb[0].mxu0
      %v3455 = vadd.f32 0.0, %v3454
      %v3456 = vpop.f32.mrb[0].mxu0
      %v3457 = vpop.f32.mrb[0].mxu0
      %v3458 = vadd.f32 0.0, %v3457
      %v3459 = vpop.f32.mrb[0].mxu0
      %3460 = vmatprep.mubr.bf16.mxu0 0
      %3461 = vmatmul.mubr.bf16.gmra.mrb[0].mxu0 %v3328
      %v3462 = vpop.f32.mrb[0].mxu0
      %v3463 = vadd.f32 0.0, %v3462
      %v3464 = vpop.f32.mrb[0].mxu0
      %v3465 = vpop.f32.mrb[0].mxu0
      %v3466 = vadd.f32 0.0, %v3465
      %v3467 = vpop.f32.mrb[0].mxu0
      %3468 = vmatprep.mubr.bf16.mxu0 0
      %3469 = vmatmul.mubr.bf16.gmra.mrb[0].mxu0 %v3331
      %v3470 = vpop.f32.mrb[0].mxu0
      %v3471 = vadd.f32 0.0, %v3470
      %v3472 = vpop.f32.mrb[0].mxu0
      %v3473 = vpop.f32.mrb[0].mxu0
      %v3474 = vadd.f32 0.0, %v3473
      %v3475 = vpop.f32.mrb[0].mxu0
      %3476 = vmatprep.mubr.bf16.mxu0 0
      %3477 = vmatmul.mubr.bf16.gmra.mrb[0].mxu0 %v3334
      %v3478 = vpop.f32.mrb[0].mxu0
      %v3479 = vadd.f32 0.0, %v3478
      %v3480 = vpop.f32.mrb[0].mxu0
      %v3481 = vpop.f32.mrb[0].mxu0
      %v3482 = vadd.f32 0.0, %v3481
      %v3483 = vpop.f32.mrb[0].mxu0
      %3484 = vmatprep.mubr.bf16.mxu0 0
      %3485 = vmatmul.mubr.bf16.gmra.mrb[0].mxu0 %v3337
      %v3486 = vpop.f32.mrb[0].mxu0
      %v3487 = vadd.f32 0.0, %v3486
      %v3488 = vpop.f32.mrb[0].mxu0
      %v3489 = vpop.f32.mrb[0].mxu0
      %v3490 = vadd.f32 0.0, %v3489
      %v3491 = vpop.f32.mrb[0].mxu0
      %3492 = vmatprep.mubr.bf16.mxu0 0
      %3493 = vmatmul.mubr.bf16.gmra.mrb[0].mxu0 %v3340
      %v3494 = vpop.f32.mrb[0].mxu0
      %v3495 = vadd.f32 0.0, %v3494
      %v3496 = vpop.f32.mrb[0].mxu0
      %v3497 = vpop.f32.mrb[0].mxu0
      %v3498 = vadd.f32 0.0, %v3497
      %v3499 = vpop.f32.mrb[0].mxu0
      %3500 = vmatprep.mubr.bf16.mxu0 0
      %3501 = vmatmul.mubr.bf16.gmra.mrb[0].mxu0 %v3343
      %v3502 = vpop.f32.mrb[0].mxu0
      %v3503 = vadd.f32 0.0, %v3502
      %v3504 = vpop.f32.mrb[0].mxu0
      %v3505 = vpop.f32.mrb[0].mxu0
      %v3506 = vadd.f32 0.0, %v3505
      %v3507 = vpop.f32.mrb[0].mxu0
      %3508 = vdwg.mxu0
      %v3509 = vadd.f32 %v3147, %v3383
      %v3510 = vadd.f32 %v3148, %v3386
      %v3511 = vadd.f32 %v3149, %v3391
      %v3512 = vadd.f32 %v3150, %v3394
      %v3513 = vadd.f32 %v3151, %v3399
      %v3514 = vadd.f32 %v3152, %v3402
      %v3515 = vadd.f32 %v3153, %v3407
      %v3516 = vadd.f32 %v3154, %v3410
      %v3517 = vadd.f32 %v3155, %v3415
      %v3518 = vadd.f32 %v3156, %v3418
      %v3519 = vadd.f32 %v3157, %v3423
      %v3520 = vadd.f32 %v3158, %v3426
      %v3521 = vadd.f32 %v3159, %v3431
      %v3522 = vadd.f32 %v3160, %v3434
      %v3523 = vadd.f32 %v3161, %v3439
      %v3524 = vadd.f32 %v3162, %v3442
      %v3525 = vadd.f32 %v3163, %v3447
      %v3526 = vadd.f32 %v3164, %v3450
      %v3527 = vadd.f32 %v3165, %v3455
      %v3528 = vadd.f32 %v3166, %v3458
      %v3529 = vadd.f32 %v3167, %v3463
      %v3530 = vadd.f32 %v3168, %v3466
      %v3531 = vadd.f32 %v3169, %v3471
      %v3532 = vadd.f32 %v3170, %v3474
      %v3533 = vadd.f32 %v3171, %v3479
      %v3534 = vadd.f32 %v3172, %v3482
      %v3535 = vadd.f32 %v3173, %v3487
      %v3536 = vadd.f32 %v3174, %v3490
      %v3537 = vadd.f32 %v3175, %v3495
      %v3538 = vadd.f32 %v3176, %v3498
      %v3539 = vadd.f32 %v3177, %v3503
      %v3540 = vadd.f32 %v3178, %v3506
      %v3541 = vld [vmem:[%s3182] sm:$0xf]
      %v3542 = vld [vmem:[%s3182 + $0x4] sm:$0xf]
      %v3543 = vld [vmem:[%s3182 + $0x8] sm:$0x1]
      %v3544 = vld [vmem:[%s3182 + $0xc] sm:$0xf]
      %v3545 = vld [vmem:[%s3182 + $0x10] sm:$0xf]
      %v3546 = vld [vmem:[%s3182 + $0x14] sm:$0x1]
      %v3547 = vld [vmem:[%s3182 + $0x18] sm:$0xf]
      %v3548 = vld [vmem:[%s3182 + $0x1c] sm:$0xf]
      %v3549 = vld [vmem:[%s3182 + $0x20] sm:$0x1]
      %v3550 = vld [vmem:[%s3182 + $0x24] sm:$0xf]
      %v3551 = vld [vmem:[%s3182 + $0x28] sm:$0xf]
      %v3552 = vld [vmem:[%s3182 + $0x2c] sm:$0x1]
      %v3553 = vld [vmem:[%s3182 + $0x30] sm:$0xf]
      %v3554 = vld [vmem:[%s3182 + $0x34] sm:$0xf]
      %v3555 = vld [vmem:[%s3182 + $0x38] sm:$0x1]
      %v3556 = vld [vmem:[%s3182 + $0x3c] sm:$0xf]
      %v3557 = vld [vmem:[%s3182 + $0x40] sm:$0xf]
      %v3558 = vld [vmem:[%s3182 + $0x44] sm:$0x1]
      %v3559 = vld [vmem:[%s3182 + $0x48] sm:$0xf]
      %v3560 = vld [vmem:[%s3182 + $0x4c] sm:$0xf]
      %v3561 = vld [vmem:[%s3182 + $0x50] sm:$0x1]
      %v3562 = vld [vmem:[%s3182 + $0x54] sm:$0xf]
      %v3563 = vld [vmem:[%s3182 + $0x58] sm:$0xf]
      %v3564 = vld [vmem:[%s3182 + $0x5c] sm:$0x1]
      %v3565 = vld [vmem:[%s3182 + $0x60] sm:$0xf]
      %v3566 = vld [vmem:[%s3182 + $0x64] sm:$0xf]
      %v3567 = vld [vmem:[%s3182 + $0x68] sm:$0x1]
      %v3568 = vld [vmem:[%s3182 + $0x6c] sm:$0xf]
      %v3569 = vld [vmem:[%s3182 + $0x70] sm:$0xf]
      %v3570 = vld [vmem:[%s3182 + $0x74] sm:$0x1]
      %v3571 = vld [vmem:[%s3182 + $0x78] sm:$0xf]
      %v3572 = vld [vmem:[%s3182 + $0x7c] sm:$0xf]
      %v3573 = vld [vmem:[%s3182 + $0x80] sm:$0x1]
      %v3574 = vld [vmem:[%s3182 + $0x84] sm:$0xf]
      %v3575 = vld [vmem:[%s3182 + $0x88] sm:$0xf]
      %v3576 = vld [vmem:[%s3182 + $0x8c] sm:$0x1]
      %v3577 = vld [vmem:[%s3182 + $0x90] sm:$0xf]
      %v3578 = vld [vmem:[%s3182 + $0x94] sm:$0xf]
      %v3579 = vld [vmem:[%s3182 + $0x98] sm:$0x1]
      %v3580 = vld [vmem:[%s3182 + $0x9c] sm:$0xf]
      %v3581 = vld [vmem:[%s3182 + $0xa0] sm:$0xf]
      %v3582 = vld [vmem:[%s3182 + $0xa4] sm:$0x1]
      %v3583 = vld [vmem:[%s3182 + $0xa8] sm:$0xf]
      %v3584 = vld [vmem:[%s3182 + $0xac] sm:$0xf]
      %v3585 = vld [vmem:[%s3182 + $0xb0] sm:$0x1]
      %v3586 = vld [vmem:[%s3182 + $0xb4] sm:$0xf]
      %v3587 = vld [vmem:[%s3182 + $0xb8] sm:$0xf]
      %v3588 = vld [vmem:[%s3182 + $0xbc] sm:$0x1]
      %v3590 = vshrl.u32 %v3541, 16
      %v3592 = vrot.slane %v3590, 4
      %v3593 = vshll.u32 %v3541, 16
      %v3595 = vrot.slane %v3593, 5
      %v3596 = vor.u32 %v3592, %v3595
      %v3597 = vrot.slane %v3596, 4
      %v3599 = vshll.u32 %v3542, 16
      %v3601 = vrot.slane %v3599, 5
      %v3602 = vsel %vm223, %v3597, %v3601
      %v3603 = vshrl.u32 %v3542, 16
      %v3605 = vrot.slane %v3603, 4
      %v3606 = vor.u32 %v3605, %v3601
      %v3607 = vrot.slane %v3606, 4
      %v3609 = vshll.u32 %v3543, 16
      %v3611 = vrot.slane %v3609, 5
      %v3612 = vsel %vm223, %v3607, %v3611
      %v3614 = vshrl.u32 %v3544, 16
      %v3616 = vrot.slane %v3614, 4
      %v3617 = vshll.u32 %v3544, 16
      %v3619 = vrot.slane %v3617, 5
      %v3620 = vor.u32 %v3616, %v3619
      %v3621 = vrot.slane %v3620, 4
      %v3623 = vshll.u32 %v3545, 16
      %v3625 = vrot.slane %v3623, 5
      %v3626 = vsel %vm223, %v3621, %v3625
      %v3627 = vshrl.u32 %v3545, 16
      %v3629 = vrot.slane %v3627, 4
      %v3630 = vor.u32 %v3629, %v3625
      %v3631 = vrot.slane %v3630, 4
      %v3633 = vshll.u32 %v3546, 16
      %v3635 = vrot.slane %v3633, 5
      %v3636 = vsel %vm223, %v3631, %v3635
      %v3638 = vshrl.u32 %v3547, 16
      %v3640 = vrot.slane %v3638, 4
      %v3641 = vshll.u32 %v3547, 16
      %v3643 = vrot.slane %v3641, 5
      %v3644 = vor.u32 %v3640, %v3643
      %v3645 = vrot.slane %v3644, 4
      %v3647 = vshll.u32 %v3548, 16
      %v3649 = vrot.slane %v3647, 5
      %v3650 = vsel %vm223, %v3645, %v3649
      %v3651 = vshrl.u32 %v3548, 16
      %v3653 = vrot.slane %v3651, 4
      %v3654 = vor.u32 %v3653, %v3649
      %v3655 = vrot.slane %v3654, 4
      %v3657 = vshll.u32 %v3549, 16
      %v3659 = vrot.slane %v3657, 5
      %v3660 = vsel %vm223, %v3655, %v3659
      %v3662 = vshrl.u32 %v3550, 16
      %v3664 = vrot.slane %v3662, 4
      %v3665 = vshll.u32 %v3550, 16
      %v3667 = vrot.slane %v3665, 5
      %v3668 = vor.u32 %v3664, %v3667
      %v3669 = vrot.slane %v3668, 4
      %v3671 = vshll.u32 %v3551, 16
      %v3673 = vrot.slane %v3671, 5
      %v3674 = vsel %vm223, %v3669, %v3673
      %v3675 = vshrl.u32 %v3551, 16
      %v3677 = vrot.slane %v3675, 4
      %v3678 = vor.u32 %v3677, %v3673
      %v3679 = vrot.slane %v3678, 4
      %v3681 = vshll.u32 %v3552, 16
      %v3683 = vrot.slane %v3681, 5
      %v3684 = vsel %vm223, %v3679, %v3683
      %v3686 = vshrl.u32 %v3553, 16
      %v3688 = vrot.slane %v3686, 4
      %v3689 = vshll.u32 %v3553, 16
      %v3691 = vrot.slane %v3689, 5
      %v3692 = vor.u32 %v3688, %v3691
      %v3693 = vrot.slane %v3692, 4
      %v3695 = vshll.u32 %v3554, 16
      %v3697 = vrot.slane %v3695, 5
      %v3698 = vsel %vm223, %v3693, %v3697
      %v3699 = vshrl.u32 %v3554, 16
      %v3701 = vrot.slane %v3699, 4
      %v3702 = vor.u32 %v3701, %v3697
      %v3703 = vrot.slane %v3702, 4
      %v3705 = vshll.u32 %v3555, 16
      %v3707 = vrot.slane %v3705, 5
      %v3708 = vsel %vm223, %v3703, %v3707
      %v3710 = vshrl.u32 %v3556, 16
      %v3712 = vrot.slane %v3710, 4
      %v3713 = vshll.u32 %v3556, 16
      %v3715 = vrot.slane %v3713, 5
      %v3716 = vor.u32 %v3712, %v3715
      %v3717 = vrot.slane %v3716, 4
      %v3719 = vshll.u32 %v3557, 16
      %v3721 = vrot.slane %v3719, 5
      %v3722 = vsel %vm223, %v3717, %v3721
      %v3723 = vshrl.u32 %v3557, 16
      %v3725 = vrot.slane %v3723, 4
      %v3726 = vor.u32 %v3725, %v3721
      %v3727 = vrot.slane %v3726, 4
      %v3729 = vshll.u32 %v3558, 16
      %v3731 = vrot.slane %v3729, 5
      %v3732 = vsel %vm223, %v3727, %v3731
      %v3734 = vshrl.u32 %v3559, 16
      %v3736 = vrot.slane %v3734, 4
      %v3737 = vshll.u32 %v3559, 16
      %v3739 = vrot.slane %v3737, 5
      %v3740 = vor.u32 %v3736, %v3739
      %v3741 = vrot.slane %v3740, 4
      %v3743 = vshll.u32 %v3560, 16
      %v3745 = vrot.slane %v3743, 5
      %v3746 = vsel %vm223, %v3741, %v3745
      %v3747 = vshrl.u32 %v3560, 16
      %v3749 = vrot.slane %v3747, 4
      %v3750 = vor.u32 %v3749, %v3745
      %v3751 = vrot.slane %v3750, 4
      %v3753 = vshll.u32 %v3561, 16
      %v3755 = vrot.slane %v3753, 5
      %v3756 = vsel %vm223, %v3751, %v3755
      %v3758 = vshrl.u32 %v3562, 16
      %v3760 = vrot.slane %v3758, 4
      %v3761 = vshll.u32 %v3562, 16
      %v3763 = vrot.slane %v3761, 5
      %v3764 = vor.u32 %v3760, %v3763
      %v3765 = vrot.slane %v3764, 4
      %v3767 = vshll.u32 %v3563, 16
      %v3769 = vrot.slane %v3767, 5
      %v3770 = vsel %vm223, %v3765, %v3769
      %v3771 = vshrl.u32 %v3563, 16
      %v3773 = vrot.slane %v3771, 4
      %v3774 = vor.u32 %v3773, %v3769
      %v3775 = vrot.slane %v3774, 4
      %v3777 = vshll.u32 %v3564, 16
      %v3779 = vrot.slane %v3777, 5
      %v3780 = vsel %vm223, %v3775, %v3779
      %v3782 = vshrl.u32 %v3565, 16
      %v3784 = vrot.slane %v3782, 4
      %v3785 = vshll.u32 %v3565, 16
      %v3787 = vrot.slane %v3785, 5
      %v3788 = vor.u32 %v3784, %v3787
      %v3789 = vrot.slane %v3788, 4
      %v3791 = vshll.u32 %v3566, 16
      %v3793 = vrot.slane %v3791, 5
      %v3794 = vsel %vm223, %v3789, %v3793
      %v3795 = vshrl.u32 %v3566, 16
      %v3797 = vrot.slane %v3795, 4
      %v3798 = vor.u32 %v3797, %v3793
      %v3799 = vrot.slane %v3798, 4
      %v3801 = vshll.u32 %v3567, 16
      %v3803 = vrot.slane %v3801, 5
      %v3804 = vsel %vm223, %v3799, %v3803
      %v3806 = vshrl.u32 %v3568, 16
      %v3808 = vrot.slane %v3806, 4
      %v3809 = vshll.u32 %v3568, 16
      %v3811 = vrot.slane %v3809, 5
      %v3812 = vor.u32 %v3808, %v3811
      %v3813 = vrot.slane %v3812, 4
      %v3815 = vshll.u32 %v3569, 16
      %v3817 = vrot.slane %v3815, 5
      %v3818 = vsel %vm223, %v3813, %v3817
      %v3819 = vshrl.u32 %v3569, 16
      %v3821 = vrot.slane %v3819, 4
      %v3822 = vor.u32 %v3821, %v3817
      %v3823 = vrot.slane %v3822, 4
      %v3825 = vshll.u32 %v3570, 16
      %v3827 = vrot.slane %v3825, 5
      %v3828 = vsel %vm223, %v3823, %v3827
      %v3830 = vshrl.u32 %v3571, 16
      %v3832 = vrot.slane %v3830, 4
      %v3833 = vshll.u32 %v3571, 16
      %v3835 = vrot.slane %v3833, 5
      %v3836 = vor.u32 %v3832, %v3835
      %v3837 = vrot.slane %v3836, 4
      %v3839 = vshll.u32 %v3572, 16
      %v3841 = vrot.slane %v3839, 5
      %v3842 = vsel %vm223, %v3837, %v3841
      %v3843 = vshrl.u32 %v3572, 16
      %v3845 = vrot.slane %v3843, 4
      %v3846 = vor.u32 %v3845, %v3841
      %v3847 = vrot.slane %v3846, 4
      %v3849 = vshll.u32 %v3573, 16
      %v3851 = vrot.slane %v3849, 5
      %v3852 = vsel %vm223, %v3847, %v3851
      %v3854 = vshrl.u32 %v3574, 16
      %v3856 = vrot.slane %v3854, 4
      %v3857 = vshll.u32 %v3574, 16
      %v3859 = vrot.slane %v3857, 5
      %v3860 = vor.u32 %v3856, %v3859
      %v3861 = vrot.slane %v3860, 4
      %v3863 = vshll.u32 %v3575, 16
      %v3865 = vrot.slane %v3863, 5
      %v3866 = vsel %vm223, %v3861, %v3865
      %v3867 = vshrl.u32 %v3575, 16
      %v3869 = vrot.slane %v3867, 4
      %v3870 = vor.u32 %v3869, %v3865
      %v3871 = vrot.slane %v3870, 4
      %v3873 = vshll.u32 %v3576, 16
      %v3875 = vrot.slane %v3873, 5
      %v3876 = vsel %vm223, %v3871, %v3875
      %v3878 = vshrl.u32 %v3577, 16
      %v3880 = vrot.slane %v3878, 4
      %v3881 = vshll.u32 %v3577, 16
      %v3883 = vrot.slane %v3881, 5
      %v3884 = vor.u32 %v3880, %v3883
      %v3885 = vrot.slane %v3884, 4
      %v3887 = vshll.u32 %v3578, 16
      %v3889 = vrot.slane %v3887, 5
      %v3890 = vsel %vm223, %v3885, %v3889
      %v3891 = vshrl.u32 %v3578, 16
      %v3893 = vrot.slane %v3891, 4
      %v3894 = vor.u32 %v3893, %v3889
      %v3895 = vrot.slane %v3894, 4
      %v3897 = vshll.u32 %v3579, 16
      %v3899 = vrot.slane %v3897, 5
      %v3900 = vsel %vm223, %v3895, %v3899
      %v3902 = vshrl.u32 %v3580, 16
      %v3904 = vrot.slane %v3902, 4
      %v3905 = vshll.u32 %v3580, 16
      %v3907 = vrot.slane %v3905, 5
      %v3908 = vor.u32 %v3904, %v3907
      %v3909 = vrot.slane %v3908, 4
      %v3911 = vshll.u32 %v3581, 16
      %v3913 = vrot.slane %v3911, 5
      %v3914 = vsel %vm223, %v3909, %v3913
      %v3915 = vshrl.u32 %v3581, 16
      %v3917 = vrot.slane %v3915, 4
      %v3918 = vor.u32 %v3917, %v3913
      %v3919 = vrot.slane %v3918, 4
      %v3921 = vshll.u32 %v3582, 16
      %v3923 = vrot.slane %v3921, 5
      %v3924 = vsel %vm223, %v3919, %v3923
      %v3926 = vshrl.u32 %v3583, 16
      %v3928 = vrot.slane %v3926, 4
      %v3929 = vshll.u32 %v3583, 16
      %v3931 = vrot.slane %v3929, 5
      %v3932 = vor.u32 %v3928, %v3931
      %v3933 = vrot.slane %v3932, 4
      %v3935 = vshll.u32 %v3584, 16
      %v3937 = vrot.slane %v3935, 5
      %v3938 = vsel %vm223, %v3933, %v3937
      %v3939 = vshrl.u32 %v3584, 16
      %v3941 = vrot.slane %v3939, 4
      %v3942 = vor.u32 %v3941, %v3937
      %v3943 = vrot.slane %v3942, 4
      %v3945 = vshll.u32 %v3585, 16
      %v3947 = vrot.slane %v3945, 5
      %v3948 = vsel %vm223, %v3943, %v3947
      %v3950 = vshrl.u32 %v3586, 16
      %v3952 = vrot.slane %v3950, 4
      %v3953 = vshll.u32 %v3586, 16
      %v3955 = vrot.slane %v3953, 5
      %v3956 = vor.u32 %v3952, %v3955
      %v3957 = vrot.slane %v3956, 4
      %v3959 = vshll.u32 %v3587, 16
      %v3961 = vrot.slane %v3959, 5
      %v3962 = vsel %vm223, %v3957, %v3961
      %v3963 = vshrl.u32 %v3587, 16
      %v3965 = vrot.slane %v3963, 4
      %v3966 = vor.u32 %v3965, %v3961
      %v3967 = vrot.slane %v3966, 4
      %v3969 = vshll.u32 %v3588, 16
      %v3971 = vrot.slane %v3969, 5
      %v3972 = vsel %vm223, %v3967, %v3971
      %s3973 = scalar_lea.vmem %s1, 14
      %v3974 = vld [vmem:[%s3973] sm:$0x3]
      %v3975 = vunpack.c.l.b16 %v3602
      %v3976 = vunpack.c.l.b16 %v3612
      %v3977 = vunpack.c.l.b16 %v3626
      %v3978 = vunpack.c.l.b16 %v3636
      %v3979 = vunpack.c.l.b16 %v3650
      %v3980 = vunpack.c.l.b16 %v3660
      %v3981 = vunpack.c.l.b16 %v3674
      %v3982 = vunpack.c.l.b16 %v3684
      %v3983 = vunpack.c.l.b16 %v3698
      %v3984 = vunpack.c.l.b16 %v3708
      %v3985 = vunpack.c.l.b16 %v3722
      %v3986 = vunpack.c.l.b16 %v3732
      %v3987 = vunpack.c.l.b16 %v3746
      %v3988 = vunpack.c.l.b16 %v3756
      %v3989 = vunpack.c.l.b16 %v3770
      %v3990 = vunpack.c.l.b16 %v3780
      %v3991 = vunpack.c.l.b16 %v3794
      %v3992 = vunpack.c.l.b16 %v3804
      %v3993 = vunpack.c.l.b16 %v3818
      %v3994 = vunpack.c.l.b16 %v3828
      %v3995 = vunpack.c.l.b16 %v3842
      %v3996 = vunpack.c.l.b16 %v3852
      %v3997 = vunpack.c.l.b16 %v3866
      %v3998 = vunpack.c.l.b16 %v3876
      %v3999 = vunpack.c.l.b16 %v3890
      %v4000 = vunpack.c.l.b16 %v3900
      %v4001 = vunpack.c.l.b16 %v3914
      %v4002 = vunpack.c.l.b16 %v3924
      %v4003 = vunpack.c.l.b16 %v3938
      %v4004 = vunpack.c.l.b16 %v3948
      %v4005 = vunpack.c.l.b16 %v3962
      %v4006 = vunpack.c.l.b16 %v3972
      %v4007 = vpack.c.b16 %v3976, %v3975
      %v4008 = vpack.c.b16 %v3978, %v3977
      %v4009 = vpack.c.b16 %v3980, %v3979
      %v4010 = vpack.c.b16 %v3982, %v3981
      %v4011 = vpack.c.b16 %v3984, %v3983
      %v4012 = vpack.c.b16 %v3986, %v3985
      %v4013 = vpack.c.b16 %v3988, %v3987
      %v4014 = vpack.c.b16 %v3990, %v3989
      %v4015 = vpack.c.b16 %v3992, %v3991
      %v4016 = vpack.c.b16 %v3994, %v3993
      %v4017 = vpack.c.b16 %v3996, %v3995
      %v4018 = vpack.c.b16 %v3998, %v3997
      %v4019 = vpack.c.b16 %v4000, %v3999
      %v4020 = vpack.c.b16 %v4002, %v4001
      %v4021 = vpack.c.b16 %v4004, %v4003
      %v4022 = vpack.c.b16 %v4006, %v4005
      %v4024 = vsel %vm658, %v4007, 0
      %v4027 = vsel %vm658, %v4008, 0
      %v4030 = vsel %vm658, %v4009, 0
      %v4033 = vsel %vm658, %v4010, 0
      %v4036 = vsel %vm658, %v4011, 0
      %v4039 = vsel %vm658, %v4012, 0
      %v4042 = vsel %vm658, %v4013, 0
      %v4045 = vsel %vm658, %v4014, 0
      %v4048 = vsel %vm658, %v4015, 0
      %v4051 = vsel %vm658, %v4016, 0
      %v4054 = vsel %vm658, %v4017, 0
      %v4057 = vsel %vm658, %v4018, 0
      %v4060 = vsel %vm658, %v4019, 0
      %v4063 = vsel %vm658, %v4020, 0
      %v4066 = vsel %vm658, %v4021, 0
      %v4069 = vsel %vm658, %v4022, 0
      %v4072 = vsel %vm707, %v3974, 0
      %4074 = vmatprep.subr.bf16.mxu0 0
      %4075 = vmatpush1.bf16.msra.mxu0 %v4072
      %4076 = vmatprep.subr.bf16.mxu0 0
      %4077 = vmatpush1.bf16.msra.mxu0 0
      %4078 = vmatprep.subr.bf16.mxu0 0
      %4079 = vmatpush1.bf16.msra.mxu0 0
      %4080 = vmatprep.subr.bf16.mxu0 0
      %4081 = vmatpush1.bf16.msra.mxu0 0
      %4082 = vmatprep.subr.bf16.mxu0 0
      %4083 = vmatpush1.bf16.msra.mxu0 0
      %4084 = vmatprep.subr.bf16.mxu0 0
      %4085 = vmatpush1.bf16.msra.mxu0 0
      %4086 = vmatprep.subr.bf16.mxu0 0
      %4087 = vmatpush1.bf16.msra.mxu0 0
      %4088 = vmatprep.subr.bf16.mxu0 0
      %4089 = vmatpush1.bf16.msra.mxu0 0
      %4090 = vmatprep.subr.bf16.mxu0 0
      %4091 = vmatpush1.bf16.msra.mxu0 0
      %4092 = vmatprep.subr.bf16.mxu0 0
      %4093 = vmatpush1.bf16.msra.mxu0 0
      %4094 = vmatprep.subr.bf16.mxu0 0
      %4095 = vmatpush1.bf16.msra.mxu0 0
      %4096 = vmatprep.subr.bf16.mxu0 0
      %4097 = vmatpush1.bf16.msra.mxu0 0
      %4098 = vmatprep.subr.bf16.mxu0 0
      %4099 = vmatpush1.bf16.msra.mxu0 0
      %4100 = vmatprep.subr.bf16.mxu0 0
      %4101 = vmatpush1.bf16.msra.mxu0 0
      %4102 = vmatprep.subr.bf16.mxu0 0
      %4103 = vmatpush1.bf16.msra.mxu0 0
      %4104 = vmatprep.subr.bf16.mxu0 0
      %4105 = vmatpush1.bf16.msra.mxu0 0
      %4106 = vmatprep.mubr.bf16.mxu0 0
      %4107 = vmatmul.mubr.bf16.gmra.mrb[0].mxu0 %v4024
      %v4108 = vpop.f32.mrb[0].mxu0
      %v4109 = vadd.f32 0.0, %v4108
      %v4110 = vpop.f32.mrb[0].mxu0
      %v4111 = vpop.f32.mrb[0].mxu0
      %v4112 = vadd.f32 0.0, %v4111
      %v4113 = vpop.f32.mrb[0].mxu0
      %4114 = vmatprep.mubr.bf16.mxu0 0
      %4115 = vmatmul.mubr.bf16.gmra.mrb[0].mxu0 %v4027
      %v4116 = vpop.f32.mrb[0].mxu0
      %v4117 = vadd.f32 0.0, %v4116
      %v4118 = vpop.f32.mrb[0].mxu0
      %v4119 = vpop.f32.mrb[0].mxu0
      %v4120 = vadd.f32 0.0, %v4119
      %v4121 = vpop.f32.mrb[0].mxu0
      %4122 = vmatprep.mubr.bf16.mxu0 0
      %4123 = vmatmul.mubr.bf16.gmra.mrb[0].mxu0 %v4030
      %v4124 = vpop.f32.mrb[0].mxu0
      %v4125 = vadd.f32 0.0, %v4124
      %v4126 = vpop.f32.mrb[0].mxu0
      %v4127 = vpop.f32.mrb[0].mxu0
      %v4128 = vadd.f32 0.0, %v4127
      %v4129 = vpop.f32.mrb[0].mxu0
      %4130 = vmatprep.mubr.bf16.mxu0 0
      %4131 = vmatmul.mubr.bf16.gmra.mrb[0].mxu0 %v4033
      %v4132 = vpop.f32.mrb[0].mxu0
      %v4133 = vadd.f32 0.0, %v4132
      %v4134 = vpop.f32.mrb[0].mxu0
      %v4135 = vpop.f32.mrb[0].mxu0
      %v4136 = vadd.f32 0.0, %v4135
      %v4137 = vpop.f32.mrb[0].mxu0
      %4138 = vmatprep.mubr.bf16.mxu0 0
      %4139 = vmatmul.mubr.bf16.gmra.mrb[0].mxu0 %v4036
      %v4140 = vpop.f32.mrb[0].mxu0
      %v4141 = vadd.f32 0.0, %v4140
      %v4142 = vpop.f32.mrb[0].mxu0
      %v4143 = vpop.f32.mrb[0].mxu0
      %v4144 = vadd.f32 0.0, %v4143
      %v4145 = vpop.f32.mrb[0].mxu0
      %4146 = vmatprep.mubr.bf16.mxu0 0
      %4147 = vmatmul.mubr.bf16.gmra.mrb[0].mxu0 %v4039
      %v4148 = vpop.f32.mrb[0].mxu0
      %v4149 = vadd.f32 0.0, %v4148
      %v4150 = vpop.f32.mrb[0].mxu0
      %v4151 = vpop.f32.mrb[0].mxu0
      %v4152 = vadd.f32 0.0, %v4151
      %v4153 = vpop.f32.mrb[0].mxu0
      %4154 = vmatprep.mubr.bf16.mxu0 0
      %4155 = vmatmul.mubr.bf16.gmra.mrb[0].mxu0 %v4042
      %v4156 = vpop.f32.mrb[0].mxu0
      %v4157 = vadd.f32 0.0, %v4156
      %v4158 = vpop.f32.mrb[0].mxu0
      %v4159 = vpop.f32.mrb[0].mxu0
      %v4160 = vadd.f32 0.0, %v4159
      %v4161 = vpop.f32.mrb[0].mxu0
      %4162 = vmatprep.mubr.bf16.mxu0 0
      %4163 = vmatmul.mubr.bf16.gmra.mrb[0].mxu0 %v4045
      %v4164 = vpop.f32.mrb[0].mxu0
      %v4165 = vadd.f32 0.0, %v4164
      %v4166 = vpop.f32.mrb[0].mxu0
      %v4167 = vpop.f32.mrb[0].mxu0
      %v4168 = vadd.f32 0.0, %v4167
      %v4169 = vpop.f32.mrb[0].mxu0
      %4170 = vmatprep.mubr.bf16.mxu0 0
      %4171 = vmatmul.mubr.bf16.gmra.mrb[0].mxu0 %v4048
      %v4172 = vpop.f32.mrb[0].mxu0
      %v4173 = vadd.f32 0.0, %v4172
      %v4174 = vpop.f32.mrb[0].mxu0
      %v4175 = vpop.f32.mrb[0].mxu0
      %v4176 = vadd.f32 0.0, %v4175
      %v4177 = vpop.f32.mrb[0].mxu0
      %4178 = vmatprep.mubr.bf16.mxu0 0
      %4179 = vmatmul.mubr.bf16.gmra.mrb[0].mxu0 %v4051
      %v4180 = vpop.f32.mrb[0].mxu0
      %v4181 = vadd.f32 0.0, %v4180
      %v4182 = vpop.f32.mrb[0].mxu0
      %v4183 = vpop.f32.mrb[0].mxu0
      %v4184 = vadd.f32 0.0, %v4183
      %v4185 = vpop.f32.mrb[0].mxu0
      %4186 = vmatprep.mubr.bf16.mxu0 0
      %4187 = vmatmul.mubr.bf16.gmra.mrb[0].mxu0 %v4054
      %v4188 = vpop.f32.mrb[0].mxu0
      %v4189 = vadd.f32 0.0, %v4188
      %v4190 = vpop.f32.mrb[0].mxu0
      %v4191 = vpop.f32.mrb[0].mxu0
      %v4192 = vadd.f32 0.0, %v4191
      %v4193 = vpop.f32.mrb[0].mxu0
      %4194 = vmatprep.mubr.bf16.mxu0 0
      %4195 = vmatmul.mubr.bf16.gmra.mrb[0].mxu0 %v4057
      %v4196 = vpop.f32.mrb[0].mxu0
      %v4197 = vadd.f32 0.0, %v4196
      %v4198 = vpop.f32.mrb[0].mxu0
      %v4199 = vpop.f32.mrb[0].mxu0
      %v4200 = vadd.f32 0.0, %v4199
      %v4201 = vpop.f32.mrb[0].mxu0
      %4202 = vmatprep.mubr.bf16.mxu0 0
      %4203 = vmatmul.mubr.bf16.gmra.mrb[0].mxu0 %v4060
      %v4204 = vpop.f32.mrb[0].mxu0
      %v4205 = vadd.f32 0.0, %v4204
      %v4206 = vpop.f32.mrb[0].mxu0
      %v4207 = vpop.f32.mrb[0].mxu0
      %v4208 = vadd.f32 0.0, %v4207
      %v4209 = vpop.f32.mrb[0].mxu0
      %4210 = vmatprep.mubr.bf16.mxu0 0
      %4211 = vmatmul.mubr.bf16.gmra.mrb[0].mxu0 %v4063
      %v4212 = vpop.f32.mrb[0].mxu0
      %v4213 = vadd.f32 0.0, %v4212
      %v4214 = vpop.f32.mrb[0].mxu0
      %v4215 = vpop.f32.mrb[0].mxu0
      %v4216 = vadd.f32 0.0, %v4215
      %v4217 = vpop.f32.mrb[0].mxu0
      %4218 = vmatprep.mubr.bf16.mxu0 0
      %4219 = vmatmul.mubr.bf16.gmra.mrb[0].mxu0 %v4066
      %v4220 = vpop.f32.mrb[0].mxu0
      %v4221 = vadd.f32 0.0, %v4220
      %v4222 = vpop.f32.mrb[0].mxu0
      %v4223 = vpop.f32.mrb[0].mxu0
      %v4224 = vadd.f32 0.0, %v4223
      %v4225 = vpop.f32.mrb[0].mxu0
      %4226 = vmatprep.mubr.bf16.mxu0 0
      %4227 = vmatmul.mubr.bf16.gmra.mrb[0].mxu0 %v4069
      %v4228 = vpop.f32.mrb[0].mxu0
      %v4229 = vadd.f32 0.0, %v4228
      %v4230 = vpop.f32.mrb[0].mxu0
      %v4231 = vpop.f32.mrb[0].mxu0
      %v4232 = vadd.f32 0.0, %v4231
      %v4233 = vpop.f32.mrb[0].mxu0
      %4234 = vdwg.mxu0
      %v4235 = vadd.f32 %v3509, %v4109
      %v4236 = vadd.f32 %v3510, %v4112
      %v4237 = vadd.f32 %v3511, %v4117
      %v4238 = vadd.f32 %v3512, %v4120
      %v4239 = vadd.f32 %v3513, %v4125
      %v4240 = vadd.f32 %v3514, %v4128
      %v4241 = vadd.f32 %v3515, %v4133
      %v4242 = vadd.f32 %v3516, %v4136
      %v4243 = vadd.f32 %v3517, %v4141
      %v4244 = vadd.f32 %v3518, %v4144
      %v4245 = vadd.f32 %v3519, %v4149
      %v4246 = vadd.f32 %v3520, %v4152
      %v4247 = vadd.f32 %v3521, %v4157
      %v4248 = vadd.f32 %v3522, %v4160
      %v4249 = vadd.f32 %v3523, %v4165
      %v4250 = vadd.f32 %v3524, %v4168
      %v4251 = vadd.f32 %v3525, %v4173
      %v4252 = vadd.f32 %v3526, %v4176
      %v4253 = vadd.f32 %v3527, %v4181
      %v4254 = vadd.f32 %v3528, %v4184
      %v4255 = vadd.f32 %v3529, %v4189
      %v4256 = vadd.f32 %v3530, %v4192
      %v4257 = vadd.f32 %v3531, %v4197
      %v4258 = vadd.f32 %v3532, %v4200
      %v4259 = vadd.f32 %v3533, %v4205
      %v4260 = vadd.f32 %v3534, %v4208
      %v4261 = vadd.f32 %v3535, %v4213
      %v4262 = vadd.f32 %v3536, %v4216
      %v4263 = vadd.f32 %v3537, %v4221
      %v4264 = vadd.f32 %v3538, %v4224
      %v4265 = vadd.f32 %v3539, %v4229
      %v4266 = vadd.f32 %v3540, %v4232
      %v4267 = vld [vmem:[%s3182] sm:$0xe]
      %v4268 = vld [vmem:[%s3182 + $0xc] sm:$0xe]
      %v4269 = vld [vmem:[%s3182 + $0x18] sm:$0xe]
      %v4270 = vld [vmem:[%s3182 + $0x24] sm:$0xe]
      %v4271 = vld [vmem:[%s3182 + $0x30] sm:$0xe]
      %v4272 = vld [vmem:[%s3182 + $0x3c] sm:$0xe]
      %v4273 = vld [vmem:[%s3182 + $0x48] sm:$0xe]
      %v4274 = vld [vmem:[%s3182 + $0x54] sm:$0xe]
      %v4275 = vld [vmem:[%s3182 + $0x60] sm:$0xe]
      %v4276 = vld [vmem:[%s3182 + $0x6c] sm:$0xe]
      %v4277 = vld [vmem:[%s3182 + $0x78] sm:$0xe]
      %v4278 = vld [vmem:[%s3182 + $0x84] sm:$0xe]
      %v4279 = vld [vmem:[%s3182 + $0x90] sm:$0xe]
      %v4280 = vld [vmem:[%s3182 + $0x9c] sm:$0xe]
      %v4281 = vld [vmem:[%s3182 + $0xa8] sm:$0xe]
      %v4282 = vld [vmem:[%s3182 + $0xb4] sm:$0xe]
      %v4331 = vrot.slane %v4267, 5
      %v4332 = vrot.slane %v4331, 4
      %v4333 = vrot.slane %v3542, 5
      %v4334 = vsel %vm1214, %v4332, %v4333
      %v4335 = vrot.slane %v4333, 4
      %v4336 = vrot.slane %v3543, 5
      %v4337 = vsel %vm1214, %v4335, %v4336
      %v4338 = vrot.slane %v4268, 5
      %v4339 = vrot.slane %v4338, 4
      %v4340 = vrot.slane %v3545, 5
      %v4341 = vsel %vm1214, %v4339, %v4340
      %v4342 = vrot.slane %v4340, 4
      %v4343 = vrot.slane %v3546, 5
      %v4344 = vsel %vm1214, %v4342, %v4343
      %v4345 = vrot.slane %v4269, 5
      %v4346 = vrot.slane %v4345, 4
      %v4347 = vrot.slane %v3548, 5
      %v4348 = vsel %vm1214, %v4346, %v4347
      %v4349 = vrot.slane %v4347, 4
      %v4350 = vrot.slane %v3549, 5
      %v4351 = vsel %vm1214, %v4349, %v4350
      %v4352 = vrot.slane %v4270, 5
      %v4353 = vrot.slane %v4352, 4
      %v4354 = vrot.slane %v3551, 5
      %v4355 = vsel %vm1214, %v4353, %v4354
      %v4356 = vrot.slane %v4354, 4
      %v4357 = vrot.slane %v3552, 5
      %v4358 = vsel %vm1214, %v4356, %v4357
      %v4359 = vrot.slane %v4271, 5
      %v4360 = vrot.slane %v4359, 4
      %v4361 = vrot.slane %v3554, 5
      %v4362 = vsel %vm1214, %v4360, %v4361
      %v4363 = vrot.slane %v4361, 4
      %v4364 = vrot.slane %v3555, 5
      %v4365 = vsel %vm1214, %v4363, %v4364
      %v4366 = vrot.slane %v4272, 5
      %v4367 = vrot.slane %v4366, 4
      %v4368 = vrot.slane %v3557, 5
      %v4369 = vsel %vm1214, %v4367, %v4368
      %v4370 = vrot.slane %v4368, 4
      %v4371 = vrot.slane %v3558, 5
      %v4372 = vsel %vm1214, %v4370, %v4371
      %v4373 = vrot.slane %v4273, 5
      %v4374 = vrot.slane %v4373, 4
      %v4375 = vrot.slane %v3560, 5
      %v4376 = vsel %vm1214, %v4374, %v4375
      %v4377 = vrot.slane %v4375, 4
      %v4378 = vrot.slane %v3561, 5
      %v4379 = vsel %vm1214, %v4377, %v4378
      %v4380 = vrot.slane %v4274, 5
      %v4381 = vrot.slane %v4380, 4
      %v4382 = vrot.slane %v3563, 5
      %v4383 = vsel %vm1214, %v4381, %v4382
      %v4384 = vrot.slane %v4382, 4
      %v4385 = vrot.slane %v3564, 5
      %v4386 = vsel %vm1214, %v4384, %v4385
      %v4387 = vrot.slane %v4275, 5
      %v4388 = vrot.slane %v4387, 4
      %v4389 = vrot.slane %v3566, 5
      %v4390 = vsel %vm1214, %v4388, %v4389
      %v4391 = vrot.slane %v4389, 4
      %v4392 = vrot.slane %v3567, 5
      %v4393 = vsel %vm1214, %v4391, %v4392
      %v4394 = vrot.slane %v4276, 5
      %v4395 = vrot.slane %v4394, 4
      %v4396 = vrot.slane %v3569, 5
      %v4397 = vsel %vm1214, %v4395, %v4396
      %v4398 = vrot.slane %v4396, 4
      %v4399 = vrot.slane %v3570, 5
      %v4400 = vsel %vm1214, %v4398, %v4399
      %v4401 = vrot.slane %v4277, 5
      %v4402 = vrot.slane %v4401, 4
      %v4403 = vrot.slane %v3572, 5
      %v4404 = vsel %vm1214, %v4402, %v4403
      %v4405 = vrot.slane %v4403, 4
      %v4406 = vrot.slane %v3573, 5
      %v4407 = vsel %vm1214, %v4405, %v4406
      %v4408 = vrot.slane %v4278, 5
      %v4409 = vrot.slane %v4408, 4
      %v4410 = vrot.slane %v3575, 5
      %v4411 = vsel %vm1214, %v4409, %v4410
      %v4412 = vrot.slane %v4410, 4
      %v4413 = vrot.slane %v3576, 5
      %v4414 = vsel %vm1214, %v4412, %v4413
      %v4415 = vrot.slane %v4279, 5
      %v4416 = vrot.slane %v4415, 4
      %v4417 = vrot.slane %v3578, 5
      %v4418 = vsel %vm1214, %v4416, %v4417
      %v4419 = vrot.slane %v4417, 4
      %v4420 = vrot.slane %v3579, 5
      %v4421 = vsel %vm1214, %v4419, %v4420
      %v4422 = vrot.slane %v4280, 5
      %v4423 = vrot.slane %v4422, 4
      %v4424 = vrot.slane %v3581, 5
      %v4425 = vsel %vm1214, %v4423, %v4424
      %v4426 = vrot.slane %v4424, 4
      %v4427 = vrot.slane %v3582, 5
      %v4428 = vsel %vm1214, %v4426, %v4427
      %v4429 = vrot.slane %v4281, 5
      %v4430 = vrot.slane %v4429, 4
      %v4431 = vrot.slane %v3584, 5
      %v4432 = vsel %vm1214, %v4430, %v4431
      %v4433 = vrot.slane %v4431, 4
      %v4434 = vrot.slane %v3585, 5
      %v4435 = vsel %vm1214, %v4433, %v4434
      %v4436 = vrot.slane %v4282, 5
      %v4437 = vrot.slane %v4436, 4
      %v4438 = vrot.slane %v3587, 5
      %v4439 = vsel %vm1214, %v4437, %v4438
      %v4440 = vrot.slane %v4438, 4
      %v4441 = vrot.slane %v3588, 5
      %v4442 = vsel %vm1214, %v4440, %v4441
      %s4443 = scalar_lea.vmem %s1, 16
      %v4444 = vld [vmem:[%s4443] sm:$0x3]
      %v4445 = vunpack.c.l.b16 %v4334
      %v4446 = vunpack.c.l.b16 %v4337
      %v4447 = vunpack.c.l.b16 %v4341
      %v4448 = vunpack.c.l.b16 %v4344
      %v4449 = vunpack.c.l.b16 %v4348
      %v4450 = vunpack.c.l.b16 %v4351
      %v4451 = vunpack.c.l.b16 %v4355
      %v4452 = vunpack.c.l.b16 %v4358
      %v4453 = vunpack.c.l.b16 %v4362
      %v4454 = vunpack.c.l.b16 %v4365
      %v4455 = vunpack.c.l.b16 %v4369
      %v4456 = vunpack.c.l.b16 %v4372
      %v4457 = vunpack.c.l.b16 %v4376
      %v4458 = vunpack.c.l.b16 %v4379
      %v4459 = vunpack.c.l.b16 %v4383
      %v4460 = vunpack.c.l.b16 %v4386
      %v4461 = vunpack.c.l.b16 %v4390
      %v4462 = vunpack.c.l.b16 %v4393
      %v4463 = vunpack.c.l.b16 %v4397
      %v4464 = vunpack.c.l.b16 %v4400
      %v4465 = vunpack.c.l.b16 %v4404
      %v4466 = vunpack.c.l.b16 %v4407
      %v4467 = vunpack.c.l.b16 %v4411
      %v4468 = vunpack.c.l.b16 %v4414
      %v4469 = vunpack.c.l.b16 %v4418
      %v4470 = vunpack.c.l.b16 %v4421
      %v4471 = vunpack.c.l.b16 %v4425
      %v4472 = vunpack.c.l.b16 %v4428
      %v4473 = vunpack.c.l.b16 %v4432
      %v4474 = vunpack.c.l.b16 %v4435
      %v4475 = vunpack.c.l.b16 %v4439
      %v4476 = vunpack.c.l.b16 %v4442
      %v4477 = vpack.c.b16 %v4446, %v4445
      %v4478 = vpack.c.b16 %v4448, %v4447
      %v4479 = vpack.c.b16 %v4450, %v4449
      %v4480 = vpack.c.b16 %v4452, %v4451
      %v4481 = vpack.c.b16 %v4454, %v4453
      %v4482 = vpack.c.b16 %v4456, %v4455
      %v4483 = vpack.c.b16 %v4458, %v4457
      %v4484 = vpack.c.b16 %v4460, %v4459
      %v4485 = vpack.c.b16 %v4462, %v4461
      %v4486 = vpack.c.b16 %v4464, %v4463
      %v4487 = vpack.c.b16 %v4466, %v4465
      %v4488 = vpack.c.b16 %v4468, %v4467
      %v4489 = vpack.c.b16 %v4470, %v4469
      %v4490 = vpack.c.b16 %v4472, %v4471
      %v4491 = vpack.c.b16 %v4474, %v4473
      %v4492 = vpack.c.b16 %v4476, %v4475
      %v4494 = vsel %vm658, %v4477, 0
      %v4497 = vsel %vm658, %v4478, 0
      %v4500 = vsel %vm658, %v4479, 0
      %v4503 = vsel %vm658, %v4480, 0
      %v4506 = vsel %vm658, %v4481, 0
      %v4509 = vsel %vm658, %v4482, 0
      %v4512 = vsel %vm658, %v4483, 0
      %v4515 = vsel %vm658, %v4484, 0
      %v4518 = vsel %vm658, %v4485, 0
      %v4521 = vsel %vm658, %v4486, 0
      %v4524 = vsel %vm658, %v4487, 0
      %v4527 = vsel %vm658, %v4488, 0
      %v4530 = vsel %vm658, %v4489, 0
      %v4533 = vsel %vm658, %v4490, 0
      %v4536 = vsel %vm658, %v4491, 0
      %v4539 = vsel %vm658, %v4492, 0
      %v4542 = vsel %vm707, %v4444, 0
      %4544 = vmatprep.subr.bf16.mxu0 0
      %4545 = vmatpush1.bf16.msra.mxu0 %v4542
      %4546 = vmatprep.subr.bf16.mxu0 0
      %4547 = vmatpush1.bf16.msra.mxu0 0
      %4548 = vmatprep.subr.bf16.mxu0 0
      %4549 = vmatpush1.bf16.msra.mxu0 0
      %4550 = vmatprep.subr.bf16.mxu0 0
      %4551 = vmatpush1.bf16.msra.mxu0 0
      %4552 = vmatprep.subr.bf16.mxu0 0
      %4553 = vmatpush1.bf16.msra.mxu0 0
      %4554 = vmatprep.subr.bf16.mxu0 0
      %4555 = vmatpush1.bf16.msra.mxu0 0
      %4556 = vmatprep.subr.bf16.mxu0 0
      %4557 = vmatpush1.bf16.msra.mxu0 0
      %4558 = vmatprep.subr.bf16.mxu0 0
      %4559 = vmatpush1.bf16.msra.mxu0 0
      %4560 = vmatprep.subr.bf16.mxu0 0
      %4561 = vmatpush1.bf16.msra.mxu0 0
      %4562 = vmatprep.subr.bf16.mxu0 0
      %4563 = vmatpush1.bf16.msra.mxu0 0
      %4564 = vmatprep.subr.bf16.mxu0 0
      %4565 = vmatpush1.bf16.msra.mxu0 0
      %4566 = vmatprep.subr.bf16.mxu0 0
      %4567 = vmatpush1.bf16.msra.mxu0 0
      %4568 = vmatprep.subr.bf16.mxu0 0
      %4569 = vmatpush1.bf16.msra.mxu0 0
      %4570 = vmatprep.subr.bf16.mxu0 0
      %4571 = vmatpush1.bf16.msra.mxu0 0
      %4572 = vmatprep.subr.bf16.mxu0 0
      %4573 = vmatpush1.bf16.msra.mxu0 0
      %4574 = vmatprep.subr.bf16.mxu0 0
      %4575 = vmatpush1.bf16.msra.mxu0 0
      %4576 = vmatprep.mubr.bf16.mxu0 0
      %4577 = vmatmul.mubr.bf16.gmra.mrb[0].mxu0 %v4494
      %v4578 = vpop.f32.mrb[0].mxu0
      %v4579 = vadd.f32 0.0, %v4578
      %v4580 = vpop.f32.mrb[0].mxu0
      %v4581 = vpop.f32.mrb[0].mxu0
      %v4582 = vadd.f32 0.0, %v4581
      %v4583 = vpop.f32.mrb[0].mxu0
      %4584 = vmatprep.mubr.bf16.mxu0 0
      %4585 = vmatmul.mubr.bf16.gmra.mrb[0].mxu0 %v4497
      %v4586 = vpop.f32.mrb[0].mxu0
      %v4587 = vadd.f32 0.0, %v4586
      %v4588 = vpop.f32.mrb[0].mxu0
      %v4589 = vpop.f32.mrb[0].mxu0
      %v4590 = vadd.f32 0.0, %v4589
      %v4591 = vpop.f32.mrb[0].mxu0
      %4592 = vmatprep.mubr.bf16.mxu0 0
      %4593 = vmatmul.mubr.bf16.gmra.mrb[0].mxu0 %v4500
      %v4594 = vpop.f32.mrb[0].mxu0
      %v4595 = vadd.f32 0.0, %v4594
      %v4596 = vpop.f32.mrb[0].mxu0
      %v4597 = vpop.f32.mrb[0].mxu0
      %v4598 = vadd.f32 0.0, %v4597
      %v4599 = vpop.f32.mrb[0].mxu0
      %4600 = vmatprep.mubr.bf16.mxu0 0
      %4601 = vmatmul.mubr.bf16.gmra.mrb[0].mxu0 %v4503
      %v4602 = vpop.f32.mrb[0].mxu0
      %v4603 = vadd.f32 0.0, %v4602
      %v4604 = vpop.f32.mrb[0].mxu0
      %v4605 = vpop.f32.mrb[0].mxu0
      %v4606 = vadd.f32 0.0, %v4605
      %v4607 = vpop.f32.mrb[0].mxu0
      %4608 = vmatprep.mubr.bf16.mxu0 0
      %4609 = vmatmul.mubr.bf16.gmra.mrb[0].mxu0 %v4506
      %v4610 = vpop.f32.mrb[0].mxu0
      %v4611 = vadd.f32 0.0, %v4610
      %v4612 = vpop.f32.mrb[0].mxu0
      %v4613 = vpop.f32.mrb[0].mxu0
      %v4614 = vadd.f32 0.0, %v4613
      %v4615 = vpop.f32.mrb[0].mxu0
      %4616 = vmatprep.mubr.bf16.mxu0 0
      %4617 = vmatmul.mubr.bf16.gmra.mrb[0].mxu0 %v4509
      %v4618 = vpop.f32.mrb[0].mxu0
      %v4619 = vadd.f32 0.0, %v4618
      %v4620 = vpop.f32.mrb[0].mxu0
      %v4621 = vpop.f32.mrb[0].mxu0
      %v4622 = vadd.f32 0.0, %v4621
      %v4623 = vpop.f32.mrb[0].mxu0
      %4624 = vmatprep.mubr.bf16.mxu0 0
      %4625 = vmatmul.mubr.bf16.gmra.mrb[0].mxu0 %v4512
      %v4626 = vpop.f32.mrb[0].mxu0
      %v4627 = vadd.f32 0.0, %v4626
      %v4628 = vpop.f32.mrb[0].mxu0
      %v4629 = vpop.f32.mrb[0].mxu0
      %v4630 = vadd.f32 0.0, %v4629
      %v4631 = vpop.f32.mrb[0].mxu0
      %4632 = vmatprep.mubr.bf16.mxu0 0
      %4633 = vmatmul.mubr.bf16.gmra.mrb[0].mxu0 %v4515
      %v4634 = vpop.f32.mrb[0].mxu0
      %v4635 = vadd.f32 0.0, %v4634
      %v4636 = vpop.f32.mrb[0].mxu0
      %v4637 = vpop.f32.mrb[0].mxu0
      %v4638 = vadd.f32 0.0, %v4637
      %v4639 = vpop.f32.mrb[0].mxu0
      %4640 = vmatprep.mubr.bf16.mxu0 0
      %4641 = vmatmul.mubr.bf16.gmra.mrb[0].mxu0 %v4518
      %v4642 = vpop.f32.mrb[0].mxu0
      %v4643 = vadd.f32 0.0, %v4642
      %v4644 = vpop.f32.mrb[0].mxu0
      %v4645 = vpop.f32.mrb[0].mxu0
      %v4646 = vadd.f32 0.0, %v4645
      %v4647 = vpop.f32.mrb[0].mxu0
      %4648 = vmatprep.mubr.bf16.mxu0 0
      %4649 = vmatmul.mubr.bf16.gmra.mrb[0].mxu0 %v4521
      %v4650 = vpop.f32.mrb[0].mxu0
      %v4651 = vadd.f32 0.0, %v4650
      %v4652 = vpop.f32.mrb[0].mxu0
      %v4653 = vpop.f32.mrb[0].mxu0
      %v4654 = vadd.f32 0.0, %v4653
      %v4655 = vpop.f32.mrb[0].mxu0
      %4656 = vmatprep.mubr.bf16.mxu0 0
      %4657 = vmatmul.mubr.bf16.gmra.mrb[0].mxu0 %v4524
      %v4658 = vpop.f32.mrb[0].mxu0
      %v4659 = vadd.f32 0.0, %v4658
      %v4660 = vpop.f32.mrb[0].mxu0
      %v4661 = vpop.f32.mrb[0].mxu0
      %v4662 = vadd.f32 0.0, %v4661
      %v4663 = vpop.f32.mrb[0].mxu0
      %4664 = vmatprep.mubr.bf16.mxu0 0
      %4665 = vmatmul.mubr.bf16.gmra.mrb[0].mxu0 %v4527
      %v4666 = vpop.f32.mrb[0].mxu0
      %v4667 = vadd.f32 0.0, %v4666
      %v4668 = vpop.f32.mrb[0].mxu0
      %v4669 = vpop.f32.mrb[0].mxu0
      %v4670 = vadd.f32 0.0, %v4669
      %v4671 = vpop.f32.mrb[0].mxu0
      %4672 = vmatprep.mubr.bf16.mxu0 0
      %4673 = vmatmul.mubr.bf16.gmra.mrb[0].mxu0 %v4530
      %v4674 = vpop.f32.mrb[0].mxu0
      %v4675 = vadd.f32 0.0, %v4674
      %v4676 = vpop.f32.mrb[0].mxu0
      %v4677 = vpop.f32.mrb[0].mxu0
      %v4678 = vadd.f32 0.0, %v4677
      %v4679 = vpop.f32.mrb[0].mxu0
      %4680 = vmatprep.mubr.bf16.mxu0 0
      %4681 = vmatmul.mubr.bf16.gmra.mrb[0].mxu0 %v4533
      %v4682 = vpop.f32.mrb[0].mxu0
      %v4683 = vadd.f32 0.0, %v4682
      %v4684 = vpop.f32.mrb[0].mxu0
      %v4685 = vpop.f32.mrb[0].mxu0
      %v4686 = vadd.f32 0.0, %v4685
      %v4687 = vpop.f32.mrb[0].mxu0
      %4688 = vmatprep.mubr.bf16.mxu0 0
      %4689 = vmatmul.mubr.bf16.gmra.mrb[0].mxu0 %v4536
      %v4690 = vpop.f32.mrb[0].mxu0
      %v4691 = vadd.f32 0.0, %v4690
      %v4692 = vpop.f32.mrb[0].mxu0
      %v4693 = vpop.f32.mrb[0].mxu0
      %v4694 = vadd.f32 0.0, %v4693
      %v4695 = vpop.f32.mrb[0].mxu0
      %4696 = vmatprep.mubr.bf16.mxu0 0
      %4697 = vmatmul.mubr.bf16.gmra.mrb[0].mxu0 %v4539
      %v4698 = vpop.f32.mrb[0].mxu0
      %v4699 = vadd.f32 0.0, %v4698
      %v4700 = vpop.f32.mrb[0].mxu0
      %v4701 = vpop.f32.mrb[0].mxu0
      %v4702 = vadd.f32 0.0, %v4701
      %v4703 = vpop.f32.mrb[0].mxu0
      %4704 = vdwg.mxu0
      %v4705 = vadd.f32 %v4235, %v4579
      %v4706 = vadd.f32 %v4236, %v4582
      %v4707 = vadd.f32 %v4237, %v4587
      %v4708 = vadd.f32 %v4238, %v4590
      %v4709 = vadd.f32 %v4239, %v4595
      %v4710 = vadd.f32 %v4240, %v4598
      %v4711 = vadd.f32 %v4241, %v4603
      %v4712 = vadd.f32 %v4242, %v4606
      %v4713 = vadd.f32 %v4243, %v4611
      %v4714 = vadd.f32 %v4244, %v4614
      %v4715 = vadd.f32 %v4245, %v4619
      %v4716 = vadd.f32 %v4246, %v4622
      %v4717 = vadd.f32 %v4247, %v4627
      %v4718 = vadd.f32 %v4248, %v4630
      %v4719 = vadd.f32 %v4249, %v4635
      %v4720 = vadd.f32 %v4250, %v4638
      %v4721 = vadd.f32 %v4251, %v4643
      %v4722 = vadd.f32 %v4252, %v4646
      %v4723 = vadd.f32 %v4253, %v4651
      %v4724 = vadd.f32 %v4254, %v4654
      %v4725 = vadd.f32 %v4255, %v4659
      %v4726 = vadd.f32 %v4256, %v4662
      %v4727 = vadd.f32 %v4257, %v4667
      %v4728 = vadd.f32 %v4258, %v4670
      %v4729 = vadd.f32 %v4259, %v4675
      %v4730 = vadd.f32 %v4260, %v4678
      %v4731 = vadd.f32 %v4261, %v4683
      %v4732 = vadd.f32 %v4262, %v4686
      %v4733 = vadd.f32 %v4263, %v4691
      %v4734 = vadd.f32 %v4264, %v4694
      %v4735 = vadd.f32 %v4265, %v4699
      %v4736 = vadd.f32 %v4266, %v4702
      %4737 = vst [vmem:[%s165] sm:$0xff] %v4705
      %4738 = vst [vmem:[%s165 + $0x8] sm:$0xff] %v4706
      %4739 = vst [vmem:[%s165 + $0x10] sm:$0xff] %v4707
      %4740 = vst [vmem:[%s165 + $0x18] sm:$0xff] %v4708
      %4741 = vst [vmem:[%s165 + $0x20] sm:$0xff] %v4709
      %4742 = vst [vmem:[%s165 + $0x28] sm:$0xff] %v4710
      %4743 = vst [vmem:[%s165 + $0x30] sm:$0xff] %v4711
      %4744 = vst [vmem:[%s165 + $0x38] sm:$0xff] %v4712
      %4745 = vst [vmem:[%s165 + $0x40] sm:$0xff] %v4713
      %4746 = vst [vmem:[%s165 + $0x48] sm:$0xff] %v4714
      %4747 = vst [vmem:[%s165 + $0x50] sm:$0xff] %v4715
      %4748 = vst [vmem:[%s165 + $0x58] sm:$0xff] %v4716
      %4749 = vst [vmem:[%s165 + $0x60] sm:$0xff] %v4717
      %4750 = vst [vmem:[%s165 + $0x68] sm:$0xff] %v4718
      %4751 = vst [vmem:[%s165 + $0x70] sm:$0xff] %v4719
      %4752 = vst [vmem:[%s165 + $0x78] sm:$0xff] %v4720
      %4753 = vst [vmem:[%s165 + $0x80] sm:$0xff] %v4721
      %4754 = vst [vmem:[%s165 + $0x88] sm:$0xff] %v4722
      %4755 = vst [vmem:[%s165 + $0x90] sm:$0xff] %v4723
      %4756 = vst [vmem:[%s165 + $0x98] sm:$0xff] %v4724
      %4757 = vst [vmem:[%s165 + $0xa0] sm:$0xff] %v4725
      %4758 = vst [vmem:[%s165 + $0xa8] sm:$0xff] %v4726
      %4759 = vst [vmem:[%s165 + $0xb0] sm:$0xff] %v4727
      %4760 = vst [vmem:[%s165 + $0xb8] sm:$0xff] %v4728
      %4761 = vst [vmem:[%s165 + $0xc0] sm:$0xff] %v4729
      %4762 = vst [vmem:[%s165 + $0xc8] sm:$0xff] %v4730
      %4763 = vst [vmem:[%s165 + $0xd0] sm:$0xff] %v4731
      %4764 = vst [vmem:[%s165 + $0xd8] sm:$0xff] %v4732
      %4765 = vst [vmem:[%s165 + $0xe0] sm:$0xff] %v4733
      %4766 = vst [vmem:[%s165 + $0xe8] sm:$0xff] %v4734
      %4767 = vst [vmem:[%s165 + $0xf0] sm:$0xff] %v4735
      %4768 = vst [vmem:[%s165 + $0xf8] sm:$0xff] %v4736
      %s4769 = smul.u32 32, %s18
      %p4770 = scmp.lt.s32.totalorder %s17, 1
      %s4771 = scalar_select %p4770, %s17, 1
      %p4772 = scmp.lt.s32.totalorder %s4769, 31
      %s4773 = scalar_select %p4772, %s4769, 31
      %s4774 = smul.addr %s4771, 32
      %s4775 = sadd.s32 %s4773, %s4774
      %s4776 = smul.addr %s4775, 8
      %s4777 = scalar_lea.vmem %s2, %s4776
      // Predicated region
      $region29: #{bayes_conv2d_lr.1} parent=27 // pred_check
        %p4778 = pneg %p92
      $region30: #{bayes_conv2d_lr.1} parent=27 // pred_check_branch
        %4780 = sbr.rel (%p4778) target = $region32
      $region31: #{bayes_conv2d_lr.1} parent=27 // pred_region
        %s4781 = smul.u32 32, %s18
      $region32: #{bayes_conv2d_lr.1} parent=27 // pred_fallthru
        _
    $region28: #{bayes_conv2d_lr.1} parent=5 // pred_fallthru
      _
    %p4782 = scmp.le.s32.totalorder 2, %s8
    // Predicated region
    $region33: #{bayes_conv2d_lr.1} parent=5 // pred_check
      %p4783 = pneg %p4782
    $region34: #{bayes_conv2d_lr.1} parent=5 // pred_check_branch
      %4785 = sbr.rel (%p4783) target = $region36
    $region35: #{bayes_conv2d_lr.1} parent=5 // pred_region
      %s4786 = ssub.s32 %s8, 2
      // Predicated region
      $region37: #{bayes_conv2d_lr.1} parent=35 // pred_check
        %p4787 = pneg %p98
      $region38: #{bayes_conv2d_lr.1} parent=35 // pred_check_branch
        %4789 = sbr.rel (%p4787) target = $region40
      $region39: #{bayes_conv2d_lr.1} parent=35 // pred_region
        %s4790 = smul.u32 32, %s20
        %p4791 = scmp.lt.s32.totalorder %s19, 1
        %s4792 = scalar_select %p4791, %s19, 1
        %p4793 = scmp.lt.s32.totalorder %s4790, 31
        %s4794 = scalar_select %p4793, %s4790, 31
        %s4795 = smul.addr %s4792, 32
        %s4796 = sadd.s32 %s4794, %s4795
        %s4797 = smul.addr %s4796, 8
        %s4798 = scalar_lea.vmem %s2, %s4797
      $region40: #{bayes_conv2d_lr.1} parent=35 // pred_fallthru
        _
    $region36: #{bayes_conv2d_lr.1} parent=5 // pred_fallthru
      _
  $region6: #{bayes_conv2d_lr.1} parent=0 // loop_footer
    %s12 = sadd.s32 1, %s8
  $region7: #{bayes_conv2d_lr.1} parent=0 // loop_footer_branch
    %7 = sbr.rel target = $region3
  $region8: #{bayes_conv2d_lr.1} parent=0 // loop_exit
    _

</llo_original>
